<compile_context>
chip_gen: v6e
topology: v6e:2x2x1
jax: 0.10.0
libtpu: 0.0.40
codegen_flags: <defaults>
</compile_context>

<pallas_src>
import functools
import math

import jax
import jax.numpy as jnp
from jax import lax
from jax.experimental import pallas as pl
from jax.experimental.pallas import tpu as pltpu

# ---- model hyper-parameters (consistent with the module's __init__) ---------
HIDDEN = 32          # args.MLP_hidden
HEADS = 2            # SE3Transformer heads
DIM_HEAD = 32        # SE3Transformer dim_head
SE3_DEPTH = 2        # SE3Transformer depth
N_LAYERS = 2         # args.All_num_layers (shared-parameter MHNNSConv loop)
VALID_RADIUS = 5.0   # SE3Transformer valid_radius
OUTPUT_HIDDEN = 32   # args.output_hidden
NUM_TARGET = 1       # num_target

HD = HEADS * DIM_HEAD            # 64
QKV_DIM = 3 * HD                 # 192

_VMEM = pl.BlockSpec(memory_space=pltpu.MemorySpace.VMEM)


# ----------------------- packed-slab index bookkeeping -----------------------
def _mi_attn(d, h, kind):            # kind: 0=Wq(scaled) 1=Wk 2=Wv 3=Wo-chunk
    return (d * HEADS + h) * 4 + kind

_MAT_FF_BASE = SE3_DEPTH * HEADS * 4                     # 16
def _mi_ff(d, part):                 # part: 0=A1 1=A2 2=B1 3=B2
    return _MAT_FF_BASE + d * 4 + part

MAT_M1 = _MAT_FF_BASE + SE3_DEPTH * 4                    # 24
MAT_M2 = MAT_M1 + 1
MAT_M3 = MAT_M1 + 2
MAT_O1 = MAT_M1 + 3
MAT_O2 = MAT_M1 + 4
N_MATS = MAT_O2 + 1                                      # 29

def _vi(d, which):                   # 0=ln1g 1=ln1b 2=ln2g 3=ln2b 4=ff1bA 5=ff1bB 6=ff2b
    return d * 7 + which

VEC_M1B = SE3_DEPTH * 7                                  # 14
VEC_M2B = VEC_M1B + 1
VEC_M3B = VEC_M1B + 2
VEC_O1B = VEC_M1B + 3
VEC_O2B = VEC_M1B + 4
N_VECS = VEC_O2B + 1                                     # 19


# =========================== fused forward kernel ============================
def _fused_forward_kernel(nodes_ref, wmats_ref, wvecs_ref, graph_ref, deg_ref,
                          out_ref):
    """Entire SE3TransformerEquiHNNS forward in one Pallas call (grid=())."""
    f32 = jnp.float32
    n = nodes_ref.shape[1]
    e_pad = deg_ref.shape[0] - n
    n_graphs = graph_ref.shape[0] - e_pad

    wvecs = wvecs_ref[...]                               # (19, 32) tiny slab

    def vec(i):                                          # (1, HIDDEN) row
        return wvecs[i:i + 1, :]

    def relu(x):
        return jnp.maximum(x, 0.0)

    def layernorm(x, gi, bi):
        mu = jnp.mean(x, axis=-1, keepdims=True)
        var = jnp.mean(jnp.square(x - mu), axis=-1, keepdims=True)
        return (x - mu) * lax.rsqrt(var + 1e-5) * vec(gi) + vec(bi)

    # ---- node features + loop-invariant radius-mask bias rebuilt in-kernel.
    # pos_a = [p, |p|^2, 1, 0...], pos_b = [-2p, 1, |p|^2, 0...]  (zero-padded
    # to 32 lanes) so  pos_a @ pos_b.T == pairwise squared distance.
    h = nodes_ref[0]                                     # (N, HIDDEN)
    pos_a = nodes_ref[1]
    pos_b = nodes_ref[2]
    d2 = lax.dot_general(pos_a, pos_b, (((1,), (1,)), ((), ())),
                         preferred_element_type=f32)     # (N, N)
    bias = jnp.where(d2 <= VALID_RADIUS * VALID_RADIUS,
                     0.0, -1e30).astype(f32)             # additive mask, f32

    # ---- SE3Transformer-like attention blocks (depth statically unrolled).
    # TODO(synk): the reference SE3Transformer's spherical-harmonic type-1
    # features / radial-basis kernels / num_neighbors=16 kNN restriction are
    # not reproduced; type-0 features with a valid_radius mask are used.
    for d in range(SE3_DEPTH):
        hn = layernorm(h, _vi(d, 0), _vi(d, 1))
        attn = None
        for hd in range(HEADS):                          # static unroll
            # scale 1/sqrt(dim_head) already folded into Wq at pack time.
            q = jnp.dot(hn, wmats_ref[_mi_attn(d, hd, 0)], preferred_element_type=f32)
            k = jnp.dot(hn, wmats_ref[_mi_attn(d, hd, 1)], preferred_element_type=f32)
            v = jnp.dot(hn, wmats_ref[_mi_attn(d, hd, 2)], preferred_element_type=f32)
            s = lax.dot_general(q, k, (((1,), (1,)), ((), ())),
                                preferred_element_type=f32) + bias      # (N, N)
            p = jnp.exp(s - jnp.max(s, axis=-1, keepdims=True))
            p = p * pl.reciprocal(jnp.sum(p, axis=-1, keepdims=True),
                                  approx=True)
            o = jnp.dot(p, v, preferred_element_type=f32)               # (N, 32)
            proj = jnp.dot(o, wmats_ref[_mi_attn(d, hd, 3)],
                           preferred_element_type=f32)                  # (N, 32)
            attn = proj if attn is None else attn + proj
        h = h + attn

        # Feed-forward; fused (32,64)/(64,32) weights split into lane-aligned
        # (32,32) halves (exact: relu is columnwise).
        hn = layernorm(h, _vi(d, 2), _vi(d, 3))
        f1 = relu(jnp.dot(hn, wmats_ref[_mi_ff(d, 0)], preferred_element_type=f32)
                  + vec(_vi(d, 4)))
        f2 = relu(jnp.dot(hn, wmats_ref[_mi_ff(d, 1)], preferred_element_type=f32)
                  + vec(_vi(d, 5)))
        h = h + (jnp.dot(f1, wmats_ref[_mi_ff(d, 2)], preferred_element_type=f32)
                 + jnp.dot(f2, wmats_ref[_mi_ff(d, 3)], preferred_element_type=f32)
                 + vec(_vi(d, 6)))

    # ---- shared-parameter MHNNSConv message passing (dropout == identity).
    # TODO(synk): MHNNSConv internals are not given in the prompt; implemented
    # as AllSet-style V->E MLP/mean-aggregate, E MLP, E->V mean-aggregate,
    # MLP with x0 residual, followed by the outer relu activation.
    gm = graph_ref[...]                                  # (E_pad + G, N)
    hinc = gm[:e_pad, :]                                 # zero rows for padding
    pool = gm[e_pad:e_pad + n_graphs, :]                 # (G, N)
    degs = deg_ref[...]                                  # (E_pad + N, 1)
    inv_e = degs[:e_pad, :]
    inv_v = degs[e_pad:e_pad + n, :]

    m1w = wmats_ref[MAT_M1]
    m2w = wmats_ref[MAT_M2]
    m3w = wmats_ref[MAT_M3]
    # Hoist bias broadcasts out of the statically unrolled loop (no CSE in JAX).
    m1b = jnp.broadcast_to(vec(VEC_M1B), (n, HIDDEN))
    m2b = jnp.broadcast_to(vec(VEC_M2B), (e_pad, HIDDEN))
    m3b = jnp.broadcast_to(vec(VEC_M3B), (n, HIDDEN))

    x0 = h
    x = h
    for _ in range(N_LAYERS):                            # static unroll
        mv = relu(jnp.dot(x, m1w, preferred_element_type=f32) + m1b)
        he = jnp.dot(hinc, mv, preferred_element_type=f32) * inv_e     # V -> E mean
        he = relu(jnp.dot(he, m2w, preferred_element_type=f32) + m2b)
        # E -> V mean without a materialized transpose: contract the E axis.
        ev = lax.dot_general(hinc, he, (((0,), (0,)), ((), ())),
                             preferred_element_type=f32) * inv_v
        x = relu(jnp.dot(ev + x0, m3w, preferred_element_type=f32) + m3b)

    # ---- global_add_pool + output MLP (o2w padded to 32 lanes; col 0 valid).
    pooled = jnp.dot(pool, x, preferred_element_type=f32)              # (G, 32)
    y = relu(jnp.dot(pooled, wmats_ref[MAT_O1], preferred_element_type=f32)
             + vec(VEC_O1B))
    out = jnp.dot(y, wmats_ref[MAT_O2], preferred_element_type=f32) + vec(VEC_O2B)
    out_ref[...] = out[:, :NUM_TARGET]


def fused_forward(nodes, wmats, wvecs, graph, deg, *, num_graphs):
    """One pallas_call for the whole network; everything fits VMEM trivially."""
    # TODO(synk): at realistic N (thousands of nodes) tile the attention
    # flash-style with a "parallel" query-tile / graph grid axis (v7x: 2 TCs,
    # 64 MiB VMEM -> roughly half the kv tile chosen for v6e), cast MXU
    # operands to bf16 on v6e/v7x (keep layernorm/softmax/mask in f32), and
    # replace the dense incidence matmuls with scalar-prefetch segment
    # aggregation over the (V,E) nnz list; at these sizes one block is optimal.
    return pl.pallas_call(
        _fused_forward_kernel,
        out_shape=jax.ShapeDtypeStruct((num_graphs, NUM_TARGET), jnp.float32),
        in_specs=[_VMEM] * 5,
        out_specs=_VMEM,
        compiler_params=pltpu.CompilerParams(vmem_limit_bytes=32 * 1024 * 1024),
    )(nodes, wmats, wvecs, graph, deg)


# =============================== parameters ==================================
def _uniform(key, shape, fan_in):
    lim = 1.0 / math.sqrt(fan_in)
    return jax.random.uniform(key, shape, jnp.float32, -lim, lim)


def init_params(key):
    keys = iter(jax.random.split(key, 32))
    p = {}
    # AtomEncoder: per-feature-column embedding tables, summed.
    vocab = (10, 5, 5)
    p["atom_emb"] = [
        jax.random.normal(next(keys), (v, HIDDEN), jnp.float32) * 0.1
        for v in vocab
    ]
    # SE3 attention blocks, stacked along a leading depth axis.
    p["ln1_g"] = jnp.ones((SE3_DEPTH, 1, HIDDEN), jnp.float32)
    p["ln1_b"] = jnp.zeros((SE3_DEPTH, 1, HIDDEN), jnp.float32)
    p["ln2_g"] = jnp.ones((SE3_DEPTH, 1, HIDDEN), jnp.float32)
    p["ln2_b"] = jnp.zeros((SE3_DEPTH, 1, HIDDEN), jnp.float32)
    p["wqkv"] = _uniform(next(keys), (SE3_DEPTH, HIDDEN, QKV_DIM), HIDDEN)
    p["wo"] = _uniform(next(keys), (SE3_DEPTH, HD, HIDDEN), DIM_HEAD)
    p["ff1_w"] = _uniform(next(keys), (SE3_DEPTH, HIDDEN, 2 * HIDDEN), HIDDEN)
    p["ff1_b"] = _uniform(next(keys), (SE3_DEPTH, 1, 2 * HIDDEN), HIDDEN)
    p["ff2_w"] = _uniform(next(keys), (SE3_DEPTH, 2 * HIDDEN, HIDDEN), 2 * HIDDEN)
    p["ff2_b"] = _uniform(next(keys), (SE3_DEPTH, 1, HIDDEN), 2 * HIDDEN)
    # MHNNSConv (parameters shared across all All_num_layers iterations).
    p["mlp1_w"] = _uniform(next(keys), (HIDDEN, HIDDEN), HIDDEN)
    p["mlp1_b"] = _uniform(next(keys), (1, HIDDEN), HIDDEN)
    p["mlp2_w"] = _uniform(next(keys), (HIDDEN, HIDDEN), HIDDEN)
    p["mlp2_b"] = _uniform(next(keys), (1, HIDDEN), HIDDEN)
    p["mlp3_w"] = _uniform(next(keys), (HIDDEN, HIDDEN), HIDDEN)
    p["mlp3_b"] = _uniform(next(keys), (1, HIDDEN), HIDDEN)
    # Output MLP (output_num_layers = 2).
    p["out1_w"] = _uniform(next(keys), (HIDDEN, OUTPUT_HIDDEN), HIDDEN)
    p["out1_b"] = _uniform(next(keys), (1, OUTPUT_HIDDEN), HIDDEN)
    p["out2_w"] = _uniform(next(keys), (OUTPUT_HIDDEN, NUM_TARGET), OUTPUT_HIDDEN)
    p["out2_b"] = _uniform(next(keys), (1, NUM_TARGET), OUTPUT_HIDDEN)
    return p


def pack_params(p):
    """One-off transform: every matrix -> a lane-aligned (32,32) tile in wmats,
    every bias/gain vector -> a row of wvecs.  Attention scale folded into Wq;
    fused qkv / ff weights split on 32-lane-aligned boundaries."""
    scale = 1.0 / math.sqrt(DIM_HEAD)
    mats = [None] * N_MATS
    vecs = [None] * N_VECS
    for d in range(SE3_DEPTH):
        wqkv = p["wqkv"][d]                              # (32, 192)
        wo = p["wo"][d]                                  # (64, 32)
        for h in range(HEADS):
            c = h * DIM_HEAD
            mats[_mi_attn(d, h, 0)] = wqkv[:, c:c + DIM_HEAD] * scale
            mats[_mi_attn(d, h, 1)] = wqkv[:, HD + c:HD + c + DIM_HEAD]
            mats[_mi_attn(d, h, 2)] = wqkv[:, 2 * HD + c:2 * HD + c + DIM_HEAD]
            mats[_mi_attn(d, h, 3)] = wo[c:c + DIM_HEAD, :]
        ff1w, ff2w = p["ff1_w"][d], p["ff2_w"][d]
        mats[_mi_ff(d, 0)] = ff1w[:, :HIDDEN]
        mats[_mi_ff(d, 1)] = ff1w[:, HIDDEN:]
        mats[_mi_ff(d, 2)] = ff2w[:HIDDEN, :]
        mats[_mi_ff(d, 3)] = ff2w[HIDDEN:, :]
        vecs[_vi(d, 0)] = p["ln1_g"][d, 0]
        vecs[_vi(d, 1)] = p["ln1_b"][d, 0]
        vecs[_vi(d, 2)] = p["ln2_g"][d, 0]
        vecs[_vi(d, 3)] = p["ln2_b"][d, 0]
        vecs[_vi(d, 4)] = p["ff1_b"][d, 0, :HIDDEN]
        vecs[_vi(d, 5)] = p["ff1_b"][d, 0, HIDDEN:]
        vecs[_vi(d, 6)] = p["ff2_b"][d, 0]
    mats[MAT_M1], mats[MAT_M2], mats[MAT_M3] = p["mlp1_w"], p["mlp2_w"], p["mlp3_w"]
    mats[MAT_O1] = p["out1_w"]
    mats[MAT_O2] = jnp.zeros((OUTPUT_HIDDEN, HIDDEN),
                             jnp.float32).at[:, :NUM_TARGET].set(p["out2_w"])
    vecs[VEC_M1B], vecs[VEC_M2B], vecs[VEC_M3B] = (p["mlp1_b"][0],
                                                   p["mlp2_b"][0],
                                                   p["mlp3_b"][0])
    vecs[VEC_O1B] = p["out1_b"][0]
    vecs[VEC_O2B] = jnp.zeros((HIDDEN,),
                              jnp.float32).at[:NUM_TARGET].set(p["out2_b"][0])
    wmats = jnp.stack(mats).astype(jnp.float32)          # (29, 32, 32)
    wvecs = jnp.stack(vecs).astype(jnp.float32)          # (19, 32)
    return wmats, wvecs


# ================================ forward =====================================
def forward(params, x_feat, pos, V, E, batch, *, num_graphs, num_edges):
    n = x_feat.shape[0]
    e_pad = max(8, ((num_edges + 7) // 8) * 8)           # sublane-aligned rows

    # ---- AtomEncoder: embedding lookup + sum over feature columns (gather glue).
    h0 = jnp.zeros((n, HIDDEN), jnp.float32)
    for c, tbl in enumerate(params["atom_emb"]):
        h0 = h0 + jnp.take(tbl, x_feat[:, c], axis=0)

    # ---- augmented coordinate rows so the kernel rebuilds the radius mask
    #      with one dot_general (no dense (N,N) operand shipped from HBM).
    sq = jnp.sum(pos * pos, axis=-1, keepdims=True)
    one = jnp.ones_like(sq)
    zpad = jnp.zeros((n, HIDDEN - 5), jnp.float32)
    pos_a = jnp.concatenate([pos, sq, one, zpad], axis=-1)          # (N, 32)
    pos_b = jnp.concatenate([-2.0 * pos, one, sq, zpad], axis=-1)   # (N, 32)
    nodes = jnp.stack([h0, pos_a, pos_b])                           # (3, N, 32)

    # ---- incidence / pooling / degree slabs (scatter glue, loop-invariant).
    hinc = jnp.zeros((e_pad, n), jnp.float32).at[E, V].set(1.0)     # zero pad rows
    pool = jax.nn.one_hot(batch, num_graphs, dtype=jnp.float32).T   # (G, N)
    graph = jnp.concatenate([hinc, pool], axis=0)                   # (E_pad+G, N)
    inv_e = 1.0 / jnp.maximum(hinc.sum(axis=1, keepdims=True), 1.0)
    inv_v = 1.0 / jnp.maximum(hinc.sum(axis=0)[:, None], 1.0)
    deg = jnp.concatenate([inv_e, inv_v], axis=0)                   # (E_pad+N, 1)

    wmats, wvecs = pack_params(params)
    out = fused_forward(nodes, wmats, wvecs, graph, deg, num_graphs=num_graphs)
    return out.reshape(-1)                                          # view(-1)


# ================================== main ======================================
if __name__ == "__main__":
    key = jax.random.PRNGKey(0)
    kp, kx, kpos = jax.random.split(key, 3)
    params = init_params(kp)

    n_nodes = 16
    num_graphs = 2
    num_edges = 6

    x_feat = jax.random.randint(kx, (n_nodes, 3), 0, 5).astype(jnp.int32)
    pos = jax.random.normal(kpos, (n_nodes, 3), jnp.float32) * 2.0
    batch = jnp.array([0] * 8 + [1] * 8, dtype=jnp.int32)
    # hypergraph incidence pairs: (node index V, hyperedge index E)
    V = jnp.array([0, 1, 2, 1, 2, 3, 4, 5, 6, 7,
                   8, 9, 10, 10, 11, 12, 13, 14, 15, 12], dtype=jnp.int32)
    E = jnp.array([0, 0, 0, 1, 1, 1, 2, 2, 2, 2,
                   3, 3, 3, 4, 4, 4, 5, 5, 5, 5], dtype=jnp.int32)

    fwd = jax.jit(functools.partial(forward, num_graphs=num_graphs,
                                    num_edges=num_edges))
    out = fwd(params, x_feat, pos, V, E, batch)
    jax.block_until_ready(out)

    assert out.shape == (num_graphs * NUM_TARGET,)
    assert bool(jnp.all(jnp.isfinite(out)))
    print("KERNEL_OK")
</pallas_src>

<mosaic_0001>
module attributes {stable_mosaic.version = 11 : i64} {
  func.func @_fused_forward_kernel(%arg0: memref<3x16x32xf32, #tpu.memory_space<vmem>>, %arg1: memref<29x32x32xf32, #tpu.memory_space<vmem>>, %arg2: memref<19x32xf32, #tpu.memory_space<vmem>>, %arg3: memref<10x16xf32, #tpu.memory_space<vmem>>, %arg4: memref<24x1xf32, #tpu.memory_space<vmem>>, %arg5: memref<2x1xf32, #tpu.memory_space<vmem>>) attributes {dimension_semantics = [], scalar_prefetch = 0 : i64, scratch_operands = 0 : i64, tpu.core_type = #tpu.core_type<tc>} {
    %c0 = arith.constant 0 : index
    %c0_0 = arith.constant 0 : index
    %0 = vector.load %arg2[%c0, %c0_0] : memref<19x32xf32, #tpu.memory_space<vmem>>, vector<19x32xf32>
    %c0_1 = arith.constant 0 : index
    %c0_2 = arith.constant 0 : index
    %c0_3 = arith.constant 0 : index
    %1 = vector.load %arg0[%c0_1, %c0_2, %c0_3] : memref<3x16x32xf32, #tpu.memory_space<vmem>>, vector<1x16x32xf32>
    %2 = vector.shape_cast %1 : vector<1x16x32xf32> to vector<16x32xf32>
    %c1 = arith.constant 1 : index
    %c0_4 = arith.constant 0 : index
    %c0_5 = arith.constant 0 : index
    %3 = vector.load %arg0[%c1, %c0_4, %c0_5] : memref<3x16x32xf32, #tpu.memory_space<vmem>>, vector<1x16x32xf32>
    %4 = vector.shape_cast %3 : vector<1x16x32xf32> to vector<16x32xf32>
    %c2 = arith.constant 2 : index
    %c0_6 = arith.constant 0 : index
    %c0_7 = arith.constant 0 : index
    %5 = vector.load %arg0[%c2, %c0_6, %c0_7] : memref<3x16x32xf32, #tpu.memory_space<vmem>>, vector<1x16x32xf32>
    %6 = vector.shape_cast %5 : vector<1x16x32xf32> to vector<16x32xf32>
    %cst = arith.constant dense<0.000000e+00> : vector<16x16xf32>
    %7 = tpu.matmul %4, %6, %cst {dimension_numbers = #tpu.dot_dimension_numbers<[1], [1], [0], [0], [0, 0, 1, 0], [], []>} : vector<16x32xf32>, vector<16x32xf32>, vector<16x16xf32> -> vector<16x16xf32>
    %cst_8 = arith.constant 2.500000e+01 : f32
    %8 = vector.broadcast %cst_8 : f32 to vector<16x16xf32>
    %9 = arith.cmpf ole, %7, %8 : vector<16x16xf32>
    %cst_9 = arith.constant 0.000000e+00 : f32
    %cst_10 = arith.constant -1.000000e+30 : f32
    %10 = vector.broadcast %cst_9 : f32 to vector<16x16xf32>
    %11 = vector.broadcast %cst_10 : f32 to vector<16x16xf32>
    %12 = arith.select %9, %10, %11 : vector<16x16xi1>, vector<16x16xf32>
    %cst_11 = arith.constant dense<0.000000e+00> : vector<16xf32>
    %13 = vector.multi_reduction <add>, %2, %cst_11 [1] : vector<16x32xf32> to vector<16xf32>
    %14 = vector.shape_cast %13 : vector<16xf32> to vector<16x1xf32>
    %cst_12 = arith.constant 3.200000e+01 : f32
    %15 = vector.broadcast %cst_12 : f32 to vector<16x1xf32>
    %16 = arith.divf %14, %15 : vector<16x1xf32>
    %17 = vector.broadcast %16 : vector<16x1xf32> to vector<16x32xf32>
    %18 = arith.subf %2, %17 : vector<16x32xf32>
    %19 = arith.mulf %18, %18 : vector<16x32xf32>
    %cst_13 = arith.constant dense<0.000000e+00> : vector<16xf32>
    %20 = vector.multi_reduction <add>, %19, %cst_13 [1] : vector<16x32xf32> to vector<16xf32>
    %21 = vector.shape_cast %20 : vector<16xf32> to vector<16x1xf32>
    %cst_14 = arith.constant 3.200000e+01 : f32
    %22 = vector.broadcast %cst_14 : f32 to vector<16x1xf32>
    %23 = arith.divf %21, %22 : vector<16x1xf32>
    %24 = vector.broadcast %16 : vector<16x1xf32> to vector<16x32xf32>
    %25 = arith.subf %2, %24 : vector<16x32xf32>
    %cst_15 = arith.constant 9.99999974E-6 : f32
    %26 = vector.broadcast %cst_15 : f32 to vector<16x1xf32>
    %27 = arith.addf %23, %26 : vector<16x1xf32>
    %28 = math.rsqrt %27 : vector<16x1xf32>
    %29 = vector.broadcast %28 : vector<16x1xf32> to vector<16x32xf32>
    %30 = arith.mulf %25, %29 : vector<16x32xf32>
    %31 = vector.extract_strided_slice %0 {offsets = [0, 0], sizes = [1, 32], strides = [1, 1]} : vector<19x32xf32> to vector<1x32xf32>
    %32 = vector.broadcast %31 : vector<1x32xf32> to vector<16x32xf32>
    %33 = arith.mulf %30, %32 : vector<16x32xf32>
    %34 = vector.extract_strided_slice %0 {offsets = [1, 0], sizes = [1, 32], strides = [1, 1]} : vector<19x32xf32> to vector<1x32xf32>
    %35 = vector.broadcast %34 : vector<1x32xf32> to vector<16x32xf32>
    %36 = arith.addf %33, %35 : vector<16x32xf32>
    %c0_16 = arith.constant 0 : index
    %c0_17 = arith.constant 0 : index
    %c0_18 = arith.constant 0 : index
    %37 = vector.load %arg1[%c0_16, %c0_17, %c0_18] : memref<29x32x32xf32, #tpu.memory_space<vmem>>, vector<1x32x32xf32>
    %38 = vector.shape_cast %37 : vector<1x32x32xf32> to vector<32x32xf32>
    %cst_19 = arith.constant dense<0.000000e+00> : vector<16x32xf32>
    %39 = tpu.matmul %36, %38, %cst_19 {dimension_numbers = #tpu.dot_dimension_numbers<[1], [0], [0], [1], [0, 0, 1, 1], [], []>} : vector<16x32xf32>, vector<32x32xf32>, vector<16x32xf32> -> vector<16x32xf32>
    %c1_20 = arith.constant 1 : index
    %c0_21 = arith.constant 0 : index
    %c0_22 = arith.constant 0 : index
    %40 = vector.load %arg1[%c1_20, %c0_21, %c0_22] : memref<29x32x32xf32, #tpu.memory_space<vmem>>, vector<1x32x32xf32>
    %41 = vector.shape_cast %40 : vector<1x32x32xf32> to vector<32x32xf32>
    %cst_23 = arith.constant dense<0.000000e+00> : vector<16x32xf32>
    %42 = tpu.matmul %36, %41, %cst_23 {dimension_numbers = #tpu.dot_dimension_numbers<[1], [0], [0], [1], [0, 0, 1, 1], [], []>} : vector<16x32xf32>, vector<32x32xf32>, vector<16x32xf32> -> vector<16x32xf32>
    %c2_24 = arith.constant 2 : index
    %c0_25 = arith.constant 0 : index
    %c0_26 = arith.constant 0 : index
    %43 = vector.load %arg1[%c2_24, %c0_25, %c0_26] : memref<29x32x32xf32, #tpu.memory_space<vmem>>, vector<1x32x32xf32>
    %44 = vector.shape_cast %43 : vector<1x32x32xf32> to vector<32x32xf32>
    %cst_27 = arith.constant dense<0.000000e+00> : vector<16x32xf32>
    %45 = tpu.matmul %36, %44, %cst_27 {dimension_numbers = #tpu.dot_dimension_numbers<[1], [0], [0], [1], [0, 0, 1, 1], [], []>} : vector<16x32xf32>, vector<32x32xf32>, vector<16x32xf32> -> vector<16x32xf32>
    %cst_28 = arith.constant dense<0.000000e+00> : vector<16x16xf32>
    %46 = tpu.matmul %39, %42, %cst_28 {dimension_numbers = #tpu.dot_dimension_numbers<[1], [1], [0], [0], [0, 0, 1, 0], [], []>} : vector<16x32xf32>, vector<16x32xf32>, vector<16x16xf32> -> vector<16x16xf32>
    %47 = arith.addf %46, %12 : vector<16x16xf32>
    %cst_29 = arith.constant dense<0xFF800000> : vector<16xf32>
    %48 = vector.multi_reduction <maximumf>, %47, %cst_29 [1] : vector<16x16xf32> to vector<16xf32>
    %49 = vector.shape_cast %48 : vector<16xf32> to vector<16x1xf32>
    %50 = vector.broadcast %49 : vector<16x1xf32> to vector<16x16xf32>
    %51 = arith.subf %47, %50 : vector<16x16xf32>
    %52 = math.exp %51 : vector<16x16xf32>
    %cst_30 = arith.constant dense<0.000000e+00> : vector<16xf32>
    %53 = vector.multi_reduction <add>, %52, %cst_30 [1] : vector<16x16xf32> to vector<16xf32>
    %54 = vector.shape_cast %53 : vector<16xf32> to vector<16x1xf32>
    %55 = tpu.reciprocal %54 {approx = true} : vector<16x1xf32> -> vector<16x1xf32>
    %56 = vector.broadcast %55 : vector<16x1xf32> to vector<16x16xf32>
    %57 = arith.mulf %52, %56 : vector<16x16xf32>
    %cst_31 = arith.constant dense<0.000000e+00> : vector<16x32xf32>
    %58 = tpu.matmul %57, %45, %cst_31 {dimension_numbers = #tpu.dot_dimension_numbers<[1], [0], [0], [1], [0, 0, 1, 1], [], []>} : vector<16x16xf32>, vector<16x32xf32>, vector<16x32xf32> -> vector<16x32xf32>
    %c3 = arith.constant 3 : index
    %c0_32 = arith.constant 0 : index
    %c0_33 = arith.constant 0 : index
    %59 = vector.load %arg1[%c3, %c0_32, %c0_33] : memref<29x32x32xf32, #tpu.memory_space<vmem>>, vector<1x32x32xf32>
    %60 = vector.shape_cast %59 : vector<1x32x32xf32> to vector<32x32xf32>
    %cst_34 = arith.constant dense<0.000000e+00> : vector<16x32xf32>
    %61 = tpu.matmul %58, %60, %cst_34 {dimension_numbers = #tpu.dot_dimension_numbers<[1], [0], [0], [1], [0, 0, 1, 1], [], []>} : vector<16x32xf32>, vector<32x32xf32>, vector<16x32xf32> -> vector<16x32xf32>
    %c4 = arith.constant 4 : index
    %c0_35 = arith.constant 0 : index
    %c0_36 = arith.constant 0 : index
    %62 = vector.load %arg1[%c4, %c0_35, %c0_36] : memref<29x32x32xf32, #tpu.memory_space<vmem>>, vector<1x32x32xf32>
    %63 = vector.shape_cast %62 : vector<1x32x32xf32> to vector<32x32xf32>
    %cst_37 = arith.constant dense<0.000000e+00> : vector<16x32xf32>
    %64 = tpu.matmul %36, %63, %cst_37 {dimension_numbers = #tpu.dot_dimension_numbers<[1], [0], [0], [1], [0, 0, 1, 1], [], []>} : vector<16x32xf32>, vector<32x32xf32>, vector<16x32xf32> -> vector<16x32xf32>
    %c5 = arith.constant 5 : index
    %c0_38 = arith.constant 0 : index
    %c0_39 = arith.constant 0 : index
    %65 = vector.load %arg1[%c5, %c0_38, %c0_39] : memref<29x32x32xf32, #tpu.memory_space<vmem>>, vector<1x32x32xf32>
    %66 = vector.shape_cast %65 : vector<1x32x32xf32> to vector<32x32xf32>
    %cst_40 = arith.constant dense<0.000000e+00> : vector<16x32xf32>
    %67 = tpu.matmul %36, %66, %cst_40 {dimension_numbers = #tpu.dot_dimension_numbers<[1], [0], [0], [1], [0, 0, 1, 1], [], []>} : vector<16x32xf32>, vector<32x32xf32>, vector<16x32xf32> -> vector<16x32xf32>
    %c6 = arith.constant 6 : index
    %c0_41 = arith.constant 0 : index
    %c0_42 = arith.constant 0 : index
    %68 = vector.load %arg1[%c6, %c0_41, %c0_42] : memref<29x32x32xf32, #tpu.memory_space<vmem>>, vector<1x32x32xf32>
    %69 = vector.shape_cast %68 : vector<1x32x32xf32> to vector<32x32xf32>
    %cst_43 = arith.constant dense<0.000000e+00> : vector<16x32xf32>
    %70 = tpu.matmul %36, %69, %cst_43 {dimension_numbers = #tpu.dot_dimension_numbers<[1], [0], [0], [1], [0, 0, 1, 1], [], []>} : vector<16x32xf32>, vector<32x32xf32>, vector<16x32xf32> -> vector<16x32xf32>
    %cst_44 = arith.constant dense<0.000000e+00> : vector<16x16xf32>
    %71 = tpu.matmul %64, %67, %cst_44 {dimension_numbers = #tpu.dot_dimension_numbers<[1], [1], [0], [0], [0, 0, 1, 0], [], []>} : vector<16x32xf32>, vector<16x32xf32>, vector<16x16xf32> -> vector<16x16xf32>
    %72 = arith.addf %71, %12 : vector<16x16xf32>
    %cst_45 = arith.constant dense<0xFF800000> : vector<16xf32>
    %73 = vector.multi_reduction <maximumf>, %72, %cst_45 [1] : vector<16x16xf32> to vector<16xf32>
    %74 = vector.shape_cast %73 : vector<16xf32> to vector<16x1xf32>
    %75 = vector.broadcast %74 : vector<16x1xf32> to vector<16x16xf32>
    %76 = arith.subf %72, %75 : vector<16x16xf32>
    %77 = math.exp %76 : vector<16x16xf32>
    %cst_46 = arith.constant dense<0.000000e+00> : vector<16xf32>
    %78 = vector.multi_reduction <add>, %77, %cst_46 [1] : vector<16x16xf32> to vector<16xf32>
    %79 = vector.shape_cast %78 : vector<16xf32> to vector<16x1xf32>
    %80 = tpu.reciprocal %79 {approx = true} : vector<16x1xf32> -> vector<16x1xf32>
    %81 = vector.broadcast %80 : vector<16x1xf32> to vector<16x16xf32>
    %82 = arith.mulf %77, %81 : vector<16x16xf32>
    %cst_47 = arith.constant dense<0.000000e+00> : vector<16x32xf32>
    %83 = tpu.matmul %82, %70, %cst_47 {dimension_numbers = #tpu.dot_dimension_numbers<[1], [0], [0], [1], [0, 0, 1, 1], [], []>} : vector<16x16xf32>, vector<16x32xf32>, vector<16x32xf32> -> vector<16x32xf32>
    %c7 = arith.constant 7 : index
    %c0_48 = arith.constant 0 : index
    %c0_49 = arith.constant 0 : index
    %84 = vector.load %arg1[%c7, %c0_48, %c0_49] : memref<29x32x32xf32, #tpu.memory_space<vmem>>, vector<1x32x32xf32>
    %85 = vector.shape_cast %84 : vector<1x32x32xf32> to vector<32x32xf32>
    %cst_50 = arith.constant dense<0.000000e+00> : vector<16x32xf32>
    %86 = tpu.matmul %83, %85, %cst_50 {dimension_numbers = #tpu.dot_dimension_numbers<[1], [0], [0], [1], [0, 0, 1, 1], [], []>} : vector<16x32xf32>, vector<32x32xf32>, vector<16x32xf32> -> vector<16x32xf32>
    %87 = arith.addf %61, %86 : vector<16x32xf32>
    %88 = arith.addf %2, %87 : vector<16x32xf32>
    %cst_51 = arith.constant dense<0.000000e+00> : vector<16xf32>
    %89 = vector.multi_reduction <add>, %88, %cst_51 [1] : vector<16x32xf32> to vector<16xf32>
    %90 = vector.shape_cast %89 : vector<16xf32> to vector<16x1xf32>
    %cst_52 = arith.constant 3.200000e+01 : f32
    %91 = vector.broadcast %cst_52 : f32 to vector<16x1xf32>
    %92 = arith.divf %90, %91 : vector<16x1xf32>
    %93 = vector.broadcast %92 : vector<16x1xf32> to vector<16x32xf32>
    %94 = arith.subf %88, %93 : vector<16x32xf32>
    %95 = arith.mulf %94, %94 : vector<16x32xf32>
    %cst_53 = arith.constant dense<0.000000e+00> : vector<16xf32>
    %96 = vector.multi_reduction <add>, %95, %cst_53 [1] : vector<16x32xf32> to vector<16xf32>
    %97 = vector.shape_cast %96 : vector<16xf32> to vector<16x1xf32>
    %cst_54 = arith.constant 3.200000e+01 : f32
    %98 = vector.broadcast %cst_54 : f32 to vector<16x1xf32>
    %99 = arith.divf %97, %98 : vector<16x1xf32>
    %100 = vector.broadcast %92 : vector<16x1xf32> to vector<16x32xf32>
    %101 = arith.subf %88, %100 : vector<16x32xf32>
    %cst_55 = arith.constant 9.99999974E-6 : f32
    %102 = vector.broadcast %cst_55 : f32 to vector<16x1xf32>
    %103 = arith.addf %99, %102 : vector<16x1xf32>
    %104 = math.rsqrt %103 : vector<16x1xf32>
    %105 = vector.broadcast %104 : vector<16x1xf32> to vector<16x32xf32>
    %106 = arith.mulf %101, %105 : vector<16x32xf32>
    %107 = vector.extract_strided_slice %0 {offsets = [2, 0], sizes = [1, 32], strides = [1, 1]} : vector<19x32xf32> to vector<1x32xf32>
    %108 = vector.broadcast %107 : vector<1x32xf32> to vector<16x32xf32>
    %109 = arith.mulf %106, %108 : vector<16x32xf32>
    %110 = vector.extract_strided_slice %0 {offsets = [3, 0], sizes = [1, 32], strides = [1, 1]} : vector<19x32xf32> to vector<1x32xf32>
    %111 = vector.broadcast %110 : vector<1x32xf32> to vector<16x32xf32>
    %112 = arith.addf %109, %111 : vector<16x32xf32>
    %c16 = arith.constant 16 : index
    %c0_56 = arith.constant 0 : index
    %c0_57 = arith.constant 0 : index
    %113 = vector.load %arg1[%c16, %c0_56, %c0_57] : memref<29x32x32xf32, #tpu.memory_space<vmem>>, vector<1x32x32xf32>
    %114 = vector.shape_cast %113 : vector<1x32x32xf32> to vector<32x32xf32>
    %cst_58 = arith.constant dense<0.000000e+00> : vector<16x32xf32>
    %115 = tpu.matmul %112, %114, %cst_58 {dimension_numbers = #tpu.dot_dimension_numbers<[1], [0], [0], [1], [0, 0, 1, 1], [], []>} : vector<16x32xf32>, vector<32x32xf32>, vector<16x32xf32> -> vector<16x32xf32>
    %116 = vector.extract_strided_slice %0 {offsets = [4, 0], sizes = [1, 32], strides = [1, 1]} : vector<19x32xf32> to vector<1x32xf32>
    %117 = vector.broadcast %116 : vector<1x32xf32> to vector<16x32xf32>
    %118 = arith.addf %115, %117 : vector<16x32xf32>
    %cst_59 = arith.constant 0.000000e+00 : f32
    %119 = vector.broadcast %cst_59 : f32 to vector<16x32xf32>
    %120 = arith.maximumf %118, %119 : vector<16x32xf32>
    %c17 = arith.constant 17 : index
    %c0_60 = arith.constant 0 : index
    %c0_61 = arith.constant 0 : index
    %121 = vector.load %arg1[%c17, %c0_60, %c0_61] : memref<29x32x32xf32, #tpu.memory_space<vmem>>, vector<1x32x32xf32>
    %122 = vector.shape_cast %121 : vector<1x32x32xf32> to vector<32x32xf32>
    %cst_62 = arith.constant dense<0.000000e+00> : vector<16x32xf32>
    %123 = tpu.matmul %112, %122, %cst_62 {dimension_numbers = #tpu.dot_dimension_numbers<[1], [0], [0], [1], [0, 0, 1, 1], [], []>} : vector<16x32xf32>, vector<32x32xf32>, vector<16x32xf32> -> vector<16x32xf32>
    %124 = vector.extract_strided_slice %0 {offsets = [5, 0], sizes = [1, 32], strides = [1, 1]} : vector<19x32xf32> to vector<1x32xf32>
    %125 = vector.broadcast %124 : vector<1x32xf32> to vector<16x32xf32>
    %126 = arith.addf %123, %125 : vector<16x32xf32>
    %cst_63 = arith.constant 0.000000e+00 : f32
    %127 = vector.broadcast %cst_63 : f32 to vector<16x32xf32>
    %128 = arith.maximumf %126, %127 : vector<16x32xf32>
    %c18 = arith.constant 18 : index
    %c0_64 = arith.constant 0 : index
    %c0_65 = arith.constant 0 : index
    %129 = vector.load %arg1[%c18, %c0_64, %c0_65] : memref<29x32x32xf32, #tpu.memory_space<vmem>>, vector<1x32x32xf32>
    %130 = vector.shape_cast %129 : vector<1x32x32xf32> to vector<32x32xf32>
    %cst_66 = arith.constant dense<0.000000e+00> : vector<16x32xf32>
    %131 = tpu.matmul %120, %130, %cst_66 {dimension_numbers = #tpu.dot_dimension_numbers<[1], [0], [0], [1], [0, 0, 1, 1], [], []>} : vector<16x32xf32>, vector<32x32xf32>, vector<16x32xf32> -> vector<16x32xf32>
    %c19 = arith.constant 19 : index
    %c0_67 = arith.constant 0 : index
    %c0_68 = arith.constant 0 : index
    %132 = vector.load %arg1[%c19, %c0_67, %c0_68] : memref<29x32x32xf32, #tpu.memory_space<vmem>>, vector<1x32x32xf32>
    %133 = vector.shape_cast %132 : vector<1x32x32xf32> to vector<32x32xf32>
    %cst_69 = arith.constant dense<0.000000e+00> : vector<16x32xf32>
    %134 = tpu.matmul %128, %133, %cst_69 {dimension_numbers = #tpu.dot_dimension_numbers<[1], [0], [0], [1], [0, 0, 1, 1], [], []>} : vector<16x32xf32>, vector<32x32xf32>, vector<16x32xf32> -> vector<16x32xf32>
    %135 = arith.addf %131, %134 : vector<16x32xf32>
    %136 = vector.extract_strided_slice %0 {offsets = [6, 0], sizes = [1, 32], strides = [1, 1]} : vector<19x32xf32> to vector<1x32xf32>
    %137 = vector.broadcast %136 : vector<1x32xf32> to vector<16x32xf32>
    %138 = arith.addf %135, %137 : vector<16x32xf32>
    %139 = arith.addf %88, %138 : vector<16x32xf32>
    %cst_70 = arith.constant dense<0.000000e+00> : vector<16xf32>
    %140 = vector.multi_reduction <add>, %139, %cst_70 [1] : vector<16x32xf32> to vector<16xf32>
    %141 = vector.shape_cast %140 : vector<16xf32> to vector<16x1xf32>
    %cst_71 = arith.constant 3.200000e+01 : f32
    %142 = vector.broadcast %cst_71 : f32 to vector<16x1xf32>
    %143 = arith.divf %141, %142 : vector<16x1xf32>
    %144 = vector.broadcast %143 : vector<16x1xf32> to vector<16x32xf32>
    %145 = arith.subf %139, %144 : vector<16x32xf32>
    %146 = arith.mulf %145, %145 : vector<16x32xf32>
    %cst_72 = arith.constant dense<0.000000e+00> : vector<16xf32>
    %147 = vector.multi_reduction <add>, %146, %cst_72 [1] : vector<16x32xf32> to vector<16xf32>
    %148 = vector.shape_cast %147 : vector<16xf32> to vector<16x1xf32>
    %cst_73 = arith.constant 3.200000e+01 : f32
    %149 = vector.broadcast %cst_73 : f32 to vector<16x1xf32>
    %150 = arith.divf %148, %149 : vector<16x1xf32>
    %151 = vector.broadcast %143 : vector<16x1xf32> to vector<16x32xf32>
    %152 = arith.subf %139, %151 : vector<16x32xf32>
    %cst_74 = arith.constant 9.99999974E-6 : f32
    %153 = vector.broadcast %cst_74 : f32 to vector<16x1xf32>
    %154 = arith.addf %150, %153 : vector<16x1xf32>
    %155 = math.rsqrt %154 : vector<16x1xf32>
    %156 = vector.broadcast %155 : vector<16x1xf32> to vector<16x32xf32>
    %157 = arith.mulf %152, %156 : vector<16x32xf32>
    %158 = vector.extract_strided_slice %0 {offsets = [7, 0], sizes = [1, 32], strides = [1, 1]} : vector<19x32xf32> to vector<1x32xf32>
    %159 = vector.broadcast %158 : vector<1x32xf32> to vector<16x32xf32>
    %160 = arith.mulf %157, %159 : vector<16x32xf32>
    %161 = vector.extract_strided_slice %0 {offsets = [8, 0], sizes = [1, 32], strides = [1, 1]} : vector<19x32xf32> to vector<1x32xf32>
    %162 = vector.broadcast %161 : vector<1x32xf32> to vector<16x32xf32>
    %163 = arith.addf %160, %162 : vector<16x32xf32>
    %c8 = arith.constant 8 : index
    %c0_75 = arith.constant 0 : index
    %c0_76 = arith.constant 0 : index
    %164 = vector.load %arg1[%c8, %c0_75, %c0_76] : memref<29x32x32xf32, #tpu.memory_space<vmem>>, vector<1x32x32xf32>
    %165 = vector.shape_cast %164 : vector<1x32x32xf32> to vector<32x32xf32>
    %cst_77 = arith.constant dense<0.000000e+00> : vector<16x32xf32>
    %166 = tpu.matmul %163, %165, %cst_77 {dimension_numbers = #tpu.dot_dimension_numbers<[1], [0], [0], [1], [0, 0, 1, 1], [], []>} : vector<16x32xf32>, vector<32x32xf32>, vector<16x32xf32> -> vector<16x32xf32>
    %c9 = arith.constant 9 : index
    %c0_78 = arith.constant 0 : index
    %c0_79 = arith.constant 0 : index
    %167 = vector.load %arg1[%c9, %c0_78, %c0_79] : memref<29x32x32xf32, #tpu.memory_space<vmem>>, vector<1x32x32xf32>
    %168 = vector.shape_cast %167 : vector<1x32x32xf32> to vector<32x32xf32>
    %cst_80 = arith.constant dense<0.000000e+00> : vector<16x32xf32>
    %169 = tpu.matmul %163, %168, %cst_80 {dimension_numbers = #tpu.dot_dimension_numbers<[1], [0], [0], [1], [0, 0, 1, 1], [], []>} : vector<16x32xf32>, vector<32x32xf32>, vector<16x32xf32> -> vector<16x32xf32>
    %c10 = arith.constant 10 : index
    %c0_81 = arith.constant 0 : index
    %c0_82 = arith.constant 0 : index
    %170 = vector.load %arg1[%c10, %c0_81, %c0_82] : memref<29x32x32xf32, #tpu.memory_space<vmem>>, vector<1x32x32xf32>
    %171 = vector.shape_cast %170 : vector<1x32x32xf32> to vector<32x32xf32>
    %cst_83 = arith.constant dense<0.000000e+00> : vector<16x32xf32>
    %172 = tpu.matmul %163, %171, %cst_83 {dimension_numbers = #tpu.dot_dimension_numbers<[1], [0], [0], [1], [0, 0, 1, 1], [], []>} : vector<16x32xf32>, vector<32x32xf32>, vector<16x32xf32> -> vector<16x32xf32>
    %cst_84 = arith.constant dense<0.000000e+00> : vector<16x16xf32>
    %173 = tpu.matmul %166, %169, %cst_84 {dimension_numbers = #tpu.dot_dimension_numbers<[1], [1], [0], [0], [0, 0, 1, 0], [], []>} : vector<16x32xf32>, vector<16x32xf32>, vector<16x16xf32> -> vector<16x16xf32>
    %174 = arith.addf %173, %12 : vector<16x16xf32>
    %cst_85 = arith.constant dense<0xFF800000> : vector<16xf32>
    %175 = vector.multi_reduction <maximumf>, %174, %cst_85 [1] : vector<16x16xf32> to vector<16xf32>
    %176 = vector.shape_cast %175 : vector<16xf32> to vector<16x1xf32>
    %177 = vector.broadcast %176 : vector<16x1xf32> to vector<16x16xf32>
    %178 = arith.subf %174, %177 : vector<16x16xf32>
    %179 = math.exp %178 : vector<16x16xf32>
    %cst_86 = arith.constant dense<0.000000e+00> : vector<16xf32>
    %180 = vector.multi_reduction <add>, %179, %cst_86 [1] : vector<16x16xf32> to vector<16xf32>
    %181 = vector.shape_cast %180 : vector<16xf32> to vector<16x1xf32>
    %182 = tpu.reciprocal %181 {approx = true} : vector<16x1xf32> -> vector<16x1xf32>
    %183 = vector.broadcast %182 : vector<16x1xf32> to vector<16x16xf32>
    %184 = arith.mulf %179, %183 : vector<16x16xf32>
    %cst_87 = arith.constant dense<0.000000e+00> : vector<16x32xf32>
    %185 = tpu.matmul %184, %172, %cst_87 {dimension_numbers = #tpu.dot_dimension_numbers<[1], [0], [0], [1], [0, 0, 1, 1], [], []>} : vector<16x16xf32>, vector<16x32xf32>, vector<16x32xf32> -> vector<16x32xf32>
    %c11 = arith.constant 11 : index
    %c0_88 = arith.constant 0 : index
    %c0_89 = arith.constant 0 : index
    %186 = vector.load %arg1[%c11, %c0_88, %c0_89] : memref<29x32x32xf32, #tpu.memory_space<vmem>>, vector<1x32x32xf32>
    %187 = vector.shape_cast %186 : vector<1x32x32xf32> to vector<32x32xf32>
    %cst_90 = arith.constant dense<0.000000e+00> : vector<16x32xf32>
    %188 = tpu.matmul %185, %187, %cst_90 {dimension_numbers = #tpu.dot_dimension_numbers<[1], [0], [0], [1], [0, 0, 1, 1], [], []>} : vector<16x32xf32>, vector<32x32xf32>, vector<16x32xf32> -> vector<16x32xf32>
    %c12 = arith.constant 12 : index
    %c0_91 = arith.constant 0 : index
    %c0_92 = arith.constant 0 : index
    %189 = vector.load %arg1[%c12, %c0_91, %c0_92] : memref<29x32x32xf32, #tpu.memory_space<vmem>>, vector<1x32x32xf32>
    %190 = vector.shape_cast %189 : vector<1x32x32xf32> to vector<32x32xf32>
    %cst_93 = arith.constant dense<0.000000e+00> : vector<16x32xf32>
    %191 = tpu.matmul %163, %190, %cst_93 {dimension_numbers = #tpu.dot_dimension_numbers<[1], [0], [0], [1], [0, 0, 1, 1], [], []>} : vector<16x32xf32>, vector<32x32xf32>, vector<16x32xf32> -> vector<16x32xf32>
    %c13 = arith.constant 13 : index
    %c0_94 = arith.constant 0 : index
    %c0_95 = arith.constant 0 : index
    %192 = vector.load %arg1[%c13, %c0_94, %c0_95] : memref<29x32x32xf32, #tpu.memory_space<vmem>>, vector<1x32x32xf32>
    %193 = vector.shape_cast %192 : vector<1x32x32xf32> to vector<32x32xf32>
    %cst_96 = arith.constant dense<0.000000e+00> : vector<16x32xf32>
    %194 = tpu.matmul %163, %193, %cst_96 {dimension_numbers = #tpu.dot_dimension_numbers<[1], [0], [0], [1], [0, 0, 1, 1], [], []>} : vector<16x32xf32>, vector<32x32xf32>, vector<16x32xf32> -> vector<16x32xf32>
    %c14 = arith.constant 14 : index
    %c0_97 = arith.constant 0 : index
    %c0_98 = arith.constant 0 : index
    %195 = vector.load %arg1[%c14, %c0_97, %c0_98] : memref<29x32x32xf32, #tpu.memory_space<vmem>>, vector<1x32x32xf32>
    %196 = vector.shape_cast %195 : vector<1x32x32xf32> to vector<32x32xf32>
    %cst_99 = arith.constant dense<0.000000e+00> : vector<16x32xf32>
    %197 = tpu.matmul %163, %196, %cst_99 {dimension_numbers = #tpu.dot_dimension_numbers<[1], [0], [0], [1], [0, 0, 1, 1], [], []>} : vector<16x32xf32>, vector<32x32xf32>, vector<16x32xf32> -> vector<16x32xf32>
    %cst_100 = arith.constant dense<0.000000e+00> : vector<16x16xf32>
    %198 = tpu.matmul %191, %194, %cst_100 {dimension_numbers = #tpu.dot_dimension_numbers<[1], [1], [0], [0], [0, 0, 1, 0], [], []>} : vector<16x32xf32>, vector<16x32xf32>, vector<16x16xf32> -> vector<16x16xf32>
    %199 = arith.addf %198, %12 : vector<16x16xf32>
    %cst_101 = arith.constant dense<0xFF800000> : vector<16xf32>
    %200 = vector.multi_reduction <maximumf>, %199, %cst_101 [1] : vector<16x16xf32> to vector<16xf32>
    %201 = vector.shape_cast %200 : vector<16xf32> to vector<16x1xf32>
    %202 = vector.broadcast %201 : vector<16x1xf32> to vector<16x16xf32>
    %203 = arith.subf %199, %202 : vector<16x16xf32>
    %204 = math.exp %203 : vector<16x16xf32>
    %cst_102 = arith.constant dense<0.000000e+00> : vector<16xf32>
    %205 = vector.multi_reduction <add>, %204, %cst_102 [1] : vector<16x16xf32> to vector<16xf32>
    %206 = vector.shape_cast %205 : vector<16xf32> to vector<16x1xf32>
    %207 = tpu.reciprocal %206 {approx = true} : vector<16x1xf32> -> vector<16x1xf32>
    %208 = vector.broadcast %207 : vector<16x1xf32> to vector<16x16xf32>
    %209 = arith.mulf %204, %208 : vector<16x16xf32>
    %cst_103 = arith.constant dense<0.000000e+00> : vector<16x32xf32>
    %210 = tpu.matmul %209, %197, %cst_103 {dimension_numbers = #tpu.dot_dimension_numbers<[1], [0], [0], [1], [0, 0, 1, 1], [], []>} : vector<16x16xf32>, vector<16x32xf32>, vector<16x32xf32> -> vector<16x32xf32>
    %c15 = arith.constant 15 : index
    %c0_104 = arith.constant 0 : index
    %c0_105 = arith.constant 0 : index
    %211 = vector.load %arg1[%c15, %c0_104, %c0_105] : memref<29x32x32xf32, #tpu.memory_space<vmem>>, vector<1x32x32xf32>
    %212 = vector.shape_cast %211 : vector<1x32x32xf32> to vector<32x32xf32>
    %cst_106 = arith.constant dense<0.000000e+00> : vector<16x32xf32>
    %213 = tpu.matmul %210, %212, %cst_106 {dimension_numbers = #tpu.dot_dimension_numbers<[1], [0], [0], [1], [0, 0, 1, 1], [], []>} : vector<16x32xf32>, vector<32x32xf32>, vector<16x32xf32> -> vector<16x32xf32>
    %214 = arith.addf %188, %213 : vector<16x32xf32>
    %215 = arith.addf %139, %214 : vector<16x32xf32>
    %cst_107 = arith.constant dense<0.000000e+00> : vector<16xf32>
    %216 = vector.multi_reduction <add>, %215, %cst_107 [1] : vector<16x32xf32> to vector<16xf32>
    %217 = vector.shape_cast %216 : vector<16xf32> to vector<16x1xf32>
    %cst_108 = arith.constant 3.200000e+01 : f32
    %218 = vector.broadcast %cst_108 : f32 to vector<16x1xf32>
    %219 = arith.divf %217, %218 : vector<16x1xf32>
    %220 = vector.broadcast %219 : vector<16x1xf32> to vector<16x32xf32>
    %221 = arith.subf %215, %220 : vector<16x32xf32>
    %222 = arith.mulf %221, %221 : vector<16x32xf32>
    %cst_109 = arith.constant dense<0.000000e+00> : vector<16xf32>
    %223 = vector.multi_reduction <add>, %222, %cst_109 [1] : vector<16x32xf32> to vector<16xf32>
    %224 = vector.shape_cast %223 : vector<16xf32> to vector<16x1xf32>
    %cst_110 = arith.constant 3.200000e+01 : f32
    %225 = vector.broadcast %cst_110 : f32 to vector<16x1xf32>
    %226 = arith.divf %224, %225 : vector<16x1xf32>
    %227 = vector.broadcast %219 : vector<16x1xf32> to vector<16x32xf32>
    %228 = arith.subf %215, %227 : vector<16x32xf32>
    %cst_111 = arith.constant 9.99999974E-6 : f32
    %229 = vector.broadcast %cst_111 : f32 to vector<16x1xf32>
    %230 = arith.addf %226, %229 : vector<16x1xf32>
    %231 = math.rsqrt %230 : vector<16x1xf32>
    %232 = vector.broadcast %231 : vector<16x1xf32> to vector<16x32xf32>
    %233 = arith.mulf %228, %232 : vector<16x32xf32>
    %234 = vector.extract_strided_slice %0 {offsets = [9, 0], sizes = [1, 32], strides = [1, 1]} : vector<19x32xf32> to vector<1x32xf32>
    %235 = vector.broadcast %234 : vector<1x32xf32> to vector<16x32xf32>
    %236 = arith.mulf %233, %235 : vector<16x32xf32>
    %237 = vector.extract_strided_slice %0 {offsets = [10, 0], sizes = [1, 32], strides = [1, 1]} : vector<19x32xf32> to vector<1x32xf32>
    %238 = vector.broadcast %237 : vector<1x32xf32> to vector<16x32xf32>
    %239 = arith.addf %236, %238 : vector<16x32xf32>
    %c20 = arith.constant 20 : index
    %c0_112 = arith.constant 0 : index
    %c0_113 = arith.constant 0 : index
    %240 = vector.load %arg1[%c20, %c0_112, %c0_113] : memref<29x32x32xf32, #tpu.memory_space<vmem>>, vector<1x32x32xf32>
    %241 = vector.shape_cast %240 : vector<1x32x32xf32> to vector<32x32xf32>
    %cst_114 = arith.constant dense<0.000000e+00> : vector<16x32xf32>
    %242 = tpu.matmul %239, %241, %cst_114 {dimension_numbers = #tpu.dot_dimension_numbers<[1], [0], [0], [1], [0, 0, 1, 1], [], []>} : vector<16x32xf32>, vector<32x32xf32>, vector<16x32xf32> -> vector<16x32xf32>
    %243 = vector.extract_strided_slice %0 {offsets = [11, 0], sizes = [1, 32], strides = [1, 1]} : vector<19x32xf32> to vector<1x32xf32>
    %244 = vector.broadcast %243 : vector<1x32xf32> to vector<16x32xf32>
    %245 = arith.addf %242, %244 : vector<16x32xf32>
    %cst_115 = arith.constant 0.000000e+00 : f32
    %246 = vector.broadcast %cst_115 : f32 to vector<16x32xf32>
    %247 = arith.maximumf %245, %246 : vector<16x32xf32>
    %c21 = arith.constant 21 : index
    %c0_116 = arith.constant 0 : index
    %c0_117 = arith.constant 0 : index
    %248 = vector.load %arg1[%c21, %c0_116, %c0_117] : memref<29x32x32xf32, #tpu.memory_space<vmem>>, vector<1x32x32xf32>
    %249 = vector.shape_cast %248 : vector<1x32x32xf32> to vector<32x32xf32>
    %cst_118 = arith.constant dense<0.000000e+00> : vector<16x32xf32>
    %250 = tpu.matmul %239, %249, %cst_118 {dimension_numbers = #tpu.dot_dimension_numbers<[1], [0], [0], [1], [0, 0, 1, 1], [], []>} : vector<16x32xf32>, vector<32x32xf32>, vector<16x32xf32> -> vector<16x32xf32>
    %251 = vector.extract_strided_slice %0 {offsets = [12, 0], sizes = [1, 32], strides = [1, 1]} : vector<19x32xf32> to vector<1x32xf32>
    %252 = vector.broadcast %251 : vector<1x32xf32> to vector<16x32xf32>
    %253 = arith.addf %250, %252 : vector<16x32xf32>
    %cst_119 = arith.constant 0.000000e+00 : f32
    %254 = vector.broadcast %cst_119 : f32 to vector<16x32xf32>
    %255 = arith.maximumf %253, %254 : vector<16x32xf32>
    %c22 = arith.constant 22 : index
    %c0_120 = arith.constant 0 : index
    %c0_121 = arith.constant 0 : index
    %256 = vector.load %arg1[%c22, %c0_120, %c0_121] : memref<29x32x32xf32, #tpu.memory_space<vmem>>, vector<1x32x32xf32>
    %257 = vector.shape_cast %256 : vector<1x32x32xf32> to vector<32x32xf32>
    %cst_122 = arith.constant dense<0.000000e+00> : vector<16x32xf32>
    %258 = tpu.matmul %247, %257, %cst_122 {dimension_numbers = #tpu.dot_dimension_numbers<[1], [0], [0], [1], [0, 0, 1, 1], [], []>} : vector<16x32xf32>, vector<32x32xf32>, vector<16x32xf32> -> vector<16x32xf32>
    %c23 = arith.constant 23 : index
    %c0_123 = arith.constant 0 : index
    %c0_124 = arith.constant 0 : index
    %259 = vector.load %arg1[%c23, %c0_123, %c0_124] : memref<29x32x32xf32, #tpu.memory_space<vmem>>, vector<1x32x32xf32>
    %260 = vector.shape_cast %259 : vector<1x32x32xf32> to vector<32x32xf32>
    %cst_125 = arith.constant dense<0.000000e+00> : vector<16x32xf32>
    %261 = tpu.matmul %255, %260, %cst_125 {dimension_numbers = #tpu.dot_dimension_numbers<[1], [0], [0], [1], [0, 0, 1, 1], [], []>} : vector<16x32xf32>, vector<32x32xf32>, vector<16x32xf32> -> vector<16x32xf32>
    %262 = arith.addf %258, %261 : vector<16x32xf32>
    %263 = vector.extract_strided_slice %0 {offsets = [13, 0], sizes = [1, 32], strides = [1, 1]} : vector<19x32xf32> to vector<1x32xf32>
    %264 = vector.broadcast %263 : vector<1x32xf32> to vector<16x32xf32>
    %265 = arith.addf %262, %264 : vector<16x32xf32>
    %266 = arith.addf %215, %265 : vector<16x32xf32>
    %c0_126 = arith.constant 0 : index
    %c0_127 = arith.constant 0 : index
    %267 = vector.load %arg3[%c0_126, %c0_127] : memref<10x16xf32, #tpu.memory_space<vmem>>, vector<10x16xf32>
    %268 = vector.extract_strided_slice %267 {offsets = [0, 0], sizes = [8, 16], strides = [1, 1]} : vector<10x16xf32> to vector<8x16xf32>
    %269 = vector.extract_strided_slice %267 {offsets = [8, 0], sizes = [2, 16], strides = [1, 1]} : vector<10x16xf32> to vector<2x16xf32>
    %c0_128 = arith.constant 0 : index
    %c0_129 = arith.constant 0 : index
    %270 = vector.load %arg4[%c0_128, %c0_129] : memref<24x1xf32, #tpu.memory_space<vmem>>, vector<24x1xf32>
    %271 = vector.extract_strided_slice %270 {offsets = [0, 0], sizes = [8, 1], strides = [1, 1]} : vector<24x1xf32> to vector<8x1xf32>
    %272 = vector.extract_strided_slice %270 {offsets = [8, 0], sizes = [16, 1], strides = [1, 1]} : vector<24x1xf32> to vector<16x1xf32>
    %c24 = arith.constant 24 : index
    %c0_130 = arith.constant 0 : index
    %c0_131 = arith.constant 0 : index
    %273 = vector.load %arg1[%c24, %c0_130, %c0_131] : memref<29x32x32xf32, #tpu.memory_space<vmem>>, vector<1x32x32xf32>
    %274 = vector.shape_cast %273 : vector<1x32x32xf32> to vector<32x32xf32>
    %c25 = arith.constant 25 : index
    %c0_132 = arith.constant 0 : index
    %c0_133 = arith.constant 0 : index
    %275 = vector.load %arg1[%c25, %c0_132, %c0_133] : memref<29x32x32xf32, #tpu.memory_space<vmem>>, vector<1x32x32xf32>
    %276 = vector.shape_cast %275 : vector<1x32x32xf32> to vector<32x32xf32>
    %c26 = arith.constant 26 : index
    %c0_134 = arith.constant 0 : index
    %c0_135 = arith.constant 0 : index
    %277 = vector.load %arg1[%c26, %c0_134, %c0_135] : memref<29x32x32xf32, #tpu.memory_space<vmem>>, vector<1x32x32xf32>
    %278 = vector.shape_cast %277 : vector<1x32x32xf32> to vector<32x32xf32>
    %279 = vector.extract_strided_slice %0 {offsets = [14, 0], sizes = [1, 32], strides = [1, 1]} : vector<19x32xf32> to vector<1x32xf32>
    %280 = vector.shape_cast %279 : vector<1x32xf32> to vector<1x32xf32>
    %281 = vector.broadcast %280 : vector<1x32xf32> to vector<16x32xf32>
    %282 = vector.extract_strided_slice %0 {offsets = [15, 0], sizes = [1, 32], strides = [1, 1]} : vector<19x32xf32> to vector<1x32xf32>
    %283 = vector.shape_cast %282 : vector<1x32xf32> to vector<1x32xf32>
    %284 = vector.broadcast %283 : vector<1x32xf32> to vector<8x32xf32>
    %285 = vector.extract_strided_slice %0 {offsets = [16, 0], sizes = [1, 32], strides = [1, 1]} : vector<19x32xf32> to vector<1x32xf32>
    %286 = vector.shape_cast %285 : vector<1x32xf32> to vector<1x32xf32>
    %287 = vector.broadcast %286 : vector<1x32xf32> to vector<16x32xf32>
    %cst_136 = arith.constant dense<0.000000e+00> : vector<16x32xf32>
    %288 = tpu.matmul %266, %274, %cst_136 {dimension_numbers = #tpu.dot_dimension_numbers<[1], [0], [0], [1], [0, 0, 1, 1], [], []>} : vector<16x32xf32>, vector<32x32xf32>, vector<16x32xf32> -> vector<16x32xf32>
    %289 = arith.addf %288, %281 : vector<16x32xf32>
    %cst_137 = arith.constant 0.000000e+00 : f32
    %290 = vector.broadcast %cst_137 : f32 to vector<16x32xf32>
    %291 = arith.maximumf %289, %290 : vector<16x32xf32>
    %cst_138 = arith.constant dense<0.000000e+00> : vector<8x32xf32>
    %292 = tpu.matmul %268, %291, %cst_138 {dimension_numbers = #tpu.dot_dimension_numbers<[1], [0], [0], [1], [0, 0, 1, 1], [], []>} : vector<8x16xf32>, vector<16x32xf32>, vector<8x32xf32> -> vector<8x32xf32>
    %293 = vector.broadcast %271 : vector<8x1xf32> to vector<8x32xf32>
    %294 = arith.mulf %292, %293 : vector<8x32xf32>
    %cst_139 = arith.constant dense<0.000000e+00> : vector<8x32xf32>
    %295 = tpu.matmul %294, %276, %cst_139 {dimension_numbers = #tpu.dot_dimension_numbers<[1], [0], [0], [1], [0, 0, 1, 1], [], []>} : vector<8x32xf32>, vector<32x32xf32>, vector<8x32xf32> -> vector<8x32xf32>
    %296 = arith.addf %295, %284 : vector<8x32xf32>
    %cst_140 = arith.constant 0.000000e+00 : f32
    %297 = vector.broadcast %cst_140 : f32 to vector<8x32xf32>
    %298 = arith.maximumf %296, %297 : vector<8x32xf32>
    %cst_141 = arith.constant dense<0.000000e+00> : vector<16x32xf32>
    %299 = tpu.matmul %268, %298, %cst_141 {dimension_numbers = #tpu.dot_dimension_numbers<[0], [0], [1], [1], [0, 1, 1, 1], [], []>} : vector<8x16xf32>, vector<8x32xf32>, vector<16x32xf32> -> vector<16x32xf32>
    %300 = vector.broadcast %272 : vector<16x1xf32> to vector<16x32xf32>
    %301 = arith.mulf %299, %300 : vector<16x32xf32>
    %302 = arith.addf %301, %266 : vector<16x32xf32>
    %cst_142 = arith.constant dense<0.000000e+00> : vector<16x32xf32>
    %303 = tpu.matmul %302, %278, %cst_142 {dimension_numbers = #tpu.dot_dimension_numbers<[1], [0], [0], [1], [0, 0, 1, 1], [], []>} : vector<16x32xf32>, vector<32x32xf32>, vector<16x32xf32> -> vector<16x32xf32>
    %304 = arith.addf %303, %287 : vector<16x32xf32>
    %cst_143 = arith.constant 0.000000e+00 : f32
    %305 = vector.broadcast %cst_143 : f32 to vector<16x32xf32>
    %306 = arith.maximumf %304, %305 : vector<16x32xf32>
    %cst_144 = arith.constant dense<0.000000e+00> : vector<16x32xf32>
    %307 = tpu.matmul %306, %274, %cst_144 {dimension_numbers = #tpu.dot_dimension_numbers<[1], [0], [0], [1], [0, 0, 1, 1], [], []>} : vector<16x32xf32>, vector<32x32xf32>, vector<16x32xf32> -> vector<16x32xf32>
    %308 = arith.addf %307, %281 : vector<16x32xf32>
    %cst_145 = arith.constant 0.000000e+00 : f32
    %309 = vector.broadcast %cst_145 : f32 to vector<16x32xf32>
    %310 = arith.maximumf %308, %309 : vector<16x32xf32>
    %cst_146 = arith.constant dense<0.000000e+00> : vector<8x32xf32>
    %311 = tpu.matmul %268, %310, %cst_146 {dimension_numbers = #tpu.dot_dimension_numbers<[1], [0], [0], [1], [0, 0, 1, 1], [], []>} : vector<8x16xf32>, vector<16x32xf32>, vector<8x32xf32> -> vector<8x32xf32>
    %312 = vector.broadcast %271 : vector<8x1xf32> to vector<8x32xf32>
    %313 = arith.mulf %311, %312 : vector<8x32xf32>
    %cst_147 = arith.constant dense<0.000000e+00> : vector<8x32xf32>
    %314 = tpu.matmul %313, %276, %cst_147 {dimension_numbers = #tpu.dot_dimension_numbers<[1], [0], [0], [1], [0, 0, 1, 1], [], []>} : vector<8x32xf32>, vector<32x32xf32>, vector<8x32xf32> -> vector<8x32xf32>
    %315 = arith.addf %314, %284 : vector<8x32xf32>
    %cst_148 = arith.constant 0.000000e+00 : f32
    %316 = vector.broadcast %cst_148 : f32 to vector<8x32xf32>
    %317 = arith.maximumf %315, %316 : vector<8x32xf32>
    %cst_149 = arith.constant dense<0.000000e+00> : vector<16x32xf32>
    %318 = tpu.matmul %268, %317, %cst_149 {dimension_numbers = #tpu.dot_dimension_numbers<[0], [0], [1], [1], [0, 1, 1, 1], [], []>} : vector<8x16xf32>, vector<8x32xf32>, vector<16x32xf32> -> vector<16x32xf32>
    %319 = vector.broadcast %272 : vector<16x1xf32> to vector<16x32xf32>
    %320 = arith.mulf %318, %319 : vector<16x32xf32>
    %321 = arith.addf %320, %266 : vector<16x32xf32>
    %cst_150 = arith.constant dense<0.000000e+00> : vector<16x32xf32>
    %322 = tpu.matmul %321, %278, %cst_150 {dimension_numbers = #tpu.dot_dimension_numbers<[1], [0], [0], [1], [0, 0, 1, 1], [], []>} : vector<16x32xf32>, vector<32x32xf32>, vector<16x32xf32> -> vector<16x32xf32>
    %323 = arith.addf %322, %287 : vector<16x32xf32>
    %cst_151 = arith.constant 0.000000e+00 : f32
    %324 = vector.broadcast %cst_151 : f32 to vector<16x32xf32>
    %325 = arith.maximumf %323, %324 : vector<16x32xf32>
    %cst_152 = arith.constant dense<0.000000e+00> : vector<2x32xf32>
    %326 = tpu.matmul %269, %325, %cst_152 {dimension_numbers = #tpu.dot_dimension_numbers<[1], [0], [0], [1], [0, 0, 1, 1], [], []>} : vector<2x16xf32>, vector<16x32xf32>, vector<2x32xf32> -> vector<2x32xf32>
    %c27 = arith.constant 27 : index
    %c0_153 = arith.constant 0 : index
    %c0_154 = arith.constant 0 : index
    %327 = vector.load %arg1[%c27, %c0_153, %c0_154] : memref<29x32x32xf32, #tpu.memory_space<vmem>>, vector<1x32x32xf32>
    %328 = vector.shape_cast %327 : vector<1x32x32xf32> to vector<32x32xf32>
    %cst_155 = arith.constant dense<0.000000e+00> : vector<2x32xf32>
    %329 = tpu.matmul %326, %328, %cst_155 {dimension_numbers = #tpu.dot_dimension_numbers<[1], [0], [0], [1], [0, 0, 1, 1], [], []>} : vector<2x32xf32>, vector<32x32xf32>, vector<2x32xf32> -> vector<2x32xf32>
    %330 = vector.extract_strided_slice %0 {offsets = [17, 0], sizes = [1, 32], strides = [1, 1]} : vector<19x32xf32> to vector<1x32xf32>
    %331 = vector.broadcast %330 : vector<1x32xf32> to vector<2x32xf32>
    %332 = arith.addf %329, %331 : vector<2x32xf32>
    %cst_156 = arith.constant 0.000000e+00 : f32
    %333 = vector.broadcast %cst_156 : f32 to vector<2x32xf32>
    %334 = arith.maximumf %332, %333 : vector<2x32xf32>
    %c28 = arith.constant 28 : index
    %c0_157 = arith.constant 0 : index
    %c0_158 = arith.constant 0 : index
    %335 = vector.load %arg1[%c28, %c0_157, %c0_158] : memref<29x32x32xf32, #tpu.memory_space<vmem>>, vector<1x32x32xf32>
    %336 = vector.shape_cast %335 : vector<1x32x32xf32> to vector<32x32xf32>
    %cst_159 = arith.constant dense<0.000000e+00> : vector<2x32xf32>
    %337 = tpu.matmul %334, %336, %cst_159 {dimension_numbers = #tpu.dot_dimension_numbers<[1], [0], [0], [1], [0, 0, 1, 1], [], []>} : vector<2x32xf32>, vector<32x32xf32>, vector<2x32xf32> -> vector<2x32xf32>
    %338 = vector.extract_strided_slice %0 {offsets = [18, 0], sizes = [1, 32], strides = [1, 1]} : vector<19x32xf32> to vector<1x32xf32>
    %339 = vector.broadcast %338 : vector<1x32xf32> to vector<2x32xf32>
    %340 = arith.addf %337, %339 : vector<2x32xf32>
    %341 = vector.extract_strided_slice %340 {offsets = [0, 0], sizes = [2, 1], strides = [1, 1]} : vector<2x32xf32> to vector<2x1xf32>
    %c0_160 = arith.constant 0 : index
    %c0_161 = arith.constant 0 : index
    %342 = vector.load %arg5[%c0_160, %c0_161] : memref<2x1xf32, #tpu.memory_space<vmem>>, vector<2x1xf32>
    tpu.vector_store %arg5[%c0_160, %c0_161], %341 {strides = array<i32>} : memref<2x1xf32, #tpu.memory_space<vmem>>, vector<2x1xf32>,
    return
  }
}

</mosaic_0001>

<llo_original>
// kernel: forward.1
$region0: #{forward.1}
  #allocation0 [shape = 'u32[]', space=smem, size = 0x4, offset = 0x4, fixed_abs, tag = 'smem constant byte address 0x4 - core index']
  #allocation1 [shape = 'u32[144,128]{1,0:T(1,128)}', space=vmem, size = 0x12000, scoped, tag = 'internal scratch']
  %s0 = inlined_call_operand.vmem [shape: f32[3,16,32], index: 0, kind: input, shape index: {}]
  %s1 = inlined_call_operand.vmem [shape: f32[29,32,32], index: 1, kind: input, shape index: {}]
  %s2 = inlined_call_operand.vmem [shape: f32[19,32], index: 2, kind: input, shape index: {}]
  %s3 = inlined_call_operand.vmem [shape: f32[10,16], index: 3, kind: input, shape index: {}]
  %s4 = inlined_call_operand.vmem [shape: f32[24,1], index: 4, kind: input, shape index: {}]
  %s5 = inlined_call_operand.vmem [shape: f32[2,1], index: 5, kind: output, shape index: {}]
  %s6 = sld [smem:[#allocation0]]
  $region30: #{forward.1} parent=0
    _
  %s8 = ssub.s32 1, %s6
  %s9 = scalar_select 0, %s8, %s6
  // Predicated region
  $region2: #{forward.1} parent=0 // pred_check
    _
  $region3: #{forward.1} parent=0 // pred_check_branch
    %11 = sbr.rel (0) target = $region5
  $region4: #{forward.1} parent=0 // pred_region
    _
  $region5: #{forward.1} parent=0 // pred_fallthru
    _
  // Predicated region
  $region6: #{forward.1} parent=0 // pred_check
    _
  $region7: #{forward.1} parent=0 // pred_check_branch
    %13 = sbr.rel (0) target = $region9
  $region8: #{forward.1} parent=0 // pred_region
    _
  $region9: #{forward.1} parent=0 // pred_fallthru
    _
  // Predicated region
  $region10: #{forward.1} parent=0 // pred_check
    _
  $region11: #{forward.1} parent=0 // pred_check_branch
    %15 = sbr.rel (0) target = $region13
  $region12: #{forward.1} parent=0 // pred_region
    _
  $region13: #{forward.1} parent=0 // pred_fallthru
    _
  // Predicated region
  $region14: #{forward.1} parent=0 // pred_check
    _
  $region15: #{forward.1} parent=0 // pred_check_branch
    %17 = sbr.rel (0) target = $region17
  $region16: #{forward.1} parent=0 // pred_region
    _
  $region17: #{forward.1} parent=0 // pred_fallthru
    _
  // Predicated region
  $region18: #{forward.1} parent=0 // pred_check
    _
  $region19: #{forward.1} parent=0 // pred_check_branch
    %19 = sbr.rel (0) target = $region21
  $region20: #{forward.1} parent=0 // pred_region
    _
  $region21: #{forward.1} parent=0 // pred_fallthru
    _
  %v20 = vld [vmem:[%s2] sm:$0xff]
  %v21 = vld [vmem:[%s2 + $0x8] sm:$0xff]
  %v22 = vld [vmem:[%s2 + $0x10] sm:$0x7]
  %v23 = vld [vmem:[%s0] sm:$0xff]
  %v24 = vld [vmem:[%s0 + $0x8] sm:$0xff]
  %s25 = scalar_lea.vmem %s0, 16
  %v26 = vld [vmem:[%s25] sm:$0xff]
  %v27 = vld [vmem:[%s25 + $0x8] sm:$0xff]
  %s28 = scalar_lea.vmem %s0, 32
  %v29 = vld [vmem:[%s28] sm:$0xff]
  %v30 = vld [vmem:[%s28 + $0x8] sm:$0xff]
  %vm31 = vcmask 261120
  %v33 = vsel %vm31, %v26, 0
  %v36 = vsel %vm31, %v27, 0
  %v39 = vsel %vm31, %v29, 0
  %v42 = vsel %vm31, %v30, 0
  %44 = vmatprep.subr.mxu0 0.0
  %45 = vmatpush1.xpose.msra.mxu0 0.0
  %46 = vmatprep.subr.mxu0 0.0
  %47 = vmatpush1.xpose.msra.mxu0 0.0
  %48 = vmatprep.subr.mxu0 0.0
  %49 = vmatpush1.xpose.msra.mxu0 0.0
  %50 = vmatprep.subr.mxu0 0.0
  %51 = vmatpush1.xpose.msra.mxu0 0.0
  %52 = vmatprep.subr.mxu0 0.0
  %53 = vmatpush1.xpose.msra.mxu0 0.0
  %54 = vmatprep.subr.mxu0 0.0
  %55 = vmatpush1.xpose.msra.mxu0 0.0
  %56 = vmatprep.subr.mxu0 0.0
  %57 = vmatpush1.xpose.msra.mxu0 0.0
  %58 = vmatprep.subr.mxu0 0.0
  %59 = vmatpush1.xpose.msra.mxu0 0.0
  %60 = vmatprep.subr.mxu0 0.0
  %61 = vmatpush1.xpose.msra.mxu0 0.0
  %62 = vmatprep.subr.mxu0 0.0
  %63 = vmatpush1.xpose.msra.mxu0 0.0
  %64 = vmatprep.subr.mxu0 0.0
  %65 = vmatpush1.xpose.msra.mxu0 0.0
  %66 = vmatprep.subr.mxu0 0.0
  %67 = vmatpush1.xpose.msra.mxu0 0.0
  %68 = vmatprep.subr.mxu0 0.0
  %69 = vmatpush1.xpose.msra.mxu0 0.0
  %70 = vmatprep.subr.mxu0 0.0
  %71 = vmatpush1.xpose.msra.mxu0 0.0
  %72 = vmatprep.subr.mxu0 0.0
  %73 = vmatpush1.xpose.msra.mxu0 %v42
  %74 = vmatprep.subr.mxu0 0.0
  %75 = vmatpush1.xpose.msra.mxu0 %v39
  %76 = vmatprep.subr.mxu0 0.0
  %77 = vmatpush2.xpose.msra.mxu0 0.0
  %78 = vmatprep.subr.mxu0 0.0
  %79 = vmatpush2.xpose.msra.mxu0 0.0
  %80 = vmatprep.subr.mxu0 0.0
  %81 = vmatpush2.xpose.msra.mxu0 0.0
  %82 = vmatprep.subr.mxu0 0.0
  %83 = vmatpush2.xpose.msra.mxu0 0.0
  %84 = vmatprep.subr.mxu0 0.0
  %85 = vmatpush2.xpose.msra.mxu0 0.0
  %86 = vmatprep.subr.mxu0 0.0
  %87 = vmatpush2.xpose.msra.mxu0 0.0
  %88 = vmatprep.subr.mxu0 0.0
  %89 = vmatpush2.xpose.msra.mxu0 0.0
  %90 = vmatprep.subr.mxu0 0.0
  %91 = vmatpush2.xpose.msra.mxu0 0.0
  %92 = vmatprep.subr.mxu0 0.0
  %93 = vmatpush2.xpose.msra.mxu0 0.0
  %94 = vmatprep.subr.mxu0 0.0
  %95 = vmatpush2.xpose.msra.mxu0 0.0
  %96 = vmatprep.subr.mxu0 0.0
  %97 = vmatpush2.xpose.msra.mxu0 0.0
  %98 = vmatprep.subr.mxu0 0.0
  %99 = vmatpush2.xpose.msra.mxu0 0.0
  %100 = vmatprep.subr.mxu0 0.0
  %101 = vmatpush2.xpose.msra.mxu0 0.0
  %102 = vmatprep.subr.mxu0 0.0
  %103 = vmatpush2.xpose.msra.mxu0 0.0
  %104 = vmatprep.subr.mxu0 0.0
  %105 = vmatpush2.xpose.msra.mxu0 0.0
  %106 = vmatprep.subr.mxu0 0.0
  %107 = vmatpush2.xpose.msra.mxu0 0.0
  %108 = vmatprep.mubr.f32.mxu0 0.0
  %109 = vmatmul.mubr.f32.gmra.mxu0 %v33
  %v110 = vpop.f32.mrf.mxu0
  %v111 = vadd.f32 0.0, %v110
  %v112 = vpop.f32.mrf.mxu0
  %113 = vmatprep.mubr.f32.mxu0 0.0
  %114 = vmatmul.mubr.f32.gmra.mxu0 %v36
  %v115 = vpop.f32.mrf.mxu0
  %v116 = vadd.f32 0.0, %v115
  %v117 = vpop.f32.mrf.mxu0
  %118 = vdwg.mxu0
  %vm119 = vcmp.le.f32.partialorder %v111, 25.0
  %vm120 = vcmp.le.f32.partialorder %v116, 25.0
  %v121 = vsel %vm119, 0.0, -1e+30
  %v122 = vsel %vm120, 0.0, -1e+30
  %v123 = vsel %vm31, %v23, 0.0
  %124 = vadd.xlane.f32.xlu0 %v123
  %v125 = vpop.xlane.xlu0 %124
  %v126 = vsel %vm31, %v24, 0.0
  %127 = vadd.xlane.f32.xlu0 %v126
  %v128 = vpop.xlane.xlu0 %127
  %v129 = vrcp.pop 32.0
  %v130 = vmul.f32 %v125, %v129
  %v131 = vmul.f32 %v128, %v129
  %v132 = vsub.f32 %v23, %v130
  %v133 = vsub.f32 %v24, %v131
  %v134 = vmul.f32 %v132, %v132
  %v135 = vmul.f32 %v133, %v133
  %v136 = vsel %vm31, %v134, 0.0
  %137 = vadd.xlane.f32.xlu0 %v136
  %v138 = vpop.xlane.xlu0 %137
  %v139 = vsel %vm31, %v135, 0.0
  %140 = vadd.xlane.f32.xlu0 %v139
  %v141 = vpop.xlane.xlu0 %140
  %v142 = vmul.f32 %v138, %v129
  %v143 = vmul.f32 %v141, %v129
  %v144 = vadd.f32 %v142, 1e-05
  %v145 = vadd.f32 %v143, 1e-05
  %v146 = vrsqrt.pop %v144
  %v147 = vrsqrt.pop %v145
  %v148 = vmul.f32 %v132, %v146
  %v149 = vmul.f32 %v133, %v147
  %v150 = vlaneseq
  %v151 = vshrl.u32 %v150, 7
  %v152 = vsub.s32 0, %v151
  %v153 = vrot.slane %v20, %v152
  %v154 = vmul.f32 %v148, %v153
  %v155 = vmul.f32 %v149, %v153
  %v156 = vlaneseq
  %v157 = vshrl.u32 %v156, 7
  %v158 = vsub.s32 1, %v157
  %v159 = vrot.slane %v20, %v158
  %v160 = vadd.f32 %v154, %v159
  %v161 = vadd.f32 %v155, %v159
  %v162 = vld [vmem:[%s1] sm:$0xff]
  %v163 = vld [vmem:[%s1 + $0x8] sm:$0xff]
  %v164 = vld [vmem:[%s1 + $0x10] sm:$0xff]
  %v165 = vld [vmem:[%s1 + $0x18] sm:$0xff]
  %v167 = vsel %vm31, %v160, 0
  %v170 = vsel %vm31, %v161, 0
  %172 = vmatprep.subr.mxu0 0.0
  %173 = vmatpush1.msra.mxu0 0.0
  %174 = vmatprep.subr.mxu0 0.0
  %175 = vmatpush1.msra.mxu0 0.0
  %176 = vmatprep.subr.mxu0 0.0
  %177 = vmatpush1.msra.mxu0 0.0
  %178 = vmatprep.subr.mxu0 0.0
  %179 = vmatpush1.msra.mxu0 0.0
  %180 = vmatprep.subr.mxu0 0.0
  %181 = vmatpush1.msra.mxu0 0.0
  %182 = vmatprep.subr.mxu0 0.0
  %183 = vmatpush1.msra.mxu0 0.0
  %184 = vmatprep.subr.mxu0 0.0
  %185 = vmatpush1.msra.mxu0 0.0
  %186 = vmatprep.subr.mxu0 0.0
  %187 = vmatpush1.msra.mxu0 0.0
  %188 = vmatprep.subr.mxu0 0.0
  %189 = vmatpush1.msra.mxu0 0.0
  %190 = vmatprep.subr.mxu0 0.0
  %191 = vmatpush1.msra.mxu0 0.0
  %192 = vmatprep.subr.mxu0 0.0
  %193 = vmatpush1.msra.mxu0 0.0
  %194 = vmatprep.subr.mxu0 0.0
  %195 = vmatpush1.msra.mxu0 0.0
  %196 = vmatprep.subr.mxu0 0.0
  %197 = vmatpush1.msra.mxu0 %v165
  %198 = vmatprep.subr.mxu0 0.0
  %199 = vmatpush1.msra.mxu0 %v164
  %200 = vmatprep.subr.mxu0 0.0
  %201 = vmatpush1.msra.mxu0 %v163
  %202 = vmatprep.subr.mxu0 0.0
  %203 = vmatpush1.msra.mxu0 %v162
  %204 = vmatprep.subr.mxu0 0.0
  %205 = vmatpush2.msra.mxu0 0.0
  %206 = vmatprep.subr.mxu0 0.0
  %207 = vmatpush2.msra.mxu0 0.0
  %208 = vmatprep.subr.mxu0 0.0
  %209 = vmatpush2.msra.mxu0 0.0
  %210 = vmatprep.subr.mxu0 0.0
  %211 = vmatpush2.msra.mxu0 0.0
  %212 = vmatprep.subr.mxu0 0.0
  %213 = vmatpush2.msra.mxu0 0.0
  %214 = vmatprep.subr.mxu0 0.0
  %215 = vmatpush2.msra.mxu0 0.0
  %216 = vmatprep.subr.mxu0 0.0
  %217 = vmatpush2.msra.mxu0 0.0
  %218 = vmatprep.subr.mxu0 0.0
  %219 = vmatpush2.msra.mxu0 0.0
  %220 = vmatprep.subr.mxu0 0.0
  %221 = vmatpush2.msra.mxu0 0.0
  %222 = vmatprep.subr.mxu0 0.0
  %223 = vmatpush2.msra.mxu0 0.0
  %224 = vmatprep.subr.mxu0 0.0
  %225 = vmatpush2.msra.mxu0 0.0
  %226 = vmatprep.subr.mxu0 0.0
  %227 = vmatpush2.msra.mxu0 0.0
  %228 = vmatprep.subr.mxu0 0.0
  %229 = vmatpush2.msra.mxu0 0.0
  %230 = vmatprep.subr.mxu0 0.0
  %231 = vmatpush2.msra.mxu0 0.0
  %232 = vmatprep.subr.mxu0 0.0
  %233 = vmatpush2.msra.mxu0 0.0
  %234 = vmatprep.subr.mxu0 0.0
  %235 = vmatpush2.msra.mxu0 0.0
  %236 = vmatprep.mubr.f32.mxu0 0.0
  %237 = vmatmul.mubr.f32.gmra.mxu0 %v167
  %v238 = vpop.f32.mrf.mxu0
  %v239 = vadd.f32 0.0, %v238
  %v240 = vpop.f32.mrf.mxu0
  %241 = vmatprep.mubr.f32.mxu0 0.0
  %242 = vmatmul.mubr.f32.gmra.mxu0 %v170
  %v243 = vpop.f32.mrf.mxu0
  %v244 = vadd.f32 0.0, %v243
  %v245 = vpop.f32.mrf.mxu0
  %246 = vdwg.mxu0
  %s247 = scalar_lea.vmem %s1, 32
  %v248 = vld [vmem:[%s247] sm:$0xff]
  %v249 = vld [vmem:[%s247 + $0x8] sm:$0xff]
  %v250 = vld [vmem:[%s247 + $0x10] sm:$0xff]
  %v251 = vld [vmem:[%s247 + $0x18] sm:$0xff]
  %252 = vmatprep.subr.mxu0 0.0
  %253 = vmatpush1.msra.mxu0 0.0
  %254 = vmatprep.subr.mxu0 0.0
  %255 = vmatpush1.msra.mxu0 0.0
  %256 = vmatprep.subr.mxu0 0.0
  %257 = vmatpush1.msra.mxu0 0.0
  %258 = vmatprep.subr.mxu0 0.0
  %259 = vmatpush1.msra.mxu0 0.0
  %260 = vmatprep.subr.mxu0 0.0
  %261 = vmatpush1.msra.mxu0 0.0
  %262 = vmatprep.subr.mxu0 0.0
  %263 = vmatpush1.msra.mxu0 0.0
  %264 = vmatprep.subr.mxu0 0.0
  %265 = vmatpush1.msra.mxu0 0.0
  %266 = vmatprep.subr.mxu0 0.0
  %267 = vmatpush1.msra.mxu0 0.0
  %268 = vmatprep.subr.mxu0 0.0
  %269 = vmatpush1.msra.mxu0 0.0
  %270 = vmatprep.subr.mxu0 0.0
  %271 = vmatpush1.msra.mxu0 0.0
  %272 = vmatprep.subr.mxu0 0.0
  %273 = vmatpush1.msra.mxu0 0.0
  %274 = vmatprep.subr.mxu0 0.0
  %275 = vmatpush1.msra.mxu0 0.0
  %276 = vmatprep.subr.mxu0 0.0
  %277 = vmatpush1.msra.mxu0 %v251
  %278 = vmatprep.subr.mxu0 0.0
  %279 = vmatpush1.msra.mxu0 %v250
  %280 = vmatprep.subr.mxu0 0.0
  %281 = vmatpush1.msra.mxu0 %v249
  %282 = vmatprep.subr.mxu0 0.0
  %283 = vmatpush1.msra.mxu0 %v248
  %284 = vmatprep.subr.mxu0 0.0
  %285 = vmatpush2.msra.mxu0 0.0
  %286 = vmatprep.subr.mxu0 0.0
  %287 = vmatpush2.msra.mxu0 0.0
  %288 = vmatprep.subr.mxu0 0.0
  %289 = vmatpush2.msra.mxu0 0.0
  %290 = vmatprep.subr.mxu0 0.0
  %291 = vmatpush2.msra.mxu0 0.0
  %292 = vmatprep.subr.mxu0 0.0
  %293 = vmatpush2.msra.mxu0 0.0
  %294 = vmatprep.subr.mxu0 0.0
  %295 = vmatpush2.msra.mxu0 0.0
  %296 = vmatprep.subr.mxu0 0.0
  %297 = vmatpush2.msra.mxu0 0.0
  %298 = vmatprep.subr.mxu0 0.0
  %299 = vmatpush2.msra.mxu0 0.0
  %300 = vmatprep.subr.mxu0 0.0
  %301 = vmatpush2.msra.mxu0 0.0
  %302 = vmatprep.subr.mxu0 0.0
  %303 = vmatpush2.msra.mxu0 0.0
  %304 = vmatprep.subr.mxu0 0.0
  %305 = vmatpush2.msra.mxu0 0.0
  %306 = vmatprep.subr.mxu0 0.0
  %307 = vmatpush2.msra.mxu0 0.0
  %308 = vmatprep.subr.mxu0 0.0
  %309 = vmatpush2.msra.mxu0 0.0
  %310 = vmatprep.subr.mxu0 0.0
  %311 = vmatpush2.msra.mxu0 0.0
  %312 = vmatprep.subr.mxu0 0.0
  %313 = vmatpush2.msra.mxu0 0.0
  %314 = vmatprep.subr.mxu0 0.0
  %315 = vmatpush2.msra.mxu0 0.0
  %316 = vmatprep.mubr.f32.mxu0 0.0
  %317 = vmatmul.mubr.f32.gmra.mxu0 %v167
  %v318 = vpop.f32.mrf.mxu0
  %v319 = vadd.f32 0.0, %v318
  %v320 = vpop.f32.mrf.mxu0
  %321 = vmatprep.mubr.f32.mxu0 0.0
  %322 = vmatmul.mubr.f32.gmra.mxu0 %v170
  %v323 = vpop.f32.mrf.mxu0
  %v324 = vadd.f32 0.0, %v323
  %v325 = vpop.f32.mrf.mxu0
  %326 = vdwg.mxu0
  %s327 = scalar_lea.vmem %s1, 64
  %v328 = vld [vmem:[%s327] sm:$0xff]
  %v329 = vld [vmem:[%s327 + $0x8] sm:$0xff]
  %v330 = vld [vmem:[%s327 + $0x10] sm:$0xff]
  %v331 = vld [vmem:[%s327 + $0x18] sm:$0xff]
  %332 = vmatprep.subr.mxu0 0.0
  %333 = vmatpush1.msra.mxu0 0.0
  %334 = vmatprep.subr.mxu0 0.0
  %335 = vmatpush1.msra.mxu0 0.0
  %336 = vmatprep.subr.mxu0 0.0
  %337 = vmatpush1.msra.mxu0 0.0
  %338 = vmatprep.subr.mxu0 0.0
  %339 = vmatpush1.msra.mxu0 0.0
  %340 = vmatprep.subr.mxu0 0.0
  %341 = vmatpush1.msra.mxu0 0.0
  %342 = vmatprep.subr.mxu0 0.0
  %343 = vmatpush1.msra.mxu0 0.0
  %344 = vmatprep.subr.mxu0 0.0
  %345 = vmatpush1.msra.mxu0 0.0
  %346 = vmatprep.subr.mxu0 0.0
  %347 = vmatpush1.msra.mxu0 0.0
  %348 = vmatprep.subr.mxu0 0.0
  %349 = vmatpush1.msra.mxu0 0.0
  %350 = vmatprep.subr.mxu0 0.0
  %351 = vmatpush1.msra.mxu0 0.0
  %352 = vmatprep.subr.mxu0 0.0
  %353 = vmatpush1.msra.mxu0 0.0
  %354 = vmatprep.subr.mxu0 0.0
  %355 = vmatpush1.msra.mxu0 0.0
  %356 = vmatprep.subr.mxu0 0.0
  %357 = vmatpush1.msra.mxu0 %v331
  %358 = vmatprep.subr.mxu0 0.0
  %359 = vmatpush1.msra.mxu0 %v330
  %360 = vmatprep.subr.mxu0 0.0
  %361 = vmatpush1.msra.mxu0 %v329
  %362 = vmatprep.subr.mxu0 0.0
  %363 = vmatpush1.msra.mxu0 %v328
  %364 = vmatprep.subr.mxu0 0.0
  %365 = vmatpush2.msra.mxu0 0.0
  %366 = vmatprep.subr.mxu0 0.0
  %367 = vmatpush2.msra.mxu0 0.0
  %368 = vmatprep.subr.mxu0 0.0
  %369 = vmatpush2.msra.mxu0 0.0
  %370 = vmatprep.subr.mxu0 0.0
  %371 = vmatpush2.msra.mxu0 0.0
  %372 = vmatprep.subr.mxu0 0.0
  %373 = vmatpush2.msra.mxu0 0.0
  %374 = vmatprep.subr.mxu0 0.0
  %375 = vmatpush2.msra.mxu0 0.0
  %376 = vmatprep.subr.mxu0 0.0
  %377 = vmatpush2.msra.mxu0 0.0
  %378 = vmatprep.subr.mxu0 0.0
  %379 = vmatpush2.msra.mxu0 0.0
  %380 = vmatprep.subr.mxu0 0.0
  %381 = vmatpush2.msra.mxu0 0.0
  %382 = vmatprep.subr.mxu0 0.0
  %383 = vmatpush2.msra.mxu0 0.0
  %384 = vmatprep.subr.mxu0 0.0
  %385 = vmatpush2.msra.mxu0 0.0
  %386 = vmatprep.subr.mxu0 0.0
  %387 = vmatpush2.msra.mxu0 0.0
  %388 = vmatprep.subr.mxu0 0.0
  %389 = vmatpush2.msra.mxu0 0.0
  %390 = vmatprep.subr.mxu0 0.0
  %391 = vmatpush2.msra.mxu0 0.0
  %392 = vmatprep.subr.mxu0 0.0
  %393 = vmatpush2.msra.mxu0 0.0
  %394 = vmatprep.subr.mxu0 0.0
  %395 = vmatpush2.msra.mxu0 0.0
  %396 = vmatprep.mubr.f32.mxu0 0.0
  %397 = vmatmul.mubr.f32.gmra.mxu0 %v167
  %v398 = vpop.f32.mrf.mxu0
  %v399 = vadd.f32 0.0, %v398
  %v400 = vpop.f32.mrf.mxu0
  %401 = vmatprep.mubr.f32.mxu0 0.0
  %402 = vmatmul.mubr.f32.gmra.mxu0 %v170
  %v403 = vpop.f32.mrf.mxu0
  %v404 = vadd.f32 0.0, %v403
  %v405 = vpop.f32.mrf.mxu0
  %406 = vdwg.mxu0
  %v408 = vsel %vm31, %v239, 0
  %v411 = vsel %vm31, %v244, 0
  %v414 = vsel %vm31, %v319, 0
  %v417 = vsel %vm31, %v324, 0
  %419 = vmatprep.subr.mxu0 0.0
  %420 = vmatpush1.xpose.msra.mxu0 0.0
  %421 = vmatprep.subr.mxu0 0.0
  %422 = vmatpush1.xpose.msra.mxu0 0.0
  %423 = vmatprep.subr.mxu0 0.0
  %424 = vmatpush1.xpose.msra.mxu0 0.0
  %425 = vmatprep.subr.mxu0 0.0
  %426 = vmatpush1.xpose.msra.mxu0 0.0
  %427 = vmatprep.subr.mxu0 0.0
  %428 = vmatpush1.xpose.msra.mxu0 0.0
  %429 = vmatprep.subr.mxu0 0.0
  %430 = vmatpush1.xpose.msra.mxu0 0.0
  %431 = vmatprep.subr.mxu0 0.0
  %432 = vmatpush1.xpose.msra.mxu0 0.0
  %433 = vmatprep.subr.mxu0 0.0
  %434 = vmatpush1.xpose.msra.mxu0 0.0
  %435 = vmatprep.subr.mxu0 0.0
  %436 = vmatpush1.xpose.msra.mxu0 0.0
  %437 = vmatprep.subr.mxu0 0.0
  %438 = vmatpush1.xpose.msra.mxu0 0.0
  %439 = vmatprep.subr.mxu0 0.0
  %440 = vmatpush1.xpose.msra.mxu0 0.0
  %441 = vmatprep.subr.mxu0 0.0
  %442 = vmatpush1.xpose.msra.mxu0 0.0
  %443 = vmatprep.subr.mxu0 0.0
  %444 = vmatpush1.xpose.msra.mxu0 0.0
  %445 = vmatprep.subr.mxu0 0.0
  %446 = vmatpush1.xpose.msra.mxu0 0.0
  %447 = vmatprep.subr.mxu0 0.0
  %448 = vmatpush1.xpose.msra.mxu0 %v417
  %449 = vmatprep.subr.mxu0 0.0
  %450 = vmatpush1.xpose.msra.mxu0 %v414
  %451 = vmatprep.subr.mxu0 0.0
  %452 = vmatpush2.xpose.msra.mxu0 0.0
  %453 = vmatprep.subr.mxu0 0.0
  %454 = vmatpush2.xpose.msra.mxu0 0.0
  %455 = vmatprep.subr.mxu0 0.0
  %456 = vmatpush2.xpose.msra.mxu0 0.0
  %457 = vmatprep.subr.mxu0 0.0
  %458 = vmatpush2.xpose.msra.mxu0 0.0
  %459 = vmatprep.subr.mxu0 0.0
  %460 = vmatpush2.xpose.msra.mxu0 0.0
  %461 = vmatprep.subr.mxu0 0.0
  %462 = vmatpush2.xpose.msra.mxu0 0.0
  %463 = vmatprep.subr.mxu0 0.0
  %464 = vmatpush2.xpose.msra.mxu0 0.0
  %465 = vmatprep.subr.mxu0 0.0
  %466 = vmatpush2.xpose.msra.mxu0 0.0
  %467 = vmatprep.subr.mxu0 0.0
  %468 = vmatpush2.xpose.msra.mxu0 0.0
  %469 = vmatprep.subr.mxu0 0.0
  %470 = vmatpush2.xpose.msra.mxu0 0.0
  %471 = vmatprep.subr.mxu0 0.0
  %472 = vmatpush2.xpose.msra.mxu0 0.0
  %473 = vmatprep.subr.mxu0 0.0
  %474 = vmatpush2.xpose.msra.mxu0 0.0
  %475 = vmatprep.subr.mxu0 0.0
  %476 = vmatpush2.xpose.msra.mxu0 0.0
  %477 = vmatprep.subr.mxu0 0.0
  %478 = vmatpush2.xpose.msra.mxu0 0.0
  %479 = vmatprep.subr.mxu0 0.0
  %480 = vmatpush2.xpose.msra.mxu0 0.0
  %481 = vmatprep.subr.mxu0 0.0
  %482 = vmatpush2.xpose.msra.mxu0 0.0
  %483 = vmatprep.mubr.f32.mxu0 0.0
  %484 = vmatmul.mubr.f32.gmra.mxu0 %v408
  %v485 = vpop.f32.mrf.mxu0
  %v486 = vadd.f32 %v121, %v485
  %v487 = vpop.f32.mrf.mxu0
  %488 = vmatprep.mubr.f32.mxu0 0.0
  %489 = vmatmul.mubr.f32.gmra.mxu0 %v411
  %v490 = vpop.f32.mrf.mxu0
  %v491 = vadd.f32 %v122, %v490
  %v492 = vpop.f32.mrf.mxu0
  %493 = vdwg.mxu0
  %vm494 = vcmask 130048
  %v495 = vsel %vm494, %v486, -inf
  %496 = vmax.xlane.f32.xlu0 %v495
  %v497 = vpop.xlane.xlu0 %496
  %v498 = vsel %vm494, %v491, -inf
  %499 = vmax.xlane.f32.xlu0 %v498
  %v500 = vpop.xlane.xlu0 %499
  %v501 = vsub.f32 %v486, %v497
  %v502 = vsub.f32 %v491, %v500
  %v503 = vmul.f32 %v501, 1.442695
  %v504 = vpow.pop %v503
  %v505 = vmul.f32 %v502, 1.442695
  %v506 = vpow.pop %v505
  %v507 = vsel %vm494, %v504, 0.0
  %508 = vadd.xlane.f32.xlu0 %v507
  %v509 = vpop.xlane.xlu0 %508
  %v510 = vsel %vm494, %v506, 0.0
  %511 = vadd.xlane.f32.xlu0 %v510
  %v512 = vpop.xlane.xlu0 %511
  %v513 = vrcp.pop %v509
  %v514 = vrcp.pop %v512
  %v515 = vmul.f32 %v504, %v513
  %v516 = vmul.f32 %v506, %v514
  %v518 = vsel %vm494, %v515, 0
  %v521 = vsel %vm494, %v516, 0
  %523 = vmatprep.subr.mxu0 0.0
  %524 = vmatpush1.msra.mxu0 0.0
  %525 = vmatprep.subr.mxu0 0.0
  %526 = vmatpush1.msra.mxu0 0.0
  %527 = vmatprep.subr.mxu0 0.0
  %528 = vmatpush1.msra.mxu0 0.0
  %529 = vmatprep.subr.mxu0 0.0
  %530 = vmatpush1.msra.mxu0 0.0
  %531 = vmatprep.subr.mxu0 0.0
  %532 = vmatpush1.msra.mxu0 0.0
  %533 = vmatprep.subr.mxu0 0.0
  %534 = vmatpush1.msra.mxu0 0.0
  %535 = vmatprep.subr.mxu0 0.0
  %536 = vmatpush1.msra.mxu0 0.0
  %537 = vmatprep.subr.mxu0 0.0
  %538 = vmatpush1.msra.mxu0 0.0
  %539 = vmatprep.subr.mxu0 0.0
  %540 = vmatpush1.msra.mxu0 0.0
  %541 = vmatprep.subr.mxu0 0.0
  %542 = vmatpush1.msra.mxu0 0.0
  %543 = vmatprep.subr.mxu0 0.0
  %544 = vmatpush1.msra.mxu0 0.0
  %545 = vmatprep.subr.mxu0 0.0
  %546 = vmatpush1.msra.mxu0 0.0
  %547 = vmatprep.subr.mxu0 0.0
  %548 = vmatpush1.msra.mxu0 0.0
  %549 = vmatprep.subr.mxu0 0.0
  %550 = vmatpush1.msra.mxu0 0.0
  %551 = vmatprep.subr.mxu0 0.0
  %552 = vmatpush1.msra.mxu0 %v404
  %553 = vmatprep.subr.mxu0 0.0
  %554 = vmatpush1.msra.mxu0 %v399
  %555 = vmatprep.subr.mxu0 0.0
  %556 = vmatpush2.msra.mxu0 0.0
  %557 = vmatprep.subr.mxu0 0.0
  %558 = vmatpush2.msra.mxu0 0.0
  %559 = vmatprep.subr.mxu0 0.0
  %560 = vmatpush2.msra.mxu0 0.0
  %561 = vmatprep.subr.mxu0 0.0
  %562 = vmatpush2.msra.mxu0 0.0
  %563 = vmatprep.subr.mxu0 0.0
  %564 = vmatpush2.msra.mxu0 0.0
  %565 = vmatprep.subr.mxu0 0.0
  %566 = vmatpush2.msra.mxu0 0.0
  %567 = vmatprep.subr.mxu0 0.0
  %568 = vmatpush2.msra.mxu0 0.0
  %569 = vmatprep.subr.mxu0 0.0
  %570 = vmatpush2.msra.mxu0 0.0
  %571 = vmatprep.subr.mxu0 0.0
  %572 = vmatpush2.msra.mxu0 0.0
  %573 = vmatprep.subr.mxu0 0.0
  %574 = vmatpush2.msra.mxu0 0.0
  %575 = vmatprep.subr.mxu0 0.0
  %576 = vmatpush2.msra.mxu0 0.0
  %577 = vmatprep.subr.mxu0 0.0
  %578 = vmatpush2.msra.mxu0 0.0
  %579 = vmatprep.subr.mxu0 0.0
  %580 = vmatpush2.msra.mxu0 0.0
  %581 = vmatprep.subr.mxu0 0.0
  %582 = vmatpush2.msra.mxu0 0.0
  %583 = vmatprep.subr.mxu0 0.0
  %584 = vmatpush2.msra.mxu0 0.0
  %585 = vmatprep.subr.mxu0 0.0
  %586 = vmatpush2.msra.mxu0 0.0
  %587 = vmatprep.mubr.f32.mxu0 0.0
  %588 = vmatmul.mubr.f32.gmra.mxu0 %v518
  %v589 = vpop.f32.mrf.mxu0
  %v590 = vadd.f32 0.0, %v589
  %v591 = vpop.f32.mrf.mxu0
  %592 = vmatprep.mubr.f32.mxu0 0.0
  %593 = vmatmul.mubr.f32.gmra.mxu0 %v521
  %v594 = vpop.f32.mrf.mxu0
  %v595 = vadd.f32 0.0, %v594
  %v596 = vpop.f32.mrf.mxu0
  %597 = vdwg.mxu0
  %s598 = scalar_lea.vmem %s1, 96
  %v599 = vld [vmem:[%s598] sm:$0xff]
  %v600 = vld [vmem:[%s598 + $0x8] sm:$0xff]
  %v601 = vld [vmem:[%s598 + $0x10] sm:$0xff]
  %v602 = vld [vmem:[%s598 + $0x18] sm:$0xff]
  %s603 = scalar_lea.vmem %s1, 128
  %v604 = vld [vmem:[%s603] sm:$0xff]
  %v605 = vld [vmem:[%s603 + $0x8] sm:$0xff]
  %v606 = vld [vmem:[%s603 + $0x10] sm:$0xff]
  %v607 = vld [vmem:[%s603 + $0x18] sm:$0xff]
  %608 = vmatprep.subr.mxu0 0.0
  %609 = vmatpush1.msra.mxu0 0.0
  %610 = vmatprep.subr.mxu0 0.0
  %611 = vmatpush1.msra.mxu0 0.0
  %612 = vmatprep.subr.mxu0 0.0
  %613 = vmatpush1.msra.mxu0 0.0
  %614 = vmatprep.subr.mxu0 0.0
  %615 = vmatpush1.msra.mxu0 0.0
  %616 = vmatprep.subr.mxu0 0.0
  %617 = vmatpush1.msra.mxu0 0.0
  %618 = vmatprep.subr.mxu0 0.0
  %619 = vmatpush1.msra.mxu0 0.0
  %620 = vmatprep.subr.mxu0 0.0
  %621 = vmatpush1.msra.mxu0 0.0
  %622 = vmatprep.subr.mxu0 0.0
  %623 = vmatpush1.msra.mxu0 0.0
  %624 = vmatprep.subr.mxu0 0.0
  %625 = vmatpush1.msra.mxu0 0.0
  %626 = vmatprep.subr.mxu0 0.0
  %627 = vmatpush1.msra.mxu0 0.0
  %628 = vmatprep.subr.mxu0 0.0
  %629 = vmatpush1.msra.mxu0 0.0
  %630 = vmatprep.subr.mxu0 0.0
  %631 = vmatpush1.msra.mxu0 0.0
  %632 = vmatprep.subr.mxu0 0.0
  %633 = vmatpush1.msra.mxu0 %v607
  %634 = vmatprep.subr.mxu0 0.0
  %635 = vmatpush1.msra.mxu0 %v606
  %636 = vmatprep.subr.mxu0 0.0
  %637 = vmatpush1.msra.mxu0 %v605
  %638 = vmatprep.subr.mxu0 0.0
  %639 = vmatpush1.msra.mxu0 %v604
  %640 = vmatprep.subr.mxu0 0.0
  %641 = vmatpush2.msra.mxu0 0.0
  %642 = vmatprep.subr.mxu0 0.0
  %643 = vmatpush2.msra.mxu0 0.0
  %644 = vmatprep.subr.mxu0 0.0
  %645 = vmatpush2.msra.mxu0 0.0
  %646 = vmatprep.subr.mxu0 0.0
  %647 = vmatpush2.msra.mxu0 0.0
  %648 = vmatprep.subr.mxu0 0.0
  %649 = vmatpush2.msra.mxu0 0.0
  %650 = vmatprep.subr.mxu0 0.0
  %651 = vmatpush2.msra.mxu0 0.0
  %652 = vmatprep.subr.mxu0 0.0
  %653 = vmatpush2.msra.mxu0 0.0
  %654 = vmatprep.subr.mxu0 0.0
  %655 = vmatpush2.msra.mxu0 0.0
  %656 = vmatprep.subr.mxu0 0.0
  %657 = vmatpush2.msra.mxu0 0.0
  %658 = vmatprep.subr.mxu0 0.0
  %659 = vmatpush2.msra.mxu0 0.0
  %660 = vmatprep.subr.mxu0 0.0
  %661 = vmatpush2.msra.mxu0 0.0
  %662 = vmatprep.subr.mxu0 0.0
  %663 = vmatpush2.msra.mxu0 0.0
  %664 = vmatprep.subr.mxu0 0.0
  %665 = vmatpush2.msra.mxu0 0.0
  %666 = vmatprep.subr.mxu0 0.0
  %667 = vmatpush2.msra.mxu0 0.0
  %668 = vmatprep.subr.mxu0 0.0
  %669 = vmatpush2.msra.mxu0 0.0
  %670 = vmatprep.subr.mxu0 0.0
  %671 = vmatpush2.msra.mxu0 0.0
  %672 = vmatprep.mubr.f32.mxu0 0.0
  %673 = vmatmul.mubr.f32.gmra.mxu0 %v167
  %v674 = vpop.f32.mrf.mxu0
  %v675 = vadd.f32 0.0, %v674
  %v676 = vpop.f32.mrf.mxu0
  %677 = vmatprep.mubr.f32.mxu0 0.0
  %678 = vmatmul.mubr.f32.gmra.mxu0 %v170
  %v679 = vpop.f32.mrf.mxu0
  %v680 = vadd.f32 0.0, %v679
  %v681 = vpop.f32.mrf.mxu0
  %682 = vdwg.mxu0
  %s683 = scalar_lea.vmem %s1, 160
  %v684 = vld [vmem:[%s683] sm:$0xff]
  %v685 = vld [vmem:[%s683 + $0x8] sm:$0xff]
  %v686 = vld [vmem:[%s683 + $0x10] sm:$0xff]
  %v687 = vld [vmem:[%s683 + $0x18] sm:$0xff]
  %688 = vmatprep.subr.mxu0 0.0
  %689 = vmatpush1.msra.mxu0 0.0
  %690 = vmatprep.subr.mxu0 0.0
  %691 = vmatpush1.msra.mxu0 0.0
  %692 = vmatprep.subr.mxu0 0.0
  %693 = vmatpush1.msra.mxu0 0.0
  %694 = vmatprep.subr.mxu0 0.0
  %695 = vmatpush1.msra.mxu0 0.0
  %696 = vmatprep.subr.mxu0 0.0
  %697 = vmatpush1.msra.mxu0 0.0
  %698 = vmatprep.subr.mxu0 0.0
  %699 = vmatpush1.msra.mxu0 0.0
  %700 = vmatprep.subr.mxu0 0.0
  %701 = vmatpush1.msra.mxu0 0.0
  %702 = vmatprep.subr.mxu0 0.0
  %703 = vmatpush1.msra.mxu0 0.0
  %704 = vmatprep.subr.mxu0 0.0
  %705 = vmatpush1.msra.mxu0 0.0
  %706 = vmatprep.subr.mxu0 0.0
  %707 = vmatpush1.msra.mxu0 0.0
  %708 = vmatprep.subr.mxu0 0.0
  %709 = vmatpush1.msra.mxu0 0.0
  %710 = vmatprep.subr.mxu0 0.0
  %711 = vmatpush1.msra.mxu0 0.0
  %712 = vmatprep.subr.mxu0 0.0
  %713 = vmatpush1.msra.mxu0 %v687
  %714 = vmatprep.subr.mxu0 0.0
  %715 = vmatpush1.msra.mxu0 %v686
  %716 = vmatprep.subr.mxu0 0.0
  %717 = vmatpush1.msra.mxu0 %v685
  %718 = vmatprep.subr.mxu0 0.0
  %719 = vmatpush1.msra.mxu0 %v684
  %720 = vmatprep.subr.mxu0 0.0
  %721 = vmatpush2.msra.mxu0 0.0
  %722 = vmatprep.subr.mxu0 0.0
  %723 = vmatpush2.msra.mxu0 0.0
  %724 = vmatprep.subr.mxu0 0.0
  %725 = vmatpush2.msra.mxu0 0.0
  %726 = vmatprep.subr.mxu0 0.0
  %727 = vmatpush2.msra.mxu0 0.0
  %728 = vmatprep.subr.mxu0 0.0
  %729 = vmatpush2.msra.mxu0 0.0
  %730 = vmatprep.subr.mxu0 0.0
  %731 = vmatpush2.msra.mxu0 0.0
  %732 = vmatprep.subr.mxu0 0.0
  %733 = vmatpush2.msra.mxu0 0.0
  %734 = vmatprep.subr.mxu0 0.0
  %735 = vmatpush2.msra.mxu0 0.0
  %736 = vmatprep.subr.mxu0 0.0
  %737 = vmatpush2.msra.mxu0 0.0
  %738 = vmatprep.subr.mxu0 0.0
  %739 = vmatpush2.msra.mxu0 0.0
  %740 = vmatprep.subr.mxu0 0.0
  %741 = vmatpush2.msra.mxu0 0.0
  %742 = vmatprep.subr.mxu0 0.0
  %743 = vmatpush2.msra.mxu0 0.0
  %744 = vmatprep.subr.mxu0 0.0
  %745 = vmatpush2.msra.mxu0 0.0
  %746 = vmatprep.subr.mxu0 0.0
  %747 = vmatpush2.msra.mxu0 0.0
  %748 = vmatprep.subr.mxu0 0.0
  %749 = vmatpush2.msra.mxu0 0.0
  %750 = vmatprep.subr.mxu0 0.0
  %751 = vmatpush2.msra.mxu0 0.0
  %752 = vmatprep.mubr.f32.mxu0 0.0
  %753 = vmatmul.mubr.f32.gmra.mxu0 %v167
  %v754 = vpop.f32.mrf.mxu0
  %v755 = vadd.f32 0.0, %v754
  %v756 = vpop.f32.mrf.mxu0
  %757 = vmatprep.mubr.f32.mxu0 0.0
  %758 = vmatmul.mubr.f32.gmra.mxu0 %v170
  %v759 = vpop.f32.mrf.mxu0
  %v760 = vadd.f32 0.0, %v759
  %v761 = vpop.f32.mrf.mxu0
  %762 = vdwg.mxu0
  %s763 = scalar_lea.vmem %s1, 192
  %v764 = vld [vmem:[%s763] sm:$0xff]
  %v765 = vld [vmem:[%s763 + $0x8] sm:$0xff]
  %v766 = vld [vmem:[%s763 + $0x10] sm:$0xff]
  %v767 = vld [vmem:[%s763 + $0x18] sm:$0xff]
  %768 = vmatprep.subr.mxu0 0.0
  %769 = vmatpush1.msra.mxu0 0.0
  %770 = vmatprep.subr.mxu0 0.0
  %771 = vmatpush1.msra.mxu0 0.0
  %772 = vmatprep.subr.mxu0 0.0
  %773 = vmatpush1.msra.mxu0 0.0
  %774 = vmatprep.subr.mxu0 0.0
  %775 = vmatpush1.msra.mxu0 0.0
  %776 = vmatprep.subr.mxu0 0.0
  %777 = vmatpush1.msra.mxu0 0.0
  %778 = vmatprep.subr.mxu0 0.0
  %779 = vmatpush1.msra.mxu0 0.0
  %780 = vmatprep.subr.mxu0 0.0
  %781 = vmatpush1.msra.mxu0 0.0
  %782 = vmatprep.subr.mxu0 0.0
  %783 = vmatpush1.msra.mxu0 0.0
  %784 = vmatprep.subr.mxu0 0.0
  %785 = vmatpush1.msra.mxu0 0.0
  %786 = vmatprep.subr.mxu0 0.0
  %787 = vmatpush1.msra.mxu0 0.0
  %788 = vmatprep.subr.mxu0 0.0
  %789 = vmatpush1.msra.mxu0 0.0
  %790 = vmatprep.subr.mxu0 0.0
  %791 = vmatpush1.msra.mxu0 0.0
  %792 = vmatprep.subr.mxu0 0.0
  %793 = vmatpush1.msra.mxu0 %v767
  %794 = vmatprep.subr.mxu0 0.0
  %795 = vmatpush1.msra.mxu0 %v766
  %796 = vmatprep.subr.mxu0 0.0
  %797 = vmatpush1.msra.mxu0 %v765
  %798 = vmatprep.subr.mxu0 0.0
  %799 = vmatpush1.msra.mxu0 %v764
  %800 = vmatprep.subr.mxu0 0.0
  %801 = vmatpush2.msra.mxu0 0.0
  %802 = vmatprep.subr.mxu0 0.0
  %803 = vmatpush2.msra.mxu0 0.0
  %804 = vmatprep.subr.mxu0 0.0
  %805 = vmatpush2.msra.mxu0 0.0
  %806 = vmatprep.subr.mxu0 0.0
  %807 = vmatpush2.msra.mxu0 0.0
  %808 = vmatprep.subr.mxu0 0.0
  %809 = vmatpush2.msra.mxu0 0.0
  %810 = vmatprep.subr.mxu0 0.0
  %811 = vmatpush2.msra.mxu0 0.0
  %812 = vmatprep.subr.mxu0 0.0
  %813 = vmatpush2.msra.mxu0 0.0
  %814 = vmatprep.subr.mxu0 0.0
  %815 = vmatpush2.msra.mxu0 0.0
  %816 = vmatprep.subr.mxu0 0.0
  %817 = vmatpush2.msra.mxu0 0.0
  %818 = vmatprep.subr.mxu0 0.0
  %819 = vmatpush2.msra.mxu0 0.0
  %820 = vmatprep.subr.mxu0 0.0
  %821 = vmatpush2.msra.mxu0 0.0
  %822 = vmatprep.subr.mxu0 0.0
  %823 = vmatpush2.msra.mxu0 0.0
  %824 = vmatprep.subr.mxu0 0.0
  %825 = vmatpush2.msra.mxu0 0.0
  %826 = vmatprep.subr.mxu0 0.0
  %827 = vmatpush2.msra.mxu0 0.0
  %828 = vmatprep.subr.mxu0 0.0
  %829 = vmatpush2.msra.mxu0 0.0
  %830 = vmatprep.subr.mxu0 0.0
  %831 = vmatpush2.msra.mxu0 0.0
  %832 = vmatprep.mubr.f32.mxu0 0.0
  %833 = vmatmul.mubr.f32.gmra.mxu0 %v167
  %v834 = vpop.f32.mrf.mxu0
  %v835 = vadd.f32 0.0, %v834
  %v836 = vpop.f32.mrf.mxu0
  %837 = vmatprep.mubr.f32.mxu0 0.0
  %838 = vmatmul.mubr.f32.gmra.mxu0 %v170
  %v839 = vpop.f32.mrf.mxu0
  %v840 = vadd.f32 0.0, %v839
  %v841 = vpop.f32.mrf.mxu0
  %842 = vdwg.mxu0
  %v844 = vsel %vm31, %v675, 0
  %v847 = vsel %vm31, %v680, 0
  %v850 = vsel %vm31, %v755, 0
  %v853 = vsel %vm31, %v760, 0
  %855 = vmatprep.subr.mxu0 0.0
  %856 = vmatpush1.xpose.msra.mxu0 0.0
  %857 = vmatprep.subr.mxu0 0.0
  %858 = vmatpush1.xpose.msra.mxu0 0.0
  %859 = vmatprep.subr.mxu0 0.0
  %860 = vmatpush1.xpose.msra.mxu0 0.0
  %861 = vmatprep.subr.mxu0 0.0
  %862 = vmatpush1.xpose.msra.mxu0 0.0
  %863 = vmatprep.subr.mxu0 0.0
  %864 = vmatpush1.xpose.msra.mxu0 0.0
  %865 = vmatprep.subr.mxu0 0.0
  %866 = vmatpush1.xpose.msra.mxu0 0.0
  %867 = vmatprep.subr.mxu0 0.0
  %868 = vmatpush1.xpose.msra.mxu0 0.0
  %869 = vmatprep.subr.mxu0 0.0
  %870 = vmatpush1.xpose.msra.mxu0 0.0
  %871 = vmatprep.subr.mxu0 0.0
  %872 = vmatpush1.xpose.msra.mxu0 0.0
  %873 = vmatprep.subr.mxu0 0.0
  %874 = vmatpush1.xpose.msra.mxu0 0.0
  %875 = vmatprep.subr.mxu0 0.0
  %876 = vmatpush1.xpose.msra.mxu0 0.0
  %877 = vmatprep.subr.mxu0 0.0
  %878 = vmatpush1.xpose.msra.mxu0 0.0
  %879 = vmatprep.subr.mxu0 0.0
  %880 = vmatpush1.xpose.msra.mxu0 0.0
  %881 = vmatprep.subr.mxu0 0.0
  %882 = vmatpush1.xpose.msra.mxu0 0.0
  %883 = vmatprep.subr.mxu0 0.0
  %884 = vmatpush1.xpose.msra.mxu0 %v853
  %885 = vmatprep.subr.mxu0 0.0
  %886 = vmatpush1.xpose.msra.mxu0 %v850
  %887 = vmatprep.subr.mxu0 0.0
  %888 = vmatpush2.xpose.msra.mxu0 0.0
  %889 = vmatprep.subr.mxu0 0.0
  %890 = vmatpush2.xpose.msra.mxu0 0.0
  %891 = vmatprep.subr.mxu0 0.0
  %892 = vmatpush2.xpose.msra.mxu0 0.0
  %893 = vmatprep.subr.mxu0 0.0
  %894 = vmatpush2.xpose.msra.mxu0 0.0
  %895 = vmatprep.subr.mxu0 0.0
  %896 = vmatpush2.xpose.msra.mxu0 0.0
  %897 = vmatprep.subr.mxu0 0.0
  %898 = vmatpush2.xpose.msra.mxu0 0.0
  %899 = vmatprep.subr.mxu0 0.0
  %900 = vmatpush2.xpose.msra.mxu0 0.0
  %901 = vmatprep.subr.mxu0 0.0
  %902 = vmatpush2.xpose.msra.mxu0 0.0
  %903 = vmatprep.subr.mxu0 0.0
  %904 = vmatpush2.xpose.msra.mxu0 0.0
  %905 = vmatprep.subr.mxu0 0.0
  %906 = vmatpush2.xpose.msra.mxu0 0.0
  %907 = vmatprep.subr.mxu0 0.0
  %908 = vmatpush2.xpose.msra.mxu0 0.0
  %909 = vmatprep.subr.mxu0 0.0
  %910 = vmatpush2.xpose.msra.mxu0 0.0
  %911 = vmatprep.subr.mxu0 0.0
  %912 = vmatpush2.xpose.msra.mxu0 0.0
  %913 = vmatprep.subr.mxu0 0.0
  %914 = vmatpush2.xpose.msra.mxu0 0.0
  %915 = vmatprep.subr.mxu0 0.0
  %916 = vmatpush2.xpose.msra.mxu0 0.0
  %917 = vmatprep.subr.mxu0 0.0
  %918 = vmatpush2.xpose.msra.mxu0 0.0
  %919 = vmatprep.mubr.f32.mxu0 0.0
  %920 = vmatmul.mubr.f32.gmra.mxu0 %v844
  %v921 = vpop.f32.mrf.mxu0
  %v922 = vadd.f32 %v121, %v921
  %v923 = vpop.f32.mrf.mxu0
  %924 = vmatprep.mubr.f32.mxu0 0.0
  %925 = vmatmul.mubr.f32.gmra.mxu0 %v847
  %v926 = vpop.f32.mrf.mxu0
  %v927 = vadd.f32 %v122, %v926
  %v928 = vpop.f32.mrf.mxu0
  %929 = vdwg.mxu0
  %v930 = vsel %vm494, %v922, -inf
  %931 = vmax.xlane.f32.xlu0 %v930
  %v932 = vpop.xlane.xlu0 %931
  %v933 = vsel %vm494, %v927, -inf
  %934 = vmax.xlane.f32.xlu0 %v933
  %v935 = vpop.xlane.xlu0 %934
  %v936 = vsub.f32 %v922, %v932
  %v937 = vsub.f32 %v927, %v935
  %v938 = vmul.f32 %v936, 1.442695
  %v939 = vpow.pop %v938
  %v940 = vmul.f32 %v937, 1.442695
  %v941 = vpow.pop %v940
  %v942 = vsel %vm494, %v939, 0.0
  %943 = vadd.xlane.f32.xlu0 %v942
  %v944 = vpop.xlane.xlu0 %943
  %v945 = vsel %vm494, %v941, 0.0
  %946 = vadd.xlane.f32.xlu0 %v945
  %v947 = vpop.xlane.xlu0 %946
  %v948 = vrcp.pop %v944
  %v949 = vrcp.pop %v947
  %v950 = vmul.f32 %v939, %v948
  %v951 = vmul.f32 %v941, %v949
  %v953 = vsel %vm494, %v950, 0
  %v956 = vsel %vm494, %v951, 0
  %958 = vmatprep.subr.mxu0 0.0
  %959 = vmatpush1.msra.mxu0 0.0
  %960 = vmatprep.subr.mxu0 0.0
  %961 = vmatpush1.msra.mxu0 0.0
  %962 = vmatprep.subr.mxu0 0.0
  %963 = vmatpush1.msra.mxu0 0.0
  %964 = vmatprep.subr.mxu0 0.0
  %965 = vmatpush1.msra.mxu0 0.0
  %966 = vmatprep.subr.mxu0 0.0
  %967 = vmatpush1.msra.mxu0 0.0
  %968 = vmatprep.subr.mxu0 0.0
  %969 = vmatpush1.msra.mxu0 0.0
  %970 = vmatprep.subr.mxu0 0.0
  %971 = vmatpush1.msra.mxu0 0.0
  %972 = vmatprep.subr.mxu0 0.0
  %973 = vmatpush1.msra.mxu0 0.0
  %974 = vmatprep.subr.mxu0 0.0
  %975 = vmatpush1.msra.mxu0 0.0
  %976 = vmatprep.subr.mxu0 0.0
  %977 = vmatpush1.msra.mxu0 0.0
  %978 = vmatprep.subr.mxu0 0.0
  %979 = vmatpush1.msra.mxu0 0.0
  %980 = vmatprep.subr.mxu0 0.0
  %981 = vmatpush1.msra.mxu0 0.0
  %982 = vmatprep.subr.mxu0 0.0
  %983 = vmatpush1.msra.mxu0 0.0
  %984 = vmatprep.subr.mxu0 0.0
  %985 = vmatpush1.msra.mxu0 0.0
  %986 = vmatprep.subr.mxu0 0.0
  %987 = vmatpush1.msra.mxu0 %v840
  %988 = vmatprep.subr.mxu0 0.0
  %989 = vmatpush1.msra.mxu0 %v835
  %990 = vmatprep.subr.mxu0 0.0
  %991 = vmatpush2.msra.mxu0 0.0
  %992 = vmatprep.subr.mxu0 0.0
  %993 = vmatpush2.msra.mxu0 0.0
  %994 = vmatprep.subr.mxu0 0.0
  %995 = vmatpush2.msra.mxu0 0.0
  %996 = vmatprep.subr.mxu0 0.0
  %997 = vmatpush2.msra.mxu0 0.0
  %998 = vmatprep.subr.mxu0 0.0
  %999 = vmatpush2.msra.mxu0 0.0
  %1000 = vmatprep.subr.mxu0 0.0
  %1001 = vmatpush2.msra.mxu0 0.0
  %1002 = vmatprep.subr.mxu0 0.0
  %1003 = vmatpush2.msra.mxu0 0.0
  %1004 = vmatprep.subr.mxu0 0.0
  %1005 = vmatpush2.msra.mxu0 0.0
  %1006 = vmatprep.subr.mxu0 0.0
  %1007 = vmatpush2.msra.mxu0 0.0
  %1008 = vmatprep.subr.mxu0 0.0
  %1009 = vmatpush2.msra.mxu0 0.0
  %1010 = vmatprep.subr.mxu0 0.0
  %1011 = vmatpush2.msra.mxu0 0.0
  %1012 = vmatprep.subr.mxu0 0.0
  %1013 = vmatpush2.msra.mxu0 0.0
  %1014 = vmatprep.subr.mxu0 0.0
  %1015 = vmatpush2.msra.mxu0 0.0
  %1016 = vmatprep.subr.mxu0 0.0
  %1017 = vmatpush2.msra.mxu0 0.0
  %1018 = vmatprep.subr.mxu0 0.0
  %1019 = vmatpush2.msra.mxu0 0.0
  %1020 = vmatprep.subr.mxu0 0.0
  %1021 = vmatpush2.msra.mxu0 0.0
  %1022 = vmatprep.mubr.f32.mxu0 0.0
  %1023 = vmatmul.mubr.f32.gmra.mxu0 %v953
  %v1024 = vpop.f32.mrf.mxu0
  %v1025 = vadd.f32 0.0, %v1024
  %v1026 = vpop.f32.mrf.mxu0
  %1027 = vmatprep.mubr.f32.mxu0 0.0
  %1028 = vmatmul.mubr.f32.gmra.mxu0 %v956
  %v1029 = vpop.f32.mrf.mxu0
  %v1030 = vadd.f32 0.0, %v1029
  %v1031 = vpop.f32.mrf.mxu0
  %1032 = vdwg.mxu0
  %s1033 = scalar_lea.vmem %s1, 224
  %v1034 = vld [vmem:[%s1033] sm:$0xff]
  %v1035 = vld [vmem:[%s1033 + $0x8] sm:$0xff]
  %v1036 = vld [vmem:[%s1033 + $0x10] sm:$0xff]
  %v1037 = vld [vmem:[%s1033 + $0x18] sm:$0xff]
  %v1039 = vsel %vm31, %v1025, 0
  %v1042 = vsel %vm31, %v1030, 0
  %1044 = vmatprep.subr.mxu0 0.0
  %1045 = vmatpush1.msra.mxu0 0.0
  %1046 = vmatprep.subr.mxu0 0.0
  %1047 = vmatpush1.msra.mxu0 0.0
  %1048 = vmatprep.subr.mxu0 0.0
  %1049 = vmatpush1.msra.mxu0 0.0
  %1050 = vmatprep.subr.mxu0 0.0
  %1051 = vmatpush1.msra.mxu0 0.0
  %1052 = vmatprep.subr.mxu0 0.0
  %1053 = vmatpush1.msra.mxu0 0.0
  %1054 = vmatprep.subr.mxu0 0.0
  %1055 = vmatpush1.msra.mxu0 0.0
  %1056 = vmatprep.subr.mxu0 0.0
  %1057 = vmatpush1.msra.mxu0 0.0
  %1058 = vmatprep.subr.mxu0 0.0
  %1059 = vmatpush1.msra.mxu0 0.0
  %1060 = vmatprep.subr.mxu0 0.0
  %1061 = vmatpush1.msra.mxu0 0.0
  %1062 = vmatprep.subr.mxu0 0.0
  %1063 = vmatpush1.msra.mxu0 0.0
  %1064 = vmatprep.subr.mxu0 0.0
  %1065 = vmatpush1.msra.mxu0 0.0
  %1066 = vmatprep.subr.mxu0 0.0
  %1067 = vmatpush1.msra.mxu0 0.0
  %1068 = vmatprep.subr.mxu0 0.0
  %1069 = vmatpush1.msra.mxu0 %v1037
  %1070 = vmatprep.subr.mxu0 0.0
  %1071 = vmatpush1.msra.mxu0 %v1036
  %1072 = vmatprep.subr.mxu0 0.0
  %1073 = vmatpush1.msra.mxu0 %v1035
  %1074 = vmatprep.subr.mxu0 0.0
  %1075 = vmatpush1.msra.mxu0 %v1034
  %1076 = vmatprep.subr.mxu0 0.0
  %1077 = vmatpush2.msra.mxu0 0.0
  %1078 = vmatprep.subr.mxu0 0.0
  %1079 = vmatpush2.msra.mxu0 0.0
  %1080 = vmatprep.subr.mxu0 0.0
  %1081 = vmatpush2.msra.mxu0 0.0
  %1082 = vmatprep.subr.mxu0 0.0
  %1083 = vmatpush2.msra.mxu0 0.0
  %1084 = vmatprep.subr.mxu0 0.0
  %1085 = vmatpush2.msra.mxu0 0.0
  %1086 = vmatprep.subr.mxu0 0.0
  %1087 = vmatpush2.msra.mxu0 0.0
  %1088 = vmatprep.subr.mxu0 0.0
  %1089 = vmatpush2.msra.mxu0 0.0
  %1090 = vmatprep.subr.mxu0 0.0
  %1091 = vmatpush2.msra.mxu0 0.0
  %1092 = vmatprep.subr.mxu0 0.0
  %1093 = vmatpush2.msra.mxu0 0.0
  %1094 = vmatprep.subr.mxu0 0.0
  %1095 = vmatpush2.msra.mxu0 0.0
  %1096 = vmatprep.subr.mxu0 0.0
  %1097 = vmatpush2.msra.mxu0 0.0
  %1098 = vmatprep.subr.mxu0 0.0
  %1099 = vmatpush2.msra.mxu0 0.0
  %1100 = vmatprep.subr.mxu0 0.0
  %1101 = vmatpush2.msra.mxu0 0.0
  %1102 = vmatprep.subr.mxu0 0.0
  %1103 = vmatpush2.msra.mxu0 0.0
  %1104 = vmatprep.subr.mxu0 0.0
  %1105 = vmatpush2.msra.mxu0 0.0
  %1106 = vmatprep.subr.mxu0 0.0
  %1107 = vmatpush2.msra.mxu0 0.0
  %1108 = vmatprep.mubr.f32.mxu0 0.0
  %1109 = vmatmul.mubr.f32.gmra.mxu0 %v1039
  %v1110 = vpop.f32.mrf.mxu0
  %v1111 = vadd.f32 0.0, %v1110
  %v1112 = vpop.f32.mrf.mxu0
  %1113 = vmatprep.mubr.f32.mxu0 0.0
  %1114 = vmatmul.mubr.f32.gmra.mxu0 %v1042
  %v1115 = vpop.f32.mrf.mxu0
  %v1116 = vadd.f32 0.0, %v1115
  %v1117 = vpop.f32.mrf.mxu0
  %1118 = vdwg.mxu0
  %v1120 = vsel %vm31, %v590, 0
  %v1123 = vsel %vm31, %v595, 0
  %1125 = vmatprep.subr.mxu0 0.0
  %1126 = vmatpush1.msra.mxu0 0.0
  %1127 = vmatprep.subr.mxu0 0.0
  %1128 = vmatpush1.msra.mxu0 0.0
  %1129 = vmatprep.subr.mxu0 0.0
  %1130 = vmatpush1.msra.mxu0 0.0
  %1131 = vmatprep.subr.mxu0 0.0
  %1132 = vmatpush1.msra.mxu0 0.0
  %1133 = vmatprep.subr.mxu0 0.0
  %1134 = vmatpush1.msra.mxu0 0.0
  %1135 = vmatprep.subr.mxu0 0.0
  %1136 = vmatpush1.msra.mxu0 0.0
  %1137 = vmatprep.subr.mxu0 0.0
  %1138 = vmatpush1.msra.mxu0 0.0
  %1139 = vmatprep.subr.mxu0 0.0
  %1140 = vmatpush1.msra.mxu0 0.0
  %1141 = vmatprep.subr.mxu0 0.0
  %1142 = vmatpush1.msra.mxu0 0.0
  %1143 = vmatprep.subr.mxu0 0.0
  %1144 = vmatpush1.msra.mxu0 0.0
  %1145 = vmatprep.subr.mxu0 0.0
  %1146 = vmatpush1.msra.mxu0 0.0
  %1147 = vmatprep.subr.mxu0 0.0
  %1148 = vmatpush1.msra.mxu0 0.0
  %1149 = vmatprep.subr.mxu0 0.0
  %1150 = vmatpush1.msra.mxu0 %v602
  %1151 = vmatprep.subr.mxu0 0.0
  %1152 = vmatpush1.msra.mxu0 %v601
  %1153 = vmatprep.subr.mxu0 0.0
  %1154 = vmatpush1.msra.mxu0 %v600
  %1155 = vmatprep.subr.mxu0 0.0
  %1156 = vmatpush1.msra.mxu0 %v599
  %1157 = vmatprep.subr.mxu0 0.0
  %1158 = vmatpush2.msra.mxu0 0.0
  %1159 = vmatprep.subr.mxu0 0.0
  %1160 = vmatpush2.msra.mxu0 0.0
  %1161 = vmatprep.subr.mxu0 0.0
  %1162 = vmatpush2.msra.mxu0 0.0
  %1163 = vmatprep.subr.mxu0 0.0
  %1164 = vmatpush2.msra.mxu0 0.0
  %1165 = vmatprep.subr.mxu0 0.0
  %1166 = vmatpush2.msra.mxu0 0.0
  %1167 = vmatprep.subr.mxu0 0.0
  %1168 = vmatpush2.msra.mxu0 0.0
  %1169 = vmatprep.subr.mxu0 0.0
  %1170 = vmatpush2.msra.mxu0 0.0
  %1171 = vmatprep.subr.mxu0 0.0
  %1172 = vmatpush2.msra.mxu0 0.0
  %1173 = vmatprep.subr.mxu0 0.0
  %1174 = vmatpush2.msra.mxu0 0.0
  %1175 = vmatprep.subr.mxu0 0.0
  %1176 = vmatpush2.msra.mxu0 0.0
  %1177 = vmatprep.subr.mxu0 0.0
  %1178 = vmatpush2.msra.mxu0 0.0
  %1179 = vmatprep.subr.mxu0 0.0
  %1180 = vmatpush2.msra.mxu0 0.0
  %1181 = vmatprep.subr.mxu0 0.0
  %1182 = vmatpush2.msra.mxu0 0.0
  %1183 = vmatprep.subr.mxu0 0.0
  %1184 = vmatpush2.msra.mxu0 0.0
  %1185 = vmatprep.subr.mxu0 0.0
  %1186 = vmatpush2.msra.mxu0 0.0
  %1187 = vmatprep.subr.mxu0 0.0
  %1188 = vmatpush2.msra.mxu0 0.0
  %1189 = vmatprep.mubr.f32.mxu0 0.0
  %1190 = vmatmul.mubr.f32.gmra.mxu0 %v1120
  %v1191 = vpop.f32.mrf.mxu0
  %v1192 = vadd.f32 %v1111, %v1191
  %v1193 = vpop.f32.mrf.mxu0
  %1194 = vmatprep.mubr.f32.mxu0 0.0
  %1195 = vmatmul.mubr.f32.gmra.mxu0 %v1123
  %v1196 = vpop.f32.mrf.mxu0
  %v1197 = vadd.f32 %v1116, %v1196
  %v1198 = vpop.f32.mrf.mxu0
  %1199 = vdwg.mxu0
  %v1200 = vadd.f32 %v23, %v1192
  %v1201 = vadd.f32 %v24, %v1197
  %v1202 = vsel %vm31, %v1200, 0.0
  %1203 = vadd.xlane.f32.xlu0 %v1202
  %v1204 = vpop.xlane.xlu0 %1203
  %v1205 = vsel %vm31, %v1201, 0.0
  %1206 = vadd.xlane.f32.xlu0 %v1205
  %v1207 = vpop.xlane.xlu0 %1206
  %v1208 = vmul.f32 %v1204, %v129
  %v1209 = vmul.f32 %v1207, %v129
  %v1210 = vsub.f32 %v1200, %v1208
  %v1211 = vsub.f32 %v1201, %v1209
  %v1212 = vmul.f32 %v1210, %v1210
  %v1213 = vmul.f32 %v1211, %v1211
  %v1214 = vsel %vm31, %v1212, 0.0
  %1215 = vadd.xlane.f32.xlu0 %v1214
  %v1216 = vpop.xlane.xlu0 %1215
  %v1217 = vsel %vm31, %v1213, 0.0
  %1218 = vadd.xlane.f32.xlu0 %v1217
  %v1219 = vpop.xlane.xlu0 %1218
  %v1220 = vmul.f32 %v1216, %v129
  %v1221 = vmul.f32 %v1219, %v129
  %v1222 = vadd.f32 %v1220, 1e-05
  %v1223 = vadd.f32 %v1221, 1e-05
  %v1224 = vrsqrt.pop %v1222
  %v1225 = vrsqrt.pop %v1223
  %v1226 = vmul.f32 %v1210, %v1224
  %v1227 = vmul.f32 %v1211, %v1225
  %v1228 = vlaneseq
  %v1229 = vshrl.u32 %v1228, 7
  %v1230 = vsub.s32 2, %v1229
  %v1231 = vrot.slane %v20, %v1230
  %v1232 = vmul.f32 %v1226, %v1231
  %v1233 = vmul.f32 %v1227, %v1231
  %v1234 = vlaneseq
  %v1235 = vshrl.u32 %v1234, 7
  %v1236 = vsub.s32 3, %v1235
  %v1237 = vrot.slane %v20, %v1236
  %v1238 = vadd.f32 %v1232, %v1237
  %v1239 = vadd.f32 %v1233, %v1237
  %s1240 = scalar_lea.vmem %s1, 512
  %v1241 = vld [vmem:[%s1240] sm:$0xff]
  %v1242 = vld [vmem:[%s1240 + $0x8] sm:$0xff]
  %v1243 = vld [vmem:[%s1240 + $0x10] sm:$0xff]
  %v1244 = vld [vmem:[%s1240 + $0x18] sm:$0xff]
  %v1245 = vlaneseq
  %v1246 = vshrl.u32 %v1245, 7
  %v1247 = vsub.s32 4, %v1246
  %v1248 = vrot.slane %v20, %v1247
  %v1250 = vsel %vm31, %v1238, 0
  %v1253 = vsel %vm31, %v1239, 0
  %1255 = vmatprep.subr.mxu0 0.0
  %1256 = vmatpush1.msra.mxu0 0.0
  %1257 = vmatprep.subr.mxu0 0.0
  %1258 = vmatpush1.msra.mxu0 0.0
  %1259 = vmatprep.subr.mxu0 0.0
  %1260 = vmatpush1.msra.mxu0 0.0
  %1261 = vmatprep.subr.mxu0 0.0
  %1262 = vmatpush1.msra.mxu0 0.0
  %1263 = vmatprep.subr.mxu0 0.0
  %1264 = vmatpush1.msra.mxu0 0.0
  %1265 = vmatprep.subr.mxu0 0.0
  %1266 = vmatpush1.msra.mxu0 0.0
  %1267 = vmatprep.subr.mxu0 0.0
  %1268 = vmatpush1.msra.mxu0 0.0
  %1269 = vmatprep.subr.mxu0 0.0
  %1270 = vmatpush1.msra.mxu0 0.0
  %1271 = vmatprep.subr.mxu0 0.0
  %1272 = vmatpush1.msra.mxu0 0.0
  %1273 = vmatprep.subr.mxu0 0.0
  %1274 = vmatpush1.msra.mxu0 0.0
  %1275 = vmatprep.subr.mxu0 0.0
  %1276 = vmatpush1.msra.mxu0 0.0
  %1277 = vmatprep.subr.mxu0 0.0
  %1278 = vmatpush1.msra.mxu0 0.0
  %1279 = vmatprep.subr.mxu0 0.0
  %1280 = vmatpush1.msra.mxu0 %v1244
  %1281 = vmatprep.subr.mxu0 0.0
  %1282 = vmatpush1.msra.mxu0 %v1243
  %1283 = vmatprep.subr.mxu0 0.0
  %1284 = vmatpush1.msra.mxu0 %v1242
  %1285 = vmatprep.subr.mxu0 0.0
  %1286 = vmatpush1.msra.mxu0 %v1241
  %1287 = vmatprep.subr.mxu0 0.0
  %1288 = vmatpush2.msra.mxu0 0.0
  %1289 = vmatprep.subr.mxu0 0.0
  %1290 = vmatpush2.msra.mxu0 0.0
  %1291 = vmatprep.subr.mxu0 0.0
  %1292 = vmatpush2.msra.mxu0 0.0
  %1293 = vmatprep.subr.mxu0 0.0
  %1294 = vmatpush2.msra.mxu0 0.0
  %1295 = vmatprep.subr.mxu0 0.0
  %1296 = vmatpush2.msra.mxu0 0.0
  %1297 = vmatprep.subr.mxu0 0.0
  %1298 = vmatpush2.msra.mxu0 0.0
  %1299 = vmatprep.subr.mxu0 0.0
  %1300 = vmatpush2.msra.mxu0 0.0
  %1301 = vmatprep.subr.mxu0 0.0
  %1302 = vmatpush2.msra.mxu0 0.0
  %1303 = vmatprep.subr.mxu0 0.0
  %1304 = vmatpush2.msra.mxu0 0.0
  %1305 = vmatprep.subr.mxu0 0.0
  %1306 = vmatpush2.msra.mxu0 0.0
  %1307 = vmatprep.subr.mxu0 0.0
  %1308 = vmatpush2.msra.mxu0 0.0
  %1309 = vmatprep.subr.mxu0 0.0
  %1310 = vmatpush2.msra.mxu0 0.0
  %1311 = vmatprep.subr.mxu0 0.0
  %1312 = vmatpush2.msra.mxu0 0.0
  %1313 = vmatprep.subr.mxu0 0.0
  %1314 = vmatpush2.msra.mxu0 0.0
  %1315 = vmatprep.subr.mxu0 0.0
  %1316 = vmatpush2.msra.mxu0 0.0
  %1317 = vmatprep.subr.mxu0 0.0
  %1318 = vmatpush2.msra.mxu0 0.0
  %1319 = vmatprep.mubr.f32.mxu0 0.0
  %1320 = vmatmul.mubr.f32.gmra.mxu0 %v1250
  %v1321 = vpop.f32.mrf.mxu0
  %v1322 = vadd.f32 %v1248, %v1321
  %v1323 = vpop.f32.mrf.mxu0
  %1324 = vmatprep.mubr.f32.mxu0 0.0
  %1325 = vmatmul.mubr.f32.gmra.mxu0 %v1253
  %v1326 = vpop.f32.mrf.mxu0
  %v1327 = vadd.f32 %v1248, %v1326
  %v1328 = vpop.f32.mrf.mxu0
  %1329 = vdwg.mxu0
  %v1330 = vmax.f32 %v1322, 0.0
  %v1331 = vmax.f32 %v1327, 0.0
  %s1332 = scalar_lea.vmem %s1, 544
  %v1333 = vld [vmem:[%s1332] sm:$0xff]
  %v1334 = vld [vmem:[%s1332 + $0x8] sm:$0xff]
  %v1335 = vld [vmem:[%s1332 + $0x10] sm:$0xff]
  %v1336 = vld [vmem:[%s1332 + $0x18] sm:$0xff]
  %v1337 = vlaneseq
  %v1338 = vshrl.u32 %v1337, 7
  %v1339 = vsub.s32 5, %v1338
  %v1340 = vrot.slane %v20, %v1339
  %1341 = vmatprep.subr.mxu0 0.0
  %1342 = vmatpush1.msra.mxu0 0.0
  %1343 = vmatprep.subr.mxu0 0.0
  %1344 = vmatpush1.msra.mxu0 0.0
  %1345 = vmatprep.subr.mxu0 0.0
  %1346 = vmatpush1.msra.mxu0 0.0
  %1347 = vmatprep.subr.mxu0 0.0
  %1348 = vmatpush1.msra.mxu0 0.0
  %1349 = vmatprep.subr.mxu0 0.0
  %1350 = vmatpush1.msra.mxu0 0.0
  %1351 = vmatprep.subr.mxu0 0.0
  %1352 = vmatpush1.msra.mxu0 0.0
  %1353 = vmatprep.subr.mxu0 0.0
  %1354 = vmatpush1.msra.mxu0 0.0
  %1355 = vmatprep.subr.mxu0 0.0
  %1356 = vmatpush1.msra.mxu0 0.0
  %1357 = vmatprep.subr.mxu0 0.0
  %1358 = vmatpush1.msra.mxu0 0.0
  %1359 = vmatprep.subr.mxu0 0.0
  %1360 = vmatpush1.msra.mxu0 0.0
  %1361 = vmatprep.subr.mxu0 0.0
  %1362 = vmatpush1.msra.mxu0 0.0
  %1363 = vmatprep.subr.mxu0 0.0
  %1364 = vmatpush1.msra.mxu0 0.0
  %1365 = vmatprep.subr.mxu0 0.0
  %1366 = vmatpush1.msra.mxu0 %v1336
  %1367 = vmatprep.subr.mxu0 0.0
  %1368 = vmatpush1.msra.mxu0 %v1335
  %1369 = vmatprep.subr.mxu0 0.0
  %1370 = vmatpush1.msra.mxu0 %v1334
  %1371 = vmatprep.subr.mxu0 0.0
  %1372 = vmatpush1.msra.mxu0 %v1333
  %1373 = vmatprep.subr.mxu0 0.0
  %1374 = vmatpush2.msra.mxu0 0.0
  %1375 = vmatprep.subr.mxu0 0.0
  %1376 = vmatpush2.msra.mxu0 0.0
  %1377 = vmatprep.subr.mxu0 0.0
  %1378 = vmatpush2.msra.mxu0 0.0
  %1379 = vmatprep.subr.mxu0 0.0
  %1380 = vmatpush2.msra.mxu0 0.0
  %1381 = vmatprep.subr.mxu0 0.0
  %1382 = vmatpush2.msra.mxu0 0.0
  %1383 = vmatprep.subr.mxu0 0.0
  %1384 = vmatpush2.msra.mxu0 0.0
  %1385 = vmatprep.subr.mxu0 0.0
  %1386 = vmatpush2.msra.mxu0 0.0
  %1387 = vmatprep.subr.mxu0 0.0
  %1388 = vmatpush2.msra.mxu0 0.0
  %1389 = vmatprep.subr.mxu0 0.0
  %1390 = vmatpush2.msra.mxu0 0.0
  %1391 = vmatprep.subr.mxu0 0.0
  %1392 = vmatpush2.msra.mxu0 0.0
  %1393 = vmatprep.subr.mxu0 0.0
  %1394 = vmatpush2.msra.mxu0 0.0
  %1395 = vmatprep.subr.mxu0 0.0
  %1396 = vmatpush2.msra.mxu0 0.0
  %1397 = vmatprep.subr.mxu0 0.0
  %1398 = vmatpush2.msra.mxu0 0.0
  %1399 = vmatprep.subr.mxu0 0.0
  %1400 = vmatpush2.msra.mxu0 0.0
  %1401 = vmatprep.subr.mxu0 0.0
  %1402 = vmatpush2.msra.mxu0 0.0
  %1403 = vmatprep.subr.mxu0 0.0
  %1404 = vmatpush2.msra.mxu0 0.0
  %1405 = vmatprep.mubr.f32.mxu0 0.0
  %1406 = vmatmul.mubr.f32.gmra.mxu0 %v1250
  %v1407 = vpop.f32.mrf.mxu0
  %v1408 = vadd.f32 %v1340, %v1407
  %v1409 = vpop.f32.mrf.mxu0
  %1410 = vmatprep.mubr.f32.mxu0 0.0
  %1411 = vmatmul.mubr.f32.gmra.mxu0 %v1253
  %v1412 = vpop.f32.mrf.mxu0
  %v1413 = vadd.f32 %v1340, %v1412
  %v1414 = vpop.f32.mrf.mxu0
  %1415 = vdwg.mxu0
  %v1416 = vmax.f32 %v1408, 0.0
  %v1417 = vmax.f32 %v1413, 0.0
  %s1418 = scalar_lea.vmem %s1, 576
  %v1419 = vld [vmem:[%s1418] sm:$0xff]
  %v1420 = vld [vmem:[%s1418 + $0x8] sm:$0xff]
  %v1421 = vld [vmem:[%s1418 + $0x10] sm:$0xff]
  %v1422 = vld [vmem:[%s1418 + $0x18] sm:$0xff]
  %s1423 = scalar_lea.vmem %s1, 608
  %v1424 = vld [vmem:[%s1423] sm:$0xff]
  %v1425 = vld [vmem:[%s1423 + $0x8] sm:$0xff]
  %v1426 = vld [vmem:[%s1423 + $0x10] sm:$0xff]
  %v1427 = vld [vmem:[%s1423 + $0x18] sm:$0xff]
  %v1429 = vsel %vm31, %v1416, 0
  %v1432 = vsel %vm31, %v1417, 0
  %1434 = vmatprep.subr.mxu0 0.0
  %1435 = vmatpush1.msra.mxu0 0.0
  %1436 = vmatprep.subr.mxu0 0.0
  %1437 = vmatpush1.msra.mxu0 0.0
  %1438 = vmatprep.subr.mxu0 0.0
  %1439 = vmatpush1.msra.mxu0 0.0
  %1440 = vmatprep.subr.mxu0 0.0
  %1441 = vmatpush1.msra.mxu0 0.0
  %1442 = vmatprep.subr.mxu0 0.0
  %1443 = vmatpush1.msra.mxu0 0.0
  %1444 = vmatprep.subr.mxu0 0.0
  %1445 = vmatpush1.msra.mxu0 0.0
  %1446 = vmatprep.subr.mxu0 0.0
  %1447 = vmatpush1.msra.mxu0 0.0
  %1448 = vmatprep.subr.mxu0 0.0
  %1449 = vmatpush1.msra.mxu0 0.0
  %1450 = vmatprep.subr.mxu0 0.0
  %1451 = vmatpush1.msra.mxu0 0.0
  %1452 = vmatprep.subr.mxu0 0.0
  %1453 = vmatpush1.msra.mxu0 0.0
  %1454 = vmatprep.subr.mxu0 0.0
  %1455 = vmatpush1.msra.mxu0 0.0
  %1456 = vmatprep.subr.mxu0 0.0
  %1457 = vmatpush1.msra.mxu0 0.0
  %1458 = vmatprep.subr.mxu0 0.0
  %1459 = vmatpush1.msra.mxu0 %v1427
  %1460 = vmatprep.subr.mxu0 0.0
  %1461 = vmatpush1.msra.mxu0 %v1426
  %1462 = vmatprep.subr.mxu0 0.0
  %1463 = vmatpush1.msra.mxu0 %v1425
  %1464 = vmatprep.subr.mxu0 0.0
  %1465 = vmatpush1.msra.mxu0 %v1424
  %1466 = vmatprep.subr.mxu0 0.0
  %1467 = vmatpush2.msra.mxu0 0.0
  %1468 = vmatprep.subr.mxu0 0.0
  %1469 = vmatpush2.msra.mxu0 0.0
  %1470 = vmatprep.subr.mxu0 0.0
  %1471 = vmatpush2.msra.mxu0 0.0
  %1472 = vmatprep.subr.mxu0 0.0
  %1473 = vmatpush2.msra.mxu0 0.0
  %1474 = vmatprep.subr.mxu0 0.0
  %1475 = vmatpush2.msra.mxu0 0.0
  %1476 = vmatprep.subr.mxu0 0.0
  %1477 = vmatpush2.msra.mxu0 0.0
  %1478 = vmatprep.subr.mxu0 0.0
  %1479 = vmatpush2.msra.mxu0 0.0
  %1480 = vmatprep.subr.mxu0 0.0
  %1481 = vmatpush2.msra.mxu0 0.0
  %1482 = vmatprep.subr.mxu0 0.0
  %1483 = vmatpush2.msra.mxu0 0.0
  %1484 = vmatprep.subr.mxu0 0.0
  %1485 = vmatpush2.msra.mxu0 0.0
  %1486 = vmatprep.subr.mxu0 0.0
  %1487 = vmatpush2.msra.mxu0 0.0
  %1488 = vmatprep.subr.mxu0 0.0
  %1489 = vmatpush2.msra.mxu0 0.0
  %1490 = vmatprep.subr.mxu0 0.0
  %1491 = vmatpush2.msra.mxu0 0.0
  %1492 = vmatprep.subr.mxu0 0.0
  %1493 = vmatpush2.msra.mxu0 0.0
  %1494 = vmatprep.subr.mxu0 0.0
  %1495 = vmatpush2.msra.mxu0 0.0
  %1496 = vmatprep.subr.mxu0 0.0
  %1497 = vmatpush2.msra.mxu0 0.0
  %1498 = vmatprep.mubr.f32.mxu0 0.0
  %1499 = vmatmul.mubr.f32.gmra.mxu0 %v1429
  %v1500 = vpop.f32.mrf.mxu0
  %v1501 = vadd.f32 0.0, %v1500
  %v1502 = vpop.f32.mrf.mxu0
  %1503 = vmatprep.mubr.f32.mxu0 0.0
  %1504 = vmatmul.mubr.f32.gmra.mxu0 %v1432
  %v1505 = vpop.f32.mrf.mxu0
  %v1506 = vadd.f32 0.0, %v1505
  %v1507 = vpop.f32.mrf.mxu0
  %1508 = vdwg.mxu0
  %v1510 = vsel %vm31, %v1330, 0
  %v1513 = vsel %vm31, %v1331, 0
  %1515 = vmatprep.subr.mxu0 0.0
  %1516 = vmatpush1.msra.mxu0 0.0
  %1517 = vmatprep.subr.mxu0 0.0
  %1518 = vmatpush1.msra.mxu0 0.0
  %1519 = vmatprep.subr.mxu0 0.0
  %1520 = vmatpush1.msra.mxu0 0.0
  %1521 = vmatprep.subr.mxu0 0.0
  %1522 = vmatpush1.msra.mxu0 0.0
  %1523 = vmatprep.subr.mxu0 0.0
  %1524 = vmatpush1.msra.mxu0 0.0
  %1525 = vmatprep.subr.mxu0 0.0
  %1526 = vmatpush1.msra.mxu0 0.0
  %1527 = vmatprep.subr.mxu0 0.0
  %1528 = vmatpush1.msra.mxu0 0.0
  %1529 = vmatprep.subr.mxu0 0.0
  %1530 = vmatpush1.msra.mxu0 0.0
  %1531 = vmatprep.subr.mxu0 0.0
  %1532 = vmatpush1.msra.mxu0 0.0
  %1533 = vmatprep.subr.mxu0 0.0
  %1534 = vmatpush1.msra.mxu0 0.0
  %1535 = vmatprep.subr.mxu0 0.0
  %1536 = vmatpush1.msra.mxu0 0.0
  %1537 = vmatprep.subr.mxu0 0.0
  %1538 = vmatpush1.msra.mxu0 0.0
  %1539 = vmatprep.subr.mxu0 0.0
  %1540 = vmatpush1.msra.mxu0 %v1422
  %1541 = vmatprep.subr.mxu0 0.0
  %1542 = vmatpush1.msra.mxu0 %v1421
  %1543 = vmatprep.subr.mxu0 0.0
  %1544 = vmatpush1.msra.mxu0 %v1420
  %1545 = vmatprep.subr.mxu0 0.0
  %1546 = vmatpush1.msra.mxu0 %v1419
  %1547 = vmatprep.subr.mxu0 0.0
  %1548 = vmatpush2.msra.mxu0 0.0
  %1549 = vmatprep.subr.mxu0 0.0
  %1550 = vmatpush2.msra.mxu0 0.0
  %1551 = vmatprep.subr.mxu0 0.0
  %1552 = vmatpush2.msra.mxu0 0.0
  %1553 = vmatprep.subr.mxu0 0.0
  %1554 = vmatpush2.msra.mxu0 0.0
  %1555 = vmatprep.subr.mxu0 0.0
  %1556 = vmatpush2.msra.mxu0 0.0
  %1557 = vmatprep.subr.mxu0 0.0
  %1558 = vmatpush2.msra.mxu0 0.0
  %1559 = vmatprep.subr.mxu0 0.0
  %1560 = vmatpush2.msra.mxu0 0.0
  %1561 = vmatprep.subr.mxu0 0.0
  %1562 = vmatpush2.msra.mxu0 0.0
  %1563 = vmatprep.subr.mxu0 0.0
  %1564 = vmatpush2.msra.mxu0 0.0
  %1565 = vmatprep.subr.mxu0 0.0
  %1566 = vmatpush2.msra.mxu0 0.0
  %1567 = vmatprep.subr.mxu0 0.0
  %1568 = vmatpush2.msra.mxu0 0.0
  %1569 = vmatprep.subr.mxu0 0.0
  %1570 = vmatpush2.msra.mxu0 0.0
  %1571 = vmatprep.subr.mxu0 0.0
  %1572 = vmatpush2.msra.mxu0 0.0
  %1573 = vmatprep.subr.mxu0 0.0
  %1574 = vmatpush2.msra.mxu0 0.0
  %1575 = vmatprep.subr.mxu0 0.0
  %1576 = vmatpush2.msra.mxu0 0.0
  %1577 = vmatprep.subr.mxu0 0.0
  %1578 = vmatpush2.msra.mxu0 0.0
  %1579 = vmatprep.mubr.f32.mxu0 0.0
  %1580 = vmatmul.mubr.f32.gmra.mxu0 %v1510
  %v1581 = vpop.f32.mrf.mxu0
  %v1582 = vadd.f32 %v1501, %v1581
  %v1583 = vpop.f32.mrf.mxu0
  %1584 = vmatprep.mubr.f32.mxu0 0.0
  %1585 = vmatmul.mubr.f32.gmra.mxu0 %v1513
  %v1586 = vpop.f32.mrf.mxu0
  %v1587 = vadd.f32 %v1506, %v1586
  %v1588 = vpop.f32.mrf.mxu0
  %1589 = vdwg.mxu0
  %v1590 = vlaneseq
  %v1591 = vshrl.u32 %v1590, 7
  %v1592 = vsub.s32 6, %v1591
  %v1593 = vrot.slane %v20, %v1592
  %v1594 = vadd.f32 %v1582, %v1593
  %v1595 = vadd.f32 %v1587, %v1593
  %v1596 = vadd.f32 %v1200, %v1594
  %v1597 = vadd.f32 %v1201, %v1595
  %v1598 = vsel %vm31, %v1596, 0.0
  %1599 = vadd.xlane.f32.xlu0 %v1598
  %v1600 = vpop.xlane.xlu0 %1599
  %v1601 = vsel %vm31, %v1597, 0.0
  %1602 = vadd.xlane.f32.xlu0 %v1601
  %v1603 = vpop.xlane.xlu0 %1602
  %v1604 = vmul.f32 %v1600, %v129
  %v1605 = vmul.f32 %v1603, %v129
  %v1606 = vsub.f32 %v1596, %v1604
  %v1607 = vsub.f32 %v1597, %v1605
  %v1608 = vmul.f32 %v1606, %v1606
  %v1609 = vmul.f32 %v1607, %v1607
  %v1610 = vsel %vm31, %v1608, 0.0
  %1611 = vadd.xlane.f32.xlu0 %v1610
  %v1612 = vpop.xlane.xlu0 %1611
  %v1613 = vsel %vm31, %v1609, 0.0
  %1614 = vadd.xlane.f32.xlu0 %v1613
  %v1615 = vpop.xlane.xlu0 %1614
  %v1616 = vmul.f32 %v1612, %v129
  %v1617 = vmul.f32 %v1615, %v129
  %v1618 = vadd.f32 %v1616, 1e-05
  %v1619 = vadd.f32 %v1617, 1e-05
  %v1620 = vrsqrt.pop %v1618
  %v1621 = vrsqrt.pop %v1619
  %v1622 = vmul.f32 %v1606, %v1620
  %v1623 = vmul.f32 %v1607, %v1621
  %v1624 = vlaneseq
  %v1625 = vshrl.u32 %v1624, 7
  %v1626 = vsub.s32 7, %v1625
  %v1627 = vrot.slane %v20, %v1626
  %v1628 = vmul.f32 %v1622, %v1627
  %v1629 = vmul.f32 %v1623, %v1627
  %v1630 = vlaneseq
  %v1631 = vshrl.u32 %v1630, 7
  %v1632 = vsub.s32 0, %v1631
  %v1633 = vrot.slane %v21, %v1632
  %v1634 = vadd.f32 %v1628, %v1633
  %v1635 = vadd.f32 %v1629, %v1633
  %s1636 = scalar_lea.vmem %s1, 256
  %v1637 = vld [vmem:[%s1636] sm:$0xff]
  %v1638 = vld [vmem:[%s1636 + $0x8] sm:$0xff]
  %v1639 = vld [vmem:[%s1636 + $0x10] sm:$0xff]
  %v1640 = vld [vmem:[%s1636 + $0x18] sm:$0xff]
  %v1642 = vsel %vm31, %v1634, 0
  %v1645 = vsel %vm31, %v1635, 0
  %1647 = vmatprep.subr.mxu0 0.0
  %1648 = vmatpush1.msra.mxu0 0.0
  %1649 = vmatprep.subr.mxu0 0.0
  %1650 = vmatpush1.msra.mxu0 0.0
  %1651 = vmatprep.subr.mxu0 0.0
  %1652 = vmatpush1.msra.mxu0 0.0
  %1653 = vmatprep.subr.mxu0 0.0
  %1654 = vmatpush1.msra.mxu0 0.0
  %1655 = vmatprep.subr.mxu0 0.0
  %1656 = vmatpush1.msra.mxu0 0.0
  %1657 = vmatprep.subr.mxu0 0.0
  %1658 = vmatpush1.msra.mxu0 0.0
  %1659 = vmatprep.subr.mxu0 0.0
  %1660 = vmatpush1.msra.mxu0 0.0
  %1661 = vmatprep.subr.mxu0 0.0
  %1662 = vmatpush1.msra.mxu0 0.0
  %1663 = vmatprep.subr.mxu0 0.0
  %1664 = vmatpush1.msra.mxu0 0.0
  %1665 = vmatprep.subr.mxu0 0.0
  %1666 = vmatpush1.msra.mxu0 0.0
  %1667 = vmatprep.subr.mxu0 0.0
  %1668 = vmatpush1.msra.mxu0 0.0
  %1669 = vmatprep.subr.mxu0 0.0
  %1670 = vmatpush1.msra.mxu0 0.0
  %1671 = vmatprep.subr.mxu0 0.0
  %1672 = vmatpush1.msra.mxu0 %v1640
  %1673 = vmatprep.subr.mxu0 0.0
  %1674 = vmatpush1.msra.mxu0 %v1639
  %1675 = vmatprep.subr.mxu0 0.0
  %1676 = vmatpush1.msra.mxu0 %v1638
  %1677 = vmatprep.subr.mxu0 0.0
  %1678 = vmatpush1.msra.mxu0 %v1637
  %1679 = vmatprep.subr.mxu0 0.0
  %1680 = vmatpush2.msra.mxu0 0.0
  %1681 = vmatprep.subr.mxu0 0.0
  %1682 = vmatpush2.msra.mxu0 0.0
  %1683 = vmatprep.subr.mxu0 0.0
  %1684 = vmatpush2.msra.mxu0 0.0
  %1685 = vmatprep.subr.mxu0 0.0
  %1686 = vmatpush2.msra.mxu0 0.0
  %1687 = vmatprep.subr.mxu0 0.0
  %1688 = vmatpush2.msra.mxu0 0.0
  %1689 = vmatprep.subr.mxu0 0.0
  %1690 = vmatpush2.msra.mxu0 0.0
  %1691 = vmatprep.subr.mxu0 0.0
  %1692 = vmatpush2.msra.mxu0 0.0
  %1693 = vmatprep.subr.mxu0 0.0
  %1694 = vmatpush2.msra.mxu0 0.0
  %1695 = vmatprep.subr.mxu0 0.0
  %1696 = vmatpush2.msra.mxu0 0.0
  %1697 = vmatprep.subr.mxu0 0.0
  %1698 = vmatpush2.msra.mxu0 0.0
  %1699 = vmatprep.subr.mxu0 0.0
  %1700 = vmatpush2.msra.mxu0 0.0
  %1701 = vmatprep.subr.mxu0 0.0
  %1702 = vmatpush2.msra.mxu0 0.0
  %1703 = vmatprep.subr.mxu0 0.0
  %1704 = vmatpush2.msra.mxu0 0.0
  %1705 = vmatprep.subr.mxu0 0.0
  %1706 = vmatpush2.msra.mxu0 0.0
  %1707 = vmatprep.subr.mxu0 0.0
  %1708 = vmatpush2.msra.mxu0 0.0
  %1709 = vmatprep.subr.mxu0 0.0
  %1710 = vmatpush2.msra.mxu0 0.0
  %1711 = vmatprep.mubr.f32.mxu0 0.0
  %1712 = vmatmul.mubr.f32.gmra.mxu0 %v1642
  %v1713 = vpop.f32.mrf.mxu0
  %v1714 = vadd.f32 0.0, %v1713
  %v1715 = vpop.f32.mrf.mxu0
  %1716 = vmatprep.mubr.f32.mxu0 0.0
  %1717 = vmatmul.mubr.f32.gmra.mxu0 %v1645
  %v1718 = vpop.f32.mrf.mxu0
  %v1719 = vadd.f32 0.0, %v1718
  %v1720 = vpop.f32.mrf.mxu0
  %1721 = vdwg.mxu0
  %s1722 = scalar_lea.vmem %s1, 288
  %v1723 = vld [vmem:[%s1722] sm:$0xff]
  %v1724 = vld [vmem:[%s1722 + $0x8] sm:$0xff]
  %v1725 = vld [vmem:[%s1722 + $0x10] sm:$0xff]
  %v1726 = vld [vmem:[%s1722 + $0x18] sm:$0xff]
  %1727 = vmatprep.subr.mxu0 0.0
  %1728 = vmatpush1.msra.mxu0 0.0
  %1729 = vmatprep.subr.mxu0 0.0
  %1730 = vmatpush1.msra.mxu0 0.0
  %1731 = vmatprep.subr.mxu0 0.0
  %1732 = vmatpush1.msra.mxu0 0.0
  %1733 = vmatprep.subr.mxu0 0.0
  %1734 = vmatpush1.msra.mxu0 0.0
  %1735 = vmatprep.subr.mxu0 0.0
  %1736 = vmatpush1.msra.mxu0 0.0
  %1737 = vmatprep.subr.mxu0 0.0
  %1738 = vmatpush1.msra.mxu0 0.0
  %1739 = vmatprep.subr.mxu0 0.0
  %1740 = vmatpush1.msra.mxu0 0.0
  %1741 = vmatprep.subr.mxu0 0.0
  %1742 = vmatpush1.msra.mxu0 0.0
  %1743 = vmatprep.subr.mxu0 0.0
  %1744 = vmatpush1.msra.mxu0 0.0
  %1745 = vmatprep.subr.mxu0 0.0
  %1746 = vmatpush1.msra.mxu0 0.0
  %1747 = vmatprep.subr.mxu0 0.0
  %1748 = vmatpush1.msra.mxu0 0.0
  %1749 = vmatprep.subr.mxu0 0.0
  %1750 = vmatpush1.msra.mxu0 0.0
  %1751 = vmatprep.subr.mxu0 0.0
  %1752 = vmatpush1.msra.mxu0 %v1726
  %1753 = vmatprep.subr.mxu0 0.0
  %1754 = vmatpush1.msra.mxu0 %v1725
  %1755 = vmatprep.subr.mxu0 0.0
  %1756 = vmatpush1.msra.mxu0 %v1724
  %1757 = vmatprep.subr.mxu0 0.0
  %1758 = vmatpush1.msra.mxu0 %v1723
  %1759 = vmatprep.subr.mxu0 0.0
  %1760 = vmatpush2.msra.mxu0 0.0
  %1761 = vmatprep.subr.mxu0 0.0
  %1762 = vmatpush2.msra.mxu0 0.0
  %1763 = vmatprep.subr.mxu0 0.0
  %1764 = vmatpush2.msra.mxu0 0.0
  %1765 = vmatprep.subr.mxu0 0.0
  %1766 = vmatpush2.msra.mxu0 0.0
  %1767 = vmatprep.subr.mxu0 0.0
  %1768 = vmatpush2.msra.mxu0 0.0
  %1769 = vmatprep.subr.mxu0 0.0
  %1770 = vmatpush2.msra.mxu0 0.0
  %1771 = vmatprep.subr.mxu0 0.0
  %1772 = vmatpush2.msra.mxu0 0.0
  %1773 = vmatprep.subr.mxu0 0.0
  %1774 = vmatpush2.msra.mxu0 0.0
  %1775 = vmatprep.subr.mxu0 0.0
  %1776 = vmatpush2.msra.mxu0 0.0
  %1777 = vmatprep.subr.mxu0 0.0
  %1778 = vmatpush2.msra.mxu0 0.0
  %1779 = vmatprep.subr.mxu0 0.0
  %1780 = vmatpush2.msra.mxu0 0.0
  %1781 = vmatprep.subr.mxu0 0.0
  %1782 = vmatpush2.msra.mxu0 0.0
  %1783 = vmatprep.subr.mxu0 0.0
  %1784 = vmatpush2.msra.mxu0 0.0
  %1785 = vmatprep.subr.mxu0 0.0
  %1786 = vmatpush2.msra.mxu0 0.0
  %1787 = vmatprep.subr.mxu0 0.0
  %1788 = vmatpush2.msra.mxu0 0.0
  %1789 = vmatprep.subr.mxu0 0.0
  %1790 = vmatpush2.msra.mxu0 0.0
  %1791 = vmatprep.mubr.f32.mxu0 0.0
  %1792 = vmatmul.mubr.f32.gmra.mxu0 %v1642
  %v1793 = vpop.f32.mrf.mxu0
  %v1794 = vadd.f32 0.0, %v1793
  %v1795 = vpop.f32.mrf.mxu0
  %1796 = vmatprep.mubr.f32.mxu0 0.0
  %1797 = vmatmul.mubr.f32.gmra.mxu0 %v1645
  %v1798 = vpop.f32.mrf.mxu0
  %v1799 = vadd.f32 0.0, %v1798
  %v1800 = vpop.f32.mrf.mxu0
  %1801 = vdwg.mxu0
  %s1802 = scalar_lea.vmem %s1, 320
  %v1803 = vld [vmem:[%s1802] sm:$0xff]
  %v1804 = vld [vmem:[%s1802 + $0x8] sm:$0xff]
  %v1805 = vld [vmem:[%s1802 + $0x10] sm:$0xff]
  %v1806 = vld [vmem:[%s1802 + $0x18] sm:$0xff]
  %1807 = vmatprep.subr.mxu0 0.0
  %1808 = vmatpush1.msra.mxu0 0.0
  %1809 = vmatprep.subr.mxu0 0.0
  %1810 = vmatpush1.msra.mxu0 0.0
  %1811 = vmatprep.subr.mxu0 0.0
  %1812 = vmatpush1.msra.mxu0 0.0
  %1813 = vmatprep.subr.mxu0 0.0
  %1814 = vmatpush1.msra.mxu0 0.0
  %1815 = vmatprep.subr.mxu0 0.0
  %1816 = vmatpush1.msra.mxu0 0.0
  %1817 = vmatprep.subr.mxu0 0.0
  %1818 = vmatpush1.msra.mxu0 0.0
  %1819 = vmatprep.subr.mxu0 0.0
  %1820 = vmatpush1.msra.mxu0 0.0
  %1821 = vmatprep.subr.mxu0 0.0
  %1822 = vmatpush1.msra.mxu0 0.0
  %1823 = vmatprep.subr.mxu0 0.0
  %1824 = vmatpush1.msra.mxu0 0.0
  %1825 = vmatprep.subr.mxu0 0.0
  %1826 = vmatpush1.msra.mxu0 0.0
  %1827 = vmatprep.subr.mxu0 0.0
  %1828 = vmatpush1.msra.mxu0 0.0
  %1829 = vmatprep.subr.mxu0 0.0
  %1830 = vmatpush1.msra.mxu0 0.0
  %1831 = vmatprep.subr.mxu0 0.0
  %1832 = vmatpush1.msra.mxu0 %v1806
  %1833 = vmatprep.subr.mxu0 0.0
  %1834 = vmatpush1.msra.mxu0 %v1805
  %1835 = vmatprep.subr.mxu0 0.0
  %1836 = vmatpush1.msra.mxu0 %v1804
  %1837 = vmatprep.subr.mxu0 0.0
  %1838 = vmatpush1.msra.mxu0 %v1803
  %1839 = vmatprep.subr.mxu0 0.0
  %1840 = vmatpush2.msra.mxu0 0.0
  %1841 = vmatprep.subr.mxu0 0.0
  %1842 = vmatpush2.msra.mxu0 0.0
  %1843 = vmatprep.subr.mxu0 0.0
  %1844 = vmatpush2.msra.mxu0 0.0
  %1845 = vmatprep.subr.mxu0 0.0
  %1846 = vmatpush2.msra.mxu0 0.0
  %1847 = vmatprep.subr.mxu0 0.0
  %1848 = vmatpush2.msra.mxu0 0.0
  %1849 = vmatprep.subr.mxu0 0.0
  %1850 = vmatpush2.msra.mxu0 0.0
  %1851 = vmatprep.subr.mxu0 0.0
  %1852 = vmatpush2.msra.mxu0 0.0
  %1853 = vmatprep.subr.mxu0 0.0
  %1854 = vmatpush2.msra.mxu0 0.0
  %1855 = vmatprep.subr.mxu0 0.0
  %1856 = vmatpush2.msra.mxu0 0.0
  %1857 = vmatprep.subr.mxu0 0.0
  %1858 = vmatpush2.msra.mxu0 0.0
  %1859 = vmatprep.subr.mxu0 0.0
  %1860 = vmatpush2.msra.mxu0 0.0
  %1861 = vmatprep.subr.mxu0 0.0
  %1862 = vmatpush2.msra.mxu0 0.0
  %1863 = vmatprep.subr.mxu0 0.0
  %1864 = vmatpush2.msra.mxu0 0.0
  %1865 = vmatprep.subr.mxu0 0.0
  %1866 = vmatpush2.msra.mxu0 0.0
  %1867 = vmatprep.subr.mxu0 0.0
  %1868 = vmatpush2.msra.mxu0 0.0
  %1869 = vmatprep.subr.mxu0 0.0
  %1870 = vmatpush2.msra.mxu0 0.0
  %1871 = vmatprep.mubr.f32.mxu0 0.0
  %1872 = vmatmul.mubr.f32.gmra.mxu0 %v1642
  %v1873 = vpop.f32.mrf.mxu0
  %v1874 = vadd.f32 0.0, %v1873
  %v1875 = vpop.f32.mrf.mxu0
  %1876 = vmatprep.mubr.f32.mxu0 0.0
  %1877 = vmatmul.mubr.f32.gmra.mxu0 %v1645
  %v1878 = vpop.f32.mrf.mxu0
  %v1879 = vadd.f32 0.0, %v1878
  %v1880 = vpop.f32.mrf.mxu0
  %1881 = vdwg.mxu0
  %v1883 = vsel %vm31, %v1714, 0
  %v1886 = vsel %vm31, %v1719, 0
  %v1889 = vsel %vm31, %v1794, 0
  %v1892 = vsel %vm31, %v1799, 0
  %1894 = vmatprep.subr.mxu0 0.0
  %1895 = vmatpush1.xpose.msra.mxu0 0.0
  %1896 = vmatprep.subr.mxu0 0.0
  %1897 = vmatpush1.xpose.msra.mxu0 0.0
  %1898 = vmatprep.subr.mxu0 0.0
  %1899 = vmatpush1.xpose.msra.mxu0 0.0
  %1900 = vmatprep.subr.mxu0 0.0
  %1901 = vmatpush1.xpose.msra.mxu0 0.0
  %1902 = vmatprep.subr.mxu0 0.0
  %1903 = vmatpush1.xpose.msra.mxu0 0.0
  %1904 = vmatprep.subr.mxu0 0.0
  %1905 = vmatpush1.xpose.msra.mxu0 0.0
  %1906 = vmatprep.subr.mxu0 0.0
  %1907 = vmatpush1.xpose.msra.mxu0 0.0
  %1908 = vmatprep.subr.mxu0 0.0
  %1909 = vmatpush1.xpose.msra.mxu0 0.0
  %1910 = vmatprep.subr.mxu0 0.0
  %1911 = vmatpush1.xpose.msra.mxu0 0.0
  %1912 = vmatprep.subr.mxu0 0.0
  %1913 = vmatpush1.xpose.msra.mxu0 0.0
  %1914 = vmatprep.subr.mxu0 0.0
  %1915 = vmatpush1.xpose.msra.mxu0 0.0
  %1916 = vmatprep.subr.mxu0 0.0
  %1917 = vmatpush1.xpose.msra.mxu0 0.0
  %1918 = vmatprep.subr.mxu0 0.0
  %1919 = vmatpush1.xpose.msra.mxu0 0.0
  %1920 = vmatprep.subr.mxu0 0.0
  %1921 = vmatpush1.xpose.msra.mxu0 0.0
  %1922 = vmatprep.subr.mxu0 0.0
  %1923 = vmatpush1.xpose.msra.mxu0 %v1892
  %1924 = vmatprep.subr.mxu0 0.0
  %1925 = vmatpush1.xpose.msra.mxu0 %v1889
  %1926 = vmatprep.subr.mxu0 0.0
  %1927 = vmatpush2.xpose.msra.mxu0 0.0
  %1928 = vmatprep.subr.mxu0 0.0
  %1929 = vmatpush2.xpose.msra.mxu0 0.0
  %1930 = vmatprep.subr.mxu0 0.0
  %1931 = vmatpush2.xpose.msra.mxu0 0.0
  %1932 = vmatprep.subr.mxu0 0.0
  %1933 = vmatpush2.xpose.msra.mxu0 0.0
  %1934 = vmatprep.subr.mxu0 0.0
  %1935 = vmatpush2.xpose.msra.mxu0 0.0
  %1936 = vmatprep.subr.mxu0 0.0
  %1937 = vmatpush2.xpose.msra.mxu0 0.0
  %1938 = vmatprep.subr.mxu0 0.0
  %1939 = vmatpush2.xpose.msra.mxu0 0.0
  %1940 = vmatprep.subr.mxu0 0.0
  %1941 = vmatpush2.xpose.msra.mxu0 0.0
  %1942 = vmatprep.subr.mxu0 0.0
  %1943 = vmatpush2.xpose.msra.mxu0 0.0
  %1944 = vmatprep.subr.mxu0 0.0
  %1945 = vmatpush2.xpose.msra.mxu0 0.0
  %1946 = vmatprep.subr.mxu0 0.0
  %1947 = vmatpush2.xpose.msra.mxu0 0.0
  %1948 = vmatprep.subr.mxu0 0.0
  %1949 = vmatpush2.xpose.msra.mxu0 0.0
  %1950 = vmatprep.subr.mxu0 0.0
  %1951 = vmatpush2.xpose.msra.mxu0 0.0
  %1952 = vmatprep.subr.mxu0 0.0
  %1953 = vmatpush2.xpose.msra.mxu0 0.0
  %1954 = vmatprep.subr.mxu0 0.0
  %1955 = vmatpush2.xpose.msra.mxu0 0.0
  %1956 = vmatprep.subr.mxu0 0.0
  %1957 = vmatpush2.xpose.msra.mxu0 0.0
  %1958 = vmatprep.mubr.f32.mxu0 0.0
  %1959 = vmatmul.mubr.f32.gmra.mxu0 %v1883
  %v1960 = vpop.f32.mrf.mxu0
  %v1961 = vadd.f32 %v121, %v1960
  %v1962 = vpop.f32.mrf.mxu0
  %1963 = vmatprep.mubr.f32.mxu0 0.0
  %1964 = vmatmul.mubr.f32.gmra.mxu0 %v1886
  %v1965 = vpop.f32.mrf.mxu0
  %v1966 = vadd.f32 %v122, %v1965
  %v1967 = vpop.f32.mrf.mxu0
  %1968 = vdwg.mxu0
  %v1969 = vsel %vm494, %v1961, -inf
  %1970 = vmax.xlane.f32.xlu0 %v1969
  %v1971 = vpop.xlane.xlu0 %1970
  %v1972 = vsel %vm494, %v1966, -inf
  %1973 = vmax.xlane.f32.xlu0 %v1972
  %v1974 = vpop.xlane.xlu0 %1973
  %v1975 = vsub.f32 %v1961, %v1971
  %v1976 = vsub.f32 %v1966, %v1974
  %v1977 = vmul.f32 %v1975, 1.442695
  %v1978 = vpow.pop %v1977
  %v1979 = vmul.f32 %v1976, 1.442695
  %v1980 = vpow.pop %v1979
  %v1981 = vsel %vm494, %v1978, 0.0
  %1982 = vadd.xlane.f32.xlu0 %v1981
  %v1983 = vpop.xlane.xlu0 %1982
  %v1984 = vsel %vm494, %v1980, 0.0
  %1985 = vadd.xlane.f32.xlu0 %v1984
  %v1986 = vpop.xlane.xlu0 %1985
  %v1987 = vrcp.pop %v1983
  %v1988 = vrcp.pop %v1986
  %v1989 = vmul.f32 %v1978, %v1987
  %v1990 = vmul.f32 %v1980, %v1988
  %v1992 = vsel %vm494, %v1989, 0
  %v1995 = vsel %vm494, %v1990, 0
  %1997 = vmatprep.subr.mxu0 0.0
  %1998 = vmatpush1.msra.mxu0 0.0
  %1999 = vmatprep.subr.mxu0 0.0
  %2000 = vmatpush1.msra.mxu0 0.0
  %2001 = vmatprep.subr.mxu0 0.0
  %2002 = vmatpush1.msra.mxu0 0.0
  %2003 = vmatprep.subr.mxu0 0.0
  %2004 = vmatpush1.msra.mxu0 0.0
  %2005 = vmatprep.subr.mxu0 0.0
  %2006 = vmatpush1.msra.mxu0 0.0
  %2007 = vmatprep.subr.mxu0 0.0
  %2008 = vmatpush1.msra.mxu0 0.0
  %2009 = vmatprep.subr.mxu0 0.0
  %2010 = vmatpush1.msra.mxu0 0.0
  %2011 = vmatprep.subr.mxu0 0.0
  %2012 = vmatpush1.msra.mxu0 0.0
  %2013 = vmatprep.subr.mxu0 0.0
  %2014 = vmatpush1.msra.mxu0 0.0
  %2015 = vmatprep.subr.mxu0 0.0
  %2016 = vmatpush1.msra.mxu0 0.0
  %2017 = vmatprep.subr.mxu0 0.0
  %2018 = vmatpush1.msra.mxu0 0.0
  %2019 = vmatprep.subr.mxu0 0.0
  %2020 = vmatpush1.msra.mxu0 0.0
  %2021 = vmatprep.subr.mxu0 0.0
  %2022 = vmatpush1.msra.mxu0 0.0
  %2023 = vmatprep.subr.mxu0 0.0
  %2024 = vmatpush1.msra.mxu0 0.0
  %2025 = vmatprep.subr.mxu0 0.0
  %2026 = vmatpush1.msra.mxu0 %v1879
  %2027 = vmatprep.subr.mxu0 0.0
  %2028 = vmatpush1.msra.mxu0 %v1874
  %2029 = vmatprep.subr.mxu0 0.0
  %2030 = vmatpush2.msra.mxu0 0.0
  %2031 = vmatprep.subr.mxu0 0.0
  %2032 = vmatpush2.msra.mxu0 0.0
  %2033 = vmatprep.subr.mxu0 0.0
  %2034 = vmatpush2.msra.mxu0 0.0
  %2035 = vmatprep.subr.mxu0 0.0
  %2036 = vmatpush2.msra.mxu0 0.0
  %2037 = vmatprep.subr.mxu0 0.0
  %2038 = vmatpush2.msra.mxu0 0.0
  %2039 = vmatprep.subr.mxu0 0.0
  %2040 = vmatpush2.msra.mxu0 0.0
  %2041 = vmatprep.subr.mxu0 0.0
  %2042 = vmatpush2.msra.mxu0 0.0
  %2043 = vmatprep.subr.mxu0 0.0
  %2044 = vmatpush2.msra.mxu0 0.0
  %2045 = vmatprep.subr.mxu0 0.0
  %2046 = vmatpush2.msra.mxu0 0.0
  %2047 = vmatprep.subr.mxu0 0.0
  %2048 = vmatpush2.msra.mxu0 0.0
  %2049 = vmatprep.subr.mxu0 0.0
  %2050 = vmatpush2.msra.mxu0 0.0
  %2051 = vmatprep.subr.mxu0 0.0
  %2052 = vmatpush2.msra.mxu0 0.0
  %2053 = vmatprep.subr.mxu0 0.0
  %2054 = vmatpush2.msra.mxu0 0.0
  %2055 = vmatprep.subr.mxu0 0.0
  %2056 = vmatpush2.msra.mxu0 0.0
  %2057 = vmatprep.subr.mxu0 0.0
  %2058 = vmatpush2.msra.mxu0 0.0
  %2059 = vmatprep.subr.mxu0 0.0
  %2060 = vmatpush2.msra.mxu0 0.0
  %2061 = vmatprep.mubr.f32.mxu0 0.0
  %2062 = vmatmul.mubr.f32.gmra.mxu0 %v1992
  %v2063 = vpop.f32.mrf.mxu0
  %v2064 = vadd.f32 0.0, %v2063
  %v2065 = vpop.f32.mrf.mxu0
  %2066 = vmatprep.mubr.f32.mxu0 0.0
  %2067 = vmatmul.mubr.f32.gmra.mxu0 %v1995
  %v2068 = vpop.f32.mrf.mxu0
  %v2069 = vadd.f32 0.0, %v2068
  %v2070 = vpop.f32.mrf.mxu0
  %2071 = vdwg.mxu0
  %s2072 = scalar_lea.vmem %s1, 352
  %v2073 = vld [vmem:[%s2072] sm:$0xff]
  %v2074 = vld [vmem:[%s2072 + $0x8] sm:$0xff]
  %v2075 = vld [vmem:[%s2072 + $0x10] sm:$0xff]
  %v2076 = vld [vmem:[%s2072 + $0x18] sm:$0xff]
  %s2077 = scalar_lea.vmem %s1, 384
  %v2078 = vld [vmem:[%s2077] sm:$0xff]
  %v2079 = vld [vmem:[%s2077 + $0x8] sm:$0xff]
  %v2080 = vld [vmem:[%s2077 + $0x10] sm:$0xff]
  %v2081 = vld [vmem:[%s2077 + $0x18] sm:$0xff]
  %2082 = vmatprep.subr.mxu0 0.0
  %2083 = vmatpush1.msra.mxu0 0.0
  %2084 = vmatprep.subr.mxu0 0.0
  %2085 = vmatpush1.msra.mxu0 0.0
  %2086 = vmatprep.subr.mxu0 0.0
  %2087 = vmatpush1.msra.mxu0 0.0
  %2088 = vmatprep.subr.mxu0 0.0
  %2089 = vmatpush1.msra.mxu0 0.0
  %2090 = vmatprep.subr.mxu0 0.0
  %2091 = vmatpush1.msra.mxu0 0.0
  %2092 = vmatprep.subr.mxu0 0.0
  %2093 = vmatpush1.msra.mxu0 0.0
  %2094 = vmatprep.subr.mxu0 0.0
  %2095 = vmatpush1.msra.mxu0 0.0
  %2096 = vmatprep.subr.mxu0 0.0
  %2097 = vmatpush1.msra.mxu0 0.0
  %2098 = vmatprep.subr.mxu0 0.0
  %2099 = vmatpush1.msra.mxu0 0.0
  %2100 = vmatprep.subr.mxu0 0.0
  %2101 = vmatpush1.msra.mxu0 0.0
  %2102 = vmatprep.subr.mxu0 0.0
  %2103 = vmatpush1.msra.mxu0 0.0
  %2104 = vmatprep.subr.mxu0 0.0
  %2105 = vmatpush1.msra.mxu0 0.0
  %2106 = vmatprep.subr.mxu0 0.0
  %2107 = vmatpush1.msra.mxu0 %v2081
  %2108 = vmatprep.subr.mxu0 0.0
  %2109 = vmatpush1.msra.mxu0 %v2080
  %2110 = vmatprep.subr.mxu0 0.0
  %2111 = vmatpush1.msra.mxu0 %v2079
  %2112 = vmatprep.subr.mxu0 0.0
  %2113 = vmatpush1.msra.mxu0 %v2078
  %2114 = vmatprep.subr.mxu0 0.0
  %2115 = vmatpush2.msra.mxu0 0.0
  %2116 = vmatprep.subr.mxu0 0.0
  %2117 = vmatpush2.msra.mxu0 0.0
  %2118 = vmatprep.subr.mxu0 0.0
  %2119 = vmatpush2.msra.mxu0 0.0
  %2120 = vmatprep.subr.mxu0 0.0
  %2121 = vmatpush2.msra.mxu0 0.0
  %2122 = vmatprep.subr.mxu0 0.0
  %2123 = vmatpush2.msra.mxu0 0.0
  %2124 = vmatprep.subr.mxu0 0.0
  %2125 = vmatpush2.msra.mxu0 0.0
  %2126 = vmatprep.subr.mxu0 0.0
  %2127 = vmatpush2.msra.mxu0 0.0
  %2128 = vmatprep.subr.mxu0 0.0
  %2129 = vmatpush2.msra.mxu0 0.0
  %2130 = vmatprep.subr.mxu0 0.0
  %2131 = vmatpush2.msra.mxu0 0.0
  %2132 = vmatprep.subr.mxu0 0.0
  %2133 = vmatpush2.msra.mxu0 0.0
  %2134 = vmatprep.subr.mxu0 0.0
  %2135 = vmatpush2.msra.mxu0 0.0
  %2136 = vmatprep.subr.mxu0 0.0
  %2137 = vmatpush2.msra.mxu0 0.0
  %2138 = vmatprep.subr.mxu0 0.0
  %2139 = vmatpush2.msra.mxu0 0.0
  %2140 = vmatprep.subr.mxu0 0.0
  %2141 = vmatpush2.msra.mxu0 0.0
  %2142 = vmatprep.subr.mxu0 0.0
  %2143 = vmatpush2.msra.mxu0 0.0
  %2144 = vmatprep.subr.mxu0 0.0
  %2145 = vmatpush2.msra.mxu0 0.0
  %2146 = vmatprep.mubr.f32.mxu0 0.0
  %2147 = vmatmul.mubr.f32.gmra.mxu0 %v1642
  %v2148 = vpop.f32.mrf.mxu0
  %v2149 = vadd.f32 0.0, %v2148
  %v2150 = vpop.f32.mrf.mxu0
  %2151 = vmatprep.mubr.f32.mxu0 0.0
  %2152 = vmatmul.mubr.f32.gmra.mxu0 %v1645
  %v2153 = vpop.f32.mrf.mxu0
  %v2154 = vadd.f32 0.0, %v2153
  %v2155 = vpop.f32.mrf.mxu0
  %2156 = vdwg.mxu0
  %s2157 = scalar_lea.vmem %s1, 416
  %v2158 = vld [vmem:[%s2157] sm:$0xff]
  %v2159 = vld [vmem:[%s2157 + $0x8] sm:$0xff]
  %v2160 = vld [vmem:[%s2157 + $0x10] sm:$0xff]
  %v2161 = vld [vmem:[%s2157 + $0x18] sm:$0xff]
  %2162 = vmatprep.subr.mxu0 0.0
  %2163 = vmatpush1.msra.mxu0 0.0
  %2164 = vmatprep.subr.mxu0 0.0
  %2165 = vmatpush1.msra.mxu0 0.0
  %2166 = vmatprep.subr.mxu0 0.0
  %2167 = vmatpush1.msra.mxu0 0.0
  %2168 = vmatprep.subr.mxu0 0.0
  %2169 = vmatpush1.msra.mxu0 0.0
  %2170 = vmatprep.subr.mxu0 0.0
  %2171 = vmatpush1.msra.mxu0 0.0
  %2172 = vmatprep.subr.mxu0 0.0
  %2173 = vmatpush1.msra.mxu0 0.0
  %2174 = vmatprep.subr.mxu0 0.0
  %2175 = vmatpush1.msra.mxu0 0.0
  %2176 = vmatprep.subr.mxu0 0.0
  %2177 = vmatpush1.msra.mxu0 0.0
  %2178 = vmatprep.subr.mxu0 0.0
  %2179 = vmatpush1.msra.mxu0 0.0
  %2180 = vmatprep.subr.mxu0 0.0
  %2181 = vmatpush1.msra.mxu0 0.0
  %2182 = vmatprep.subr.mxu0 0.0
  %2183 = vmatpush1.msra.mxu0 0.0
  %2184 = vmatprep.subr.mxu0 0.0
  %2185 = vmatpush1.msra.mxu0 0.0
  %2186 = vmatprep.subr.mxu0 0.0
  %2187 = vmatpush1.msra.mxu0 %v2161
  %2188 = vmatprep.subr.mxu0 0.0
  %2189 = vmatpush1.msra.mxu0 %v2160
  %2190 = vmatprep.subr.mxu0 0.0
  %2191 = vmatpush1.msra.mxu0 %v2159
  %2192 = vmatprep.subr.mxu0 0.0
  %2193 = vmatpush1.msra.mxu0 %v2158
  %2194 = vmatprep.subr.mxu0 0.0
  %2195 = vmatpush2.msra.mxu0 0.0
  %2196 = vmatprep.subr.mxu0 0.0
  %2197 = vmatpush2.msra.mxu0 0.0
  %2198 = vmatprep.subr.mxu0 0.0
  %2199 = vmatpush2.msra.mxu0 0.0
  %2200 = vmatprep.subr.mxu0 0.0
  %2201 = vmatpush2.msra.mxu0 0.0
  %2202 = vmatprep.subr.mxu0 0.0
  %2203 = vmatpush2.msra.mxu0 0.0
  %2204 = vmatprep.subr.mxu0 0.0
  %2205 = vmatpush2.msra.mxu0 0.0
  %2206 = vmatprep.subr.mxu0 0.0
  %2207 = vmatpush2.msra.mxu0 0.0
  %2208 = vmatprep.subr.mxu0 0.0
  %2209 = vmatpush2.msra.mxu0 0.0
  %2210 = vmatprep.subr.mxu0 0.0
  %2211 = vmatpush2.msra.mxu0 0.0
  %2212 = vmatprep.subr.mxu0 0.0
  %2213 = vmatpush2.msra.mxu0 0.0
  %2214 = vmatprep.subr.mxu0 0.0
  %2215 = vmatpush2.msra.mxu0 0.0
  %2216 = vmatprep.subr.mxu0 0.0
  %2217 = vmatpush2.msra.mxu0 0.0
  %2218 = vmatprep.subr.mxu0 0.0
  %2219 = vmatpush2.msra.mxu0 0.0
  %2220 = vmatprep.subr.mxu0 0.0
  %2221 = vmatpush2.msra.mxu0 0.0
  %2222 = vmatprep.subr.mxu0 0.0
  %2223 = vmatpush2.msra.mxu0 0.0
  %2224 = vmatprep.subr.mxu0 0.0
  %2225 = vmatpush2.msra.mxu0 0.0
  %2226 = vmatprep.mubr.f32.mxu0 0.0
  %2227 = vmatmul.mubr.f32.gmra.mxu0 %v1642
  %v2228 = vpop.f32.mrf.mxu0
  %v2229 = vadd.f32 0.0, %v2228
  %v2230 = vpop.f32.mrf.mxu0
  %2231 = vmatprep.mubr.f32.mxu0 0.0
  %2232 = vmatmul.mubr.f32.gmra.mxu0 %v1645
  %v2233 = vpop.f32.mrf.mxu0
  %v2234 = vadd.f32 0.0, %v2233
  %v2235 = vpop.f32.mrf.mxu0
  %2236 = vdwg.mxu0
  %s2237 = scalar_lea.vmem %s1, 448
  %v2238 = vld [vmem:[%s2237] sm:$0xff]
  %v2239 = vld [vmem:[%s2237 + $0x8] sm:$0xff]
  %v2240 = vld [vmem:[%s2237 + $0x10] sm:$0xff]
  %v2241 = vld [vmem:[%s2237 + $0x18] sm:$0xff]
  %2242 = vmatprep.subr.mxu0 0.0
  %2243 = vmatpush1.msra.mxu0 0.0
  %2244 = vmatprep.subr.mxu0 0.0
  %2245 = vmatpush1.msra.mxu0 0.0
  %2246 = vmatprep.subr.mxu0 0.0
  %2247 = vmatpush1.msra.mxu0 0.0
  %2248 = vmatprep.subr.mxu0 0.0
  %2249 = vmatpush1.msra.mxu0 0.0
  %2250 = vmatprep.subr.mxu0 0.0
  %2251 = vmatpush1.msra.mxu0 0.0
  %2252 = vmatprep.subr.mxu0 0.0
  %2253 = vmatpush1.msra.mxu0 0.0
  %2254 = vmatprep.subr.mxu0 0.0
  %2255 = vmatpush1.msra.mxu0 0.0
  %2256 = vmatprep.subr.mxu0 0.0
  %2257 = vmatpush1.msra.mxu0 0.0
  %2258 = vmatprep.subr.mxu0 0.0
  %2259 = vmatpush1.msra.mxu0 0.0
  %2260 = vmatprep.subr.mxu0 0.0
  %2261 = vmatpush1.msra.mxu0 0.0
  %2262 = vmatprep.subr.mxu0 0.0
  %2263 = vmatpush1.msra.mxu0 0.0
  %2264 = vmatprep.subr.mxu0 0.0
  %2265 = vmatpush1.msra.mxu0 0.0
  %2266 = vmatprep.subr.mxu0 0.0
  %2267 = vmatpush1.msra.mxu0 %v2241
  %2268 = vmatprep.subr.mxu0 0.0
  %2269 = vmatpush1.msra.mxu0 %v2240
  %2270 = vmatprep.subr.mxu0 0.0
  %2271 = vmatpush1.msra.mxu0 %v2239
  %2272 = vmatprep.subr.mxu0 0.0
  %2273 = vmatpush1.msra.mxu0 %v2238
  %2274 = vmatprep.subr.mxu0 0.0
  %2275 = vmatpush2.msra.mxu0 0.0
  %2276 = vmatprep.subr.mxu0 0.0
  %2277 = vmatpush2.msra.mxu0 0.0
  %2278 = vmatprep.subr.mxu0 0.0
  %2279 = vmatpush2.msra.mxu0 0.0
  %2280 = vmatprep.subr.mxu0 0.0
  %2281 = vmatpush2.msra.mxu0 0.0
  %2282 = vmatprep.subr.mxu0 0.0
  %2283 = vmatpush2.msra.mxu0 0.0
  %2284 = vmatprep.subr.mxu0 0.0
  %2285 = vmatpush2.msra.mxu0 0.0
  %2286 = vmatprep.subr.mxu0 0.0
  %2287 = vmatpush2.msra.mxu0 0.0
  %2288 = vmatprep.subr.mxu0 0.0
  %2289 = vmatpush2.msra.mxu0 0.0
  %2290 = vmatprep.subr.mxu0 0.0
  %2291 = vmatpush2.msra.mxu0 0.0
  %2292 = vmatprep.subr.mxu0 0.0
  %2293 = vmatpush2.msra.mxu0 0.0
  %2294 = vmatprep.subr.mxu0 0.0
  %2295 = vmatpush2.msra.mxu0 0.0
  %2296 = vmatprep.subr.mxu0 0.0
  %2297 = vmatpush2.msra.mxu0 0.0
  %2298 = vmatprep.subr.mxu0 0.0
  %2299 = vmatpush2.msra.mxu0 0.0
  %2300 = vmatprep.subr.mxu0 0.0
  %2301 = vmatpush2.msra.mxu0 0.0
  %2302 = vmatprep.subr.mxu0 0.0
  %2303 = vmatpush2.msra.mxu0 0.0
  %2304 = vmatprep.subr.mxu0 0.0
  %2305 = vmatpush2.msra.mxu0 0.0
  %2306 = vmatprep.mubr.f32.mxu0 0.0
  %2307 = vmatmul.mubr.f32.gmra.mxu0 %v1642
  %v2308 = vpop.f32.mrf.mxu0
  %v2309 = vadd.f32 0.0, %v2308
  %v2310 = vpop.f32.mrf.mxu0
  %2311 = vmatprep.mubr.f32.mxu0 0.0
  %2312 = vmatmul.mubr.f32.gmra.mxu0 %v1645
  %v2313 = vpop.f32.mrf.mxu0
  %v2314 = vadd.f32 0.0, %v2313
  %v2315 = vpop.f32.mrf.mxu0
  %2316 = vdwg.mxu0
  %v2318 = vsel %vm31, %v2149, 0
  %v2321 = vsel %vm31, %v2154, 0
  %v2324 = vsel %vm31, %v2229, 0
  %v2327 = vsel %vm31, %v2234, 0
  %2329 = vmatprep.subr.mxu0 0.0
  %2330 = vmatpush1.xpose.msra.mxu0 0.0
  %2331 = vmatprep.subr.mxu0 0.0
  %2332 = vmatpush1.xpose.msra.mxu0 0.0
  %2333 = vmatprep.subr.mxu0 0.0
  %2334 = vmatpush1.xpose.msra.mxu0 0.0
  %2335 = vmatprep.subr.mxu0 0.0
  %2336 = vmatpush1.xpose.msra.mxu0 0.0
  %2337 = vmatprep.subr.mxu0 0.0
  %2338 = vmatpush1.xpose.msra.mxu0 0.0
  %2339 = vmatprep.subr.mxu0 0.0
  %2340 = vmatpush1.xpose.msra.mxu0 0.0
  %2341 = vmatprep.subr.mxu0 0.0
  %2342 = vmatpush1.xpose.msra.mxu0 0.0
  %2343 = vmatprep.subr.mxu0 0.0
  %2344 = vmatpush1.xpose.msra.mxu0 0.0
  %2345 = vmatprep.subr.mxu0 0.0
  %2346 = vmatpush1.xpose.msra.mxu0 0.0
  %2347 = vmatprep.subr.mxu0 0.0
  %2348 = vmatpush1.xpose.msra.mxu0 0.0
  %2349 = vmatprep.subr.mxu0 0.0
  %2350 = vmatpush1.xpose.msra.mxu0 0.0
  %2351 = vmatprep.subr.mxu0 0.0
  %2352 = vmatpush1.xpose.msra.mxu0 0.0
  %2353 = vmatprep.subr.mxu0 0.0
  %2354 = vmatpush1.xpose.msra.mxu0 0.0
  %2355 = vmatprep.subr.mxu0 0.0
  %2356 = vmatpush1.xpose.msra.mxu0 0.0
  %2357 = vmatprep.subr.mxu0 0.0
  %2358 = vmatpush1.xpose.msra.mxu0 %v2327
  %2359 = vmatprep.subr.mxu0 0.0
  %2360 = vmatpush1.xpose.msra.mxu0 %v2324
  %2361 = vmatprep.subr.mxu0 0.0
  %2362 = vmatpush2.xpose.msra.mxu0 0.0
  %2363 = vmatprep.subr.mxu0 0.0
  %2364 = vmatpush2.xpose.msra.mxu0 0.0
  %2365 = vmatprep.subr.mxu0 0.0
  %2366 = vmatpush2.xpose.msra.mxu0 0.0
  %2367 = vmatprep.subr.mxu0 0.0
  %2368 = vmatpush2.xpose.msra.mxu0 0.0
  %2369 = vmatprep.subr.mxu0 0.0
  %2370 = vmatpush2.xpose.msra.mxu0 0.0
  %2371 = vmatprep.subr.mxu0 0.0
  %2372 = vmatpush2.xpose.msra.mxu0 0.0
  %2373 = vmatprep.subr.mxu0 0.0
  %2374 = vmatpush2.xpose.msra.mxu0 0.0
  %2375 = vmatprep.subr.mxu0 0.0
  %2376 = vmatpush2.xpose.msra.mxu0 0.0
  %2377 = vmatprep.subr.mxu0 0.0
  %2378 = vmatpush2.xpose.msra.mxu0 0.0
  %2379 = vmatprep.subr.mxu0 0.0
  %2380 = vmatpush2.xpose.msra.mxu0 0.0
  %2381 = vmatprep.subr.mxu0 0.0
  %2382 = vmatpush2.xpose.msra.mxu0 0.0
  %2383 = vmatprep.subr.mxu0 0.0
  %2384 = vmatpush2.xpose.msra.mxu0 0.0
  %2385 = vmatprep.subr.mxu0 0.0
  %2386 = vmatpush2.xpose.msra.mxu0 0.0
  %2387 = vmatprep.subr.mxu0 0.0
  %2388 = vmatpush2.xpose.msra.mxu0 0.0
  %2389 = vmatprep.subr.mxu0 0.0
  %2390 = vmatpush2.xpose.msra.mxu0 0.0
  %2391 = vmatprep.subr.mxu0 0.0
  %2392 = vmatpush2.xpose.msra.mxu0 0.0
  %2393 = vmatprep.mubr.f32.mxu0 0.0
  %2394 = vmatmul.mubr.f32.gmra.mxu0 %v2318
  %v2395 = vpop.f32.mrf.mxu0
  %v2396 = vadd.f32 %v121, %v2395
  %v2397 = vpop.f32.mrf.mxu0
  %2398 = vmatprep.mubr.f32.mxu0 0.0
  %2399 = vmatmul.mubr.f32.gmra.mxu0 %v2321
  %v2400 = vpop.f32.mrf.mxu0
  %v2401 = vadd.f32 %v122, %v2400
  %v2402 = vpop.f32.mrf.mxu0
  %2403 = vdwg.mxu0
  %v2404 = vsel %vm494, %v2396, -inf
  %2405 = vmax.xlane.f32.xlu0 %v2404
  %v2406 = vpop.xlane.xlu0 %2405
  %v2407 = vsel %vm494, %v2401, -inf
  %2408 = vmax.xlane.f32.xlu0 %v2407
  %v2409 = vpop.xlane.xlu0 %2408
  %v2410 = vsub.f32 %v2396, %v2406
  %v2411 = vsub.f32 %v2401, %v2409
  %v2412 = vmul.f32 %v2410, 1.442695
  %v2413 = vpow.pop %v2412
  %v2414 = vmul.f32 %v2411, 1.442695
  %v2415 = vpow.pop %v2414
  %v2416 = vsel %vm494, %v2413, 0.0
  %2417 = vadd.xlane.f32.xlu0 %v2416
  %v2418 = vpop.xlane.xlu0 %2417
  %v2419 = vsel %vm494, %v2415, 0.0
  %2420 = vadd.xlane.f32.xlu0 %v2419
  %v2421 = vpop.xlane.xlu0 %2420
  %v2422 = vrcp.pop %v2418
  %v2423 = vrcp.pop %v2421
  %v2424 = vmul.f32 %v2413, %v2422
  %v2425 = vmul.f32 %v2415, %v2423
  %v2427 = vsel %vm494, %v2424, 0
  %v2430 = vsel %vm494, %v2425, 0
  %2432 = vmatprep.subr.mxu0 0.0
  %2433 = vmatpush1.msra.mxu0 0.0
  %2434 = vmatprep.subr.mxu0 0.0
  %2435 = vmatpush1.msra.mxu0 0.0
  %2436 = vmatprep.subr.mxu0 0.0
  %2437 = vmatpush1.msra.mxu0 0.0
  %2438 = vmatprep.subr.mxu0 0.0
  %2439 = vmatpush1.msra.mxu0 0.0
  %2440 = vmatprep.subr.mxu0 0.0
  %2441 = vmatpush1.msra.mxu0 0.0
  %2442 = vmatprep.subr.mxu0 0.0
  %2443 = vmatpush1.msra.mxu0 0.0
  %2444 = vmatprep.subr.mxu0 0.0
  %2445 = vmatpush1.msra.mxu0 0.0
  %2446 = vmatprep.subr.mxu0 0.0
  %2447 = vmatpush1.msra.mxu0 0.0
  %2448 = vmatprep.subr.mxu0 0.0
  %2449 = vmatpush1.msra.mxu0 0.0
  %2450 = vmatprep.subr.mxu0 0.0
  %2451 = vmatpush1.msra.mxu0 0.0
  %2452 = vmatprep.subr.mxu0 0.0
  %2453 = vmatpush1.msra.mxu0 0.0
  %2454 = vmatprep.subr.mxu0 0.0
  %2455 = vmatpush1.msra.mxu0 0.0
  %2456 = vmatprep.subr.mxu0 0.0
  %2457 = vmatpush1.msra.mxu0 0.0
  %2458 = vmatprep.subr.mxu0 0.0
  %2459 = vmatpush1.msra.mxu0 0.0
  %2460 = vmatprep.subr.mxu0 0.0
  %2461 = vmatpush1.msra.mxu0 %v2314
  %2462 = vmatprep.subr.mxu0 0.0
  %2463 = vmatpush1.msra.mxu0 %v2309
  %2464 = vmatprep.subr.mxu0 0.0
  %2465 = vmatpush2.msra.mxu0 0.0
  %2466 = vmatprep.subr.mxu0 0.0
  %2467 = vmatpush2.msra.mxu0 0.0
  %2468 = vmatprep.subr.mxu0 0.0
  %2469 = vmatpush2.msra.mxu0 0.0
  %2470 = vmatprep.subr.mxu0 0.0
  %2471 = vmatpush2.msra.mxu0 0.0
  %2472 = vmatprep.subr.mxu0 0.0
  %2473 = vmatpush2.msra.mxu0 0.0
  %2474 = vmatprep.subr.mxu0 0.0
  %2475 = vmatpush2.msra.mxu0 0.0
  %2476 = vmatprep.subr.mxu0 0.0
  %2477 = vmatpush2.msra.mxu0 0.0
  %2478 = vmatprep.subr.mxu0 0.0
  %2479 = vmatpush2.msra.mxu0 0.0
  %2480 = vmatprep.subr.mxu0 0.0
  %2481 = vmatpush2.msra.mxu0 0.0
  %2482 = vmatprep.subr.mxu0 0.0
  %2483 = vmatpush2.msra.mxu0 0.0
  %2484 = vmatprep.subr.mxu0 0.0
  %2485 = vmatpush2.msra.mxu0 0.0
  %2486 = vmatprep.subr.mxu0 0.0
  %2487 = vmatpush2.msra.mxu0 0.0
  %2488 = vmatprep.subr.mxu0 0.0
  %2489 = vmatpush2.msra.mxu0 0.0
  %2490 = vmatprep.subr.mxu0 0.0
  %2491 = vmatpush2.msra.mxu0 0.0
  %2492 = vmatprep.subr.mxu0 0.0
  %2493 = vmatpush2.msra.mxu0 0.0
  %2494 = vmatprep.subr.mxu0 0.0
  %2495 = vmatpush2.msra.mxu0 0.0
  %2496 = vmatprep.mubr.f32.mxu0 0.0
  %2497 = vmatmul.mubr.f32.gmra.mxu0 %v2427
  %v2498 = vpop.f32.mrf.mxu0
  %v2499 = vadd.f32 0.0, %v2498
  %v2500 = vpop.f32.mrf.mxu0
  %2501 = vmatprep.mubr.f32.mxu0 0.0
  %2502 = vmatmul.mubr.f32.gmra.mxu0 %v2430
  %v2503 = vpop.f32.mrf.mxu0
  %v2504 = vadd.f32 0.0, %v2503
  %v2505 = vpop.f32.mrf.mxu0
  %2506 = vdwg.mxu0
  %s2507 = scalar_lea.vmem %s1, 480
  %v2508 = vld [vmem:[%s2507] sm:$0xff]
  %v2509 = vld [vmem:[%s2507 + $0x8] sm:$0xff]
  %v2510 = vld [vmem:[%s2507 + $0x10] sm:$0xff]
  %v2511 = vld [vmem:[%s2507 + $0x18] sm:$0xff]
  %v2513 = vsel %vm31, %v2499, 0
  %v2516 = vsel %vm31, %v2504, 0
  %2518 = vmatprep.subr.mxu0 0.0
  %2519 = vmatpush1.msra.mxu0 0.0
  %2520 = vmatprep.subr.mxu0 0.0
  %2521 = vmatpush1.msra.mxu0 0.0
  %2522 = vmatprep.subr.mxu0 0.0
  %2523 = vmatpush1.msra.mxu0 0.0
  %2524 = vmatprep.subr.mxu0 0.0
  %2525 = vmatpush1.msra.mxu0 0.0
  %2526 = vmatprep.subr.mxu0 0.0
  %2527 = vmatpush1.msra.mxu0 0.0
  %2528 = vmatprep.subr.mxu0 0.0
  %2529 = vmatpush1.msra.mxu0 0.0
  %2530 = vmatprep.subr.mxu0 0.0
  %2531 = vmatpush1.msra.mxu0 0.0
  %2532 = vmatprep.subr.mxu0 0.0
  %2533 = vmatpush1.msra.mxu0 0.0
  %2534 = vmatprep.subr.mxu0 0.0
  %2535 = vmatpush1.msra.mxu0 0.0
  %2536 = vmatprep.subr.mxu0 0.0
  %2537 = vmatpush1.msra.mxu0 0.0
  %2538 = vmatprep.subr.mxu0 0.0
  %2539 = vmatpush1.msra.mxu0 0.0
  %2540 = vmatprep.subr.mxu0 0.0
  %2541 = vmatpush1.msra.mxu0 0.0
  %2542 = vmatprep.subr.mxu0 0.0
  %2543 = vmatpush1.msra.mxu0 %v2511
  %2544 = vmatprep.subr.mxu0 0.0
  %2545 = vmatpush1.msra.mxu0 %v2510
  %2546 = vmatprep.subr.mxu0 0.0
  %2547 = vmatpush1.msra.mxu0 %v2509
  %2548 = vmatprep.subr.mxu0 0.0
  %2549 = vmatpush1.msra.mxu0 %v2508
  %2550 = vmatprep.subr.mxu0 0.0
  %2551 = vmatpush2.msra.mxu0 0.0
  %2552 = vmatprep.subr.mxu0 0.0
  %2553 = vmatpush2.msra.mxu0 0.0
  %2554 = vmatprep.subr.mxu0 0.0
  %2555 = vmatpush2.msra.mxu0 0.0
  %2556 = vmatprep.subr.mxu0 0.0
  %2557 = vmatpush2.msra.mxu0 0.0
  %2558 = vmatprep.subr.mxu0 0.0
  %2559 = vmatpush2.msra.mxu0 0.0
  %2560 = vmatprep.subr.mxu0 0.0
  %2561 = vmatpush2.msra.mxu0 0.0
  %2562 = vmatprep.subr.mxu0 0.0
  %2563 = vmatpush2.msra.mxu0 0.0
  %2564 = vmatprep.subr.mxu0 0.0
  %2565 = vmatpush2.msra.mxu0 0.0
  %2566 = vmatprep.subr.mxu0 0.0
  %2567 = vmatpush2.msra.mxu0 0.0
  %2568 = vmatprep.subr.mxu0 0.0
  %2569 = vmatpush2.msra.mxu0 0.0
  %2570 = vmatprep.subr.mxu0 0.0
  %2571 = vmatpush2.msra.mxu0 0.0
  %2572 = vmatprep.subr.mxu0 0.0
  %2573 = vmatpush2.msra.mxu0 0.0
  %2574 = vmatprep.subr.mxu0 0.0
  %2575 = vmatpush2.msra.mxu0 0.0
  %2576 = vmatprep.subr.mxu0 0.0
  %2577 = vmatpush2.msra.mxu0 0.0
  %2578 = vmatprep.subr.mxu0 0.0
  %2579 = vmatpush2.msra.mxu0 0.0
  %2580 = vmatprep.subr.mxu0 0.0
  %2581 = vmatpush2.msra.mxu0 0.0
  %2582 = vmatprep.mubr.f32.mxu0 0.0
  %2583 = vmatmul.mubr.f32.gmra.mxu0 %v2513
  %v2584 = vpop.f32.mrf.mxu0
  %v2585 = vadd.f32 0.0, %v2584
  %v2586 = vpop.f32.mrf.mxu0
  %2587 = vmatprep.mubr.f32.mxu0 0.0
  %2588 = vmatmul.mubr.f32.gmra.mxu0 %v2516
  %v2589 = vpop.f32.mrf.mxu0
  %v2590 = vadd.f32 0.0, %v2589
  %v2591 = vpop.f32.mrf.mxu0
  %2592 = vdwg.mxu0
  %v2594 = vsel %vm31, %v2064, 0
  %v2597 = vsel %vm31, %v2069, 0
  %2599 = vmatprep.subr.mxu0 0.0
  %2600 = vmatpush1.msra.mxu0 0.0
  %2601 = vmatprep.subr.mxu0 0.0
  %2602 = vmatpush1.msra.mxu0 0.0
  %2603 = vmatprep.subr.mxu0 0.0
  %2604 = vmatpush1.msra.mxu0 0.0
  %2605 = vmatprep.subr.mxu0 0.0
  %2606 = vmatpush1.msra.mxu0 0.0
  %2607 = vmatprep.subr.mxu0 0.0
  %2608 = vmatpush1.msra.mxu0 0.0
  %2609 = vmatprep.subr.mxu0 0.0
  %2610 = vmatpush1.msra.mxu0 0.0
  %2611 = vmatprep.subr.mxu0 0.0
  %2612 = vmatpush1.msra.mxu0 0.0
  %2613 = vmatprep.subr.mxu0 0.0
  %2614 = vmatpush1.msra.mxu0 0.0
  %2615 = vmatprep.subr.mxu0 0.0
  %2616 = vmatpush1.msra.mxu0 0.0
  %2617 = vmatprep.subr.mxu0 0.0
  %2618 = vmatpush1.msra.mxu0 0.0
  %2619 = vmatprep.subr.mxu0 0.0
  %2620 = vmatpush1.msra.mxu0 0.0
  %2621 = vmatprep.subr.mxu0 0.0
  %2622 = vmatpush1.msra.mxu0 0.0
  %2623 = vmatprep.subr.mxu0 0.0
  %2624 = vmatpush1.msra.mxu0 %v2076
  %2625 = vmatprep.subr.mxu0 0.0
  %2626 = vmatpush1.msra.mxu0 %v2075
  %2627 = vmatprep.subr.mxu0 0.0
  %2628 = vmatpush1.msra.mxu0 %v2074
  %2629 = vmatprep.subr.mxu0 0.0
  %2630 = vmatpush1.msra.mxu0 %v2073
  %2631 = vmatprep.subr.mxu0 0.0
  %2632 = vmatpush2.msra.mxu0 0.0
  %2633 = vmatprep.subr.mxu0 0.0
  %2634 = vmatpush2.msra.mxu0 0.0
  %2635 = vmatprep.subr.mxu0 0.0
  %2636 = vmatpush2.msra.mxu0 0.0
  %2637 = vmatprep.subr.mxu0 0.0
  %2638 = vmatpush2.msra.mxu0 0.0
  %2639 = vmatprep.subr.mxu0 0.0
  %2640 = vmatpush2.msra.mxu0 0.0
  %2641 = vmatprep.subr.mxu0 0.0
  %2642 = vmatpush2.msra.mxu0 0.0
  %2643 = vmatprep.subr.mxu0 0.0
  %2644 = vmatpush2.msra.mxu0 0.0
  %2645 = vmatprep.subr.mxu0 0.0
  %2646 = vmatpush2.msra.mxu0 0.0
  %2647 = vmatprep.subr.mxu0 0.0
  %2648 = vmatpush2.msra.mxu0 0.0
  %2649 = vmatprep.subr.mxu0 0.0
  %2650 = vmatpush2.msra.mxu0 0.0
  %2651 = vmatprep.subr.mxu0 0.0
  %2652 = vmatpush2.msra.mxu0 0.0
  %2653 = vmatprep.subr.mxu0 0.0
  %2654 = vmatpush2.msra.mxu0 0.0
  %2655 = vmatprep.subr.mxu0 0.0
  %2656 = vmatpush2.msra.mxu0 0.0
  %2657 = vmatprep.subr.mxu0 0.0
  %2658 = vmatpush2.msra.mxu0 0.0
  %2659 = vmatprep.subr.mxu0 0.0
  %2660 = vmatpush2.msra.mxu0 0.0
  %2661 = vmatprep.subr.mxu0 0.0
  %2662 = vmatpush2.msra.mxu0 0.0
  %2663 = vmatprep.mubr.f32.mxu0 0.0
  %2664 = vmatmul.mubr.f32.gmra.mxu0 %v2594
  %v2665 = vpop.f32.mrf.mxu0
  %v2666 = vadd.f32 %v2585, %v2665
  %v2667 = vpop.f32.mrf.mxu0
  %2668 = vmatprep.mubr.f32.mxu0 0.0
  %2669 = vmatmul.mubr.f32.gmra.mxu0 %v2597
  %v2670 = vpop.f32.mrf.mxu0
  %v2671 = vadd.f32 %v2590, %v2670
  %v2672 = vpop.f32.mrf.mxu0
  %2673 = vdwg.mxu0
  %v2674 = vadd.f32 %v1596, %v2666
  %v2675 = vadd.f32 %v1597, %v2671
  %v2676 = vsel %vm31, %v2674, 0.0
  %2677 = vadd.xlane.f32.xlu0 %v2676
  %v2678 = vpop.xlane.xlu0 %2677
  %v2679 = vsel %vm31, %v2675, 0.0
  %2680 = vadd.xlane.f32.xlu0 %v2679
  %v2681 = vpop.xlane.xlu0 %2680
  %v2682 = vmul.f32 %v2678, %v129
  %v2683 = vmul.f32 %v2681, %v129
  %v2684 = vsub.f32 %v2674, %v2682
  %v2685 = vsub.f32 %v2675, %v2683
  %v2686 = vmul.f32 %v2684, %v2684
  %v2687 = vmul.f32 %v2685, %v2685
  %v2688 = vsel %vm31, %v2686, 0.0
  %2689 = vadd.xlane.f32.xlu0 %v2688
  %v2690 = vpop.xlane.xlu0 %2689
  %v2691 = vsel %vm31, %v2687, 0.0
  %2692 = vadd.xlane.f32.xlu0 %v2691
  %v2693 = vpop.xlane.xlu0 %2692
  %v2694 = vmul.f32 %v2690, %v129
  %v2695 = vmul.f32 %v2693, %v129
  %v2696 = vadd.f32 %v2694, 1e-05
  %v2697 = vadd.f32 %v2695, 1e-05
  %v2698 = vrsqrt.pop %v2696
  %v2699 = vrsqrt.pop %v2697
  %v2700 = vmul.f32 %v2684, %v2698
  %v2701 = vmul.f32 %v2685, %v2699
  %v2702 = vlaneseq
  %v2703 = vshrl.u32 %v2702, 7
  %v2704 = vsub.s32 1, %v2703
  %v2705 = vrot.slane %v21, %v2704
  %v2706 = vmul.f32 %v2700, %v2705
  %v2707 = vmul.f32 %v2701, %v2705
  %v2708 = vlaneseq
  %v2709 = vshrl.u32 %v2708, 7
  %v2710 = vsub.s32 2, %v2709
  %v2711 = vrot.slane %v21, %v2710
  %v2712 = vadd.f32 %v2706, %v2711
  %v2713 = vadd.f32 %v2707, %v2711
  %s2714 = scalar_lea.vmem %s1, 640
  %v2715 = vld [vmem:[%s2714] sm:$0xff]
  %v2716 = vld [vmem:[%s2714 + $0x8] sm:$0xff]
  %v2717 = vld [vmem:[%s2714 + $0x10] sm:$0xff]
  %v2718 = vld [vmem:[%s2714 + $0x18] sm:$0xff]
  %v2719 = vlaneseq
  %v2720 = vshrl.u32 %v2719, 7
  %v2721 = vsub.s32 3, %v2720
  %v2722 = vrot.slane %v21, %v2721
  %v2724 = vsel %vm31, %v2712, 0
  %v2727 = vsel %vm31, %v2713, 0
  %2729 = vmatprep.subr.mxu0 0.0
  %2730 = vmatpush1.msra.mxu0 0.0
  %2731 = vmatprep.subr.mxu0 0.0
  %2732 = vmatpush1.msra.mxu0 0.0
  %2733 = vmatprep.subr.mxu0 0.0
  %2734 = vmatpush1.msra.mxu0 0.0
  %2735 = vmatprep.subr.mxu0 0.0
  %2736 = vmatpush1.msra.mxu0 0.0
  %2737 = vmatprep.subr.mxu0 0.0
  %2738 = vmatpush1.msra.mxu0 0.0
  %2739 = vmatprep.subr.mxu0 0.0
  %2740 = vmatpush1.msra.mxu0 0.0
  %2741 = vmatprep.subr.mxu0 0.0
  %2742 = vmatpush1.msra.mxu0 0.0
  %2743 = vmatprep.subr.mxu0 0.0
  %2744 = vmatpush1.msra.mxu0 0.0
  %2745 = vmatprep.subr.mxu0 0.0
  %2746 = vmatpush1.msra.mxu0 0.0
  %2747 = vmatprep.subr.mxu0 0.0
  %2748 = vmatpush1.msra.mxu0 0.0
  %2749 = vmatprep.subr.mxu0 0.0
  %2750 = vmatpush1.msra.mxu0 0.0
  %2751 = vmatprep.subr.mxu0 0.0
  %2752 = vmatpush1.msra.mxu0 0.0
  %2753 = vmatprep.subr.mxu0 0.0
  %2754 = vmatpush1.msra.mxu0 %v2718
  %2755 = vmatprep.subr.mxu0 0.0
  %2756 = vmatpush1.msra.mxu0 %v2717
  %2757 = vmatprep.subr.mxu0 0.0
  %2758 = vmatpush1.msra.mxu0 %v2716
  %2759 = vmatprep.subr.mxu0 0.0
  %2760 = vmatpush1.msra.mxu0 %v2715
  %2761 = vmatprep.subr.mxu0 0.0
  %2762 = vmatpush2.msra.mxu0 0.0
  %2763 = vmatprep.subr.mxu0 0.0
  %2764 = vmatpush2.msra.mxu0 0.0
  %2765 = vmatprep.subr.mxu0 0.0
  %2766 = vmatpush2.msra.mxu0 0.0
  %2767 = vmatprep.subr.mxu0 0.0
  %2768 = vmatpush2.msra.mxu0 0.0
  %2769 = vmatprep.subr.mxu0 0.0
  %2770 = vmatpush2.msra.mxu0 0.0
  %2771 = vmatprep.subr.mxu0 0.0
  %2772 = vmatpush2.msra.mxu0 0.0
  %2773 = vmatprep.subr.mxu0 0.0
  %2774 = vmatpush2.msra.mxu0 0.0
  %2775 = vmatprep.subr.mxu0 0.0
  %2776 = vmatpush2.msra.mxu0 0.0
  %2777 = vmatprep.subr.mxu0 0.0
  %2778 = vmatpush2.msra.mxu0 0.0
  %2779 = vmatprep.subr.mxu0 0.0
  %2780 = vmatpush2.msra.mxu0 0.0
  %2781 = vmatprep.subr.mxu0 0.0
  %2782 = vmatpush2.msra.mxu0 0.0
  %2783 = vmatprep.subr.mxu0 0.0
  %2784 = vmatpush2.msra.mxu0 0.0
  %2785 = vmatprep.subr.mxu0 0.0
  %2786 = vmatpush2.msra.mxu0 0.0
  %2787 = vmatprep.subr.mxu0 0.0
  %2788 = vmatpush2.msra.mxu0 0.0
  %2789 = vmatprep.subr.mxu0 0.0
  %2790 = vmatpush2.msra.mxu0 0.0
  %2791 = vmatprep.subr.mxu0 0.0
  %2792 = vmatpush2.msra.mxu0 0.0
  %2793 = vmatprep.mubr.f32.mxu0 0.0
  %2794 = vmatmul.mubr.f32.gmra.mxu0 %v2724
  %v2795 = vpop.f32.mrf.mxu0
  %v2796 = vadd.f32 %v2722, %v2795
  %v2797 = vpop.f32.mrf.mxu0
  %2798 = vmatprep.mubr.f32.mxu0 0.0
  %2799 = vmatmul.mubr.f32.gmra.mxu0 %v2727
  %v2800 = vpop.f32.mrf.mxu0
  %v2801 = vadd.f32 %v2722, %v2800
  %v2802 = vpop.f32.mrf.mxu0
  %2803 = vdwg.mxu0
  %v2804 = vmax.f32 %v2796, 0.0
  %v2805 = vmax.f32 %v2801, 0.0
  %s2806 = scalar_lea.vmem %s1, 672
  %v2807 = vld [vmem:[%s2806] sm:$0xff]
  %v2808 = vld [vmem:[%s2806 + $0x8] sm:$0xff]
  %v2809 = vld [vmem:[%s2806 + $0x10] sm:$0xff]
  %v2810 = vld [vmem:[%s2806 + $0x18] sm:$0xff]
  %v2811 = vlaneseq
  %v2812 = vshrl.u32 %v2811, 7
  %v2813 = vsub.s32 4, %v2812
  %v2814 = vrot.slane %v21, %v2813
  %2815 = vmatprep.subr.mxu0 0.0
  %2816 = vmatpush1.msra.mxu0 0.0
  %2817 = vmatprep.subr.mxu0 0.0
  %2818 = vmatpush1.msra.mxu0 0.0
  %2819 = vmatprep.subr.mxu0 0.0
  %2820 = vmatpush1.msra.mxu0 0.0
  %2821 = vmatprep.subr.mxu0 0.0
  %2822 = vmatpush1.msra.mxu0 0.0
  %2823 = vmatprep.subr.mxu0 0.0
  %2824 = vmatpush1.msra.mxu0 0.0
  %2825 = vmatprep.subr.mxu0 0.0
  %2826 = vmatpush1.msra.mxu0 0.0
  %2827 = vmatprep.subr.mxu0 0.0
  %2828 = vmatpush1.msra.mxu0 0.0
  %2829 = vmatprep.subr.mxu0 0.0
  %2830 = vmatpush1.msra.mxu0 0.0
  %2831 = vmatprep.subr.mxu0 0.0
  %2832 = vmatpush1.msra.mxu0 0.0
  %2833 = vmatprep.subr.mxu0 0.0
  %2834 = vmatpush1.msra.mxu0 0.0
  %2835 = vmatprep.subr.mxu0 0.0
  %2836 = vmatpush1.msra.mxu0 0.0
  %2837 = vmatprep.subr.mxu0 0.0
  %2838 = vmatpush1.msra.mxu0 0.0
  %2839 = vmatprep.subr.mxu0 0.0
  %2840 = vmatpush1.msra.mxu0 %v2810
  %2841 = vmatprep.subr.mxu0 0.0
  %2842 = vmatpush1.msra.mxu0 %v2809
  %2843 = vmatprep.subr.mxu0 0.0
  %2844 = vmatpush1.msra.mxu0 %v2808
  %2845 = vmatprep.subr.mxu0 0.0
  %2846 = vmatpush1.msra.mxu0 %v2807
  %2847 = vmatprep.subr.mxu0 0.0
  %2848 = vmatpush2.msra.mxu0 0.0
  %2849 = vmatprep.subr.mxu0 0.0
  %2850 = vmatpush2.msra.mxu0 0.0
  %2851 = vmatprep.subr.mxu0 0.0
  %2852 = vmatpush2.msra.mxu0 0.0
  %2853 = vmatprep.subr.mxu0 0.0
  %2854 = vmatpush2.msra.mxu0 0.0
  %2855 = vmatprep.subr.mxu0 0.0
  %2856 = vmatpush2.msra.mxu0 0.0
  %2857 = vmatprep.subr.mxu0 0.0
  %2858 = vmatpush2.msra.mxu0 0.0
  %2859 = vmatprep.subr.mxu0 0.0
  %2860 = vmatpush2.msra.mxu0 0.0
  %2861 = vmatprep.subr.mxu0 0.0
  %2862 = vmatpush2.msra.mxu0 0.0
  %2863 = vmatprep.subr.mxu0 0.0
  %2864 = vmatpush2.msra.mxu0 0.0
  %2865 = vmatprep.subr.mxu0 0.0
  %2866 = vmatpush2.msra.mxu0 0.0
  %2867 = vmatprep.subr.mxu0 0.0
  %2868 = vmatpush2.msra.mxu0 0.0
  %2869 = vmatprep.subr.mxu0 0.0
  %2870 = vmatpush2.msra.mxu0 0.0
  %2871 = vmatprep.subr.mxu0 0.0
  %2872 = vmatpush2.msra.mxu0 0.0
  %2873 = vmatprep.subr.mxu0 0.0
  %2874 = vmatpush2.msra.mxu0 0.0
  %2875 = vmatprep.subr.mxu0 0.0
  %2876 = vmatpush2.msra.mxu0 0.0
  %2877 = vmatprep.subr.mxu0 0.0
  %2878 = vmatpush2.msra.mxu0 0.0
  %2879 = vmatprep.mubr.f32.mxu0 0.0
  %2880 = vmatmul.mubr.f32.gmra.mxu0 %v2724
  %v2881 = vpop.f32.mrf.mxu0
  %v2882 = vadd.f32 %v2814, %v2881
  %v2883 = vpop.f32.mrf.mxu0
  %2884 = vmatprep.mubr.f32.mxu0 0.0
  %2885 = vmatmul.mubr.f32.gmra.mxu0 %v2727
  %v2886 = vpop.f32.mrf.mxu0
  %v2887 = vadd.f32 %v2814, %v2886
  %v2888 = vpop.f32.mrf.mxu0
  %2889 = vdwg.mxu0
  %v2890 = vmax.f32 %v2882, 0.0
  %v2891 = vmax.f32 %v2887, 0.0
  %s2892 = scalar_lea.vmem %s1, 704
  %v2893 = vld [vmem:[%s2892] sm:$0xff]
  %v2894 = vld [vmem:[%s2892 + $0x8] sm:$0xff]
  %v2895 = vld [vmem:[%s2892 + $0x10] sm:$0xff]
  %v2896 = vld [vmem:[%s2892 + $0x18] sm:$0xff]
  %s2897 = scalar_lea.vmem %s1, 736
  %v2898 = vld [vmem:[%s2897] sm:$0xff]
  %v2899 = vld [vmem:[%s2897 + $0x8] sm:$0xff]
  %v2900 = vld [vmem:[%s2897 + $0x10] sm:$0xff]
  %v2901 = vld [vmem:[%s2897 + $0x18] sm:$0xff]
  %v2903 = vsel %vm31, %v2890, 0
  %v2906 = vsel %vm31, %v2891, 0
  %2908 = vmatprep.subr.mxu0 0.0
  %2909 = vmatpush1.msra.mxu0 0.0
  %2910 = vmatprep.subr.mxu0 0.0
  %2911 = vmatpush1.msra.mxu0 0.0
  %2912 = vmatprep.subr.mxu0 0.0
  %2913 = vmatpush1.msra.mxu0 0.0
  %2914 = vmatprep.subr.mxu0 0.0
  %2915 = vmatpush1.msra.mxu0 0.0
  %2916 = vmatprep.subr.mxu0 0.0
  %2917 = vmatpush1.msra.mxu0 0.0
  %2918 = vmatprep.subr.mxu0 0.0
  %2919 = vmatpush1.msra.mxu0 0.0
  %2920 = vmatprep.subr.mxu0 0.0
  %2921 = vmatpush1.msra.mxu0 0.0
  %2922 = vmatprep.subr.mxu0 0.0
  %2923 = vmatpush1.msra.mxu0 0.0
  %2924 = vmatprep.subr.mxu0 0.0
  %2925 = vmatpush1.msra.mxu0 0.0
  %2926 = vmatprep.subr.mxu0 0.0
  %2927 = vmatpush1.msra.mxu0 0.0
  %2928 = vmatprep.subr.mxu0 0.0
  %2929 = vmatpush1.msra.mxu0 0.0
  %2930 = vmatprep.subr.mxu0 0.0
  %2931 = vmatpush1.msra.mxu0 0.0
  %2932 = vmatprep.subr.mxu0 0.0
  %2933 = vmatpush1.msra.mxu0 %v2901
  %2934 = vmatprep.subr.mxu0 0.0
  %2935 = vmatpush1.msra.mxu0 %v2900
  %2936 = vmatprep.subr.mxu0 0.0
  %2937 = vmatpush1.msra.mxu0 %v2899
  %2938 = vmatprep.subr.mxu0 0.0
  %2939 = vmatpush1.msra.mxu0 %v2898
  %2940 = vmatprep.subr.mxu0 0.0
  %2941 = vmatpush2.msra.mxu0 0.0
  %2942 = vmatprep.subr.mxu0 0.0
  %2943 = vmatpush2.msra.mxu0 0.0
  %2944 = vmatprep.subr.mxu0 0.0
  %2945 = vmatpush2.msra.mxu0 0.0
  %2946 = vmatprep.subr.mxu0 0.0
  %2947 = vmatpush2.msra.mxu0 0.0
  %2948 = vmatprep.subr.mxu0 0.0
  %2949 = vmatpush2.msra.mxu0 0.0
  %2950 = vmatprep.subr.mxu0 0.0
  %2951 = vmatpush2.msra.mxu0 0.0
  %2952 = vmatprep.subr.mxu0 0.0
  %2953 = vmatpush2.msra.mxu0 0.0
  %2954 = vmatprep.subr.mxu0 0.0
  %2955 = vmatpush2.msra.mxu0 0.0
  %2956 = vmatprep.subr.mxu0 0.0
  %2957 = vmatpush2.msra.mxu0 0.0
  %2958 = vmatprep.subr.mxu0 0.0
  %2959 = vmatpush2.msra.mxu0 0.0
  %2960 = vmatprep.subr.mxu0 0.0
  %2961 = vmatpush2.msra.mxu0 0.0
  %2962 = vmatprep.subr.mxu0 0.0
  %2963 = vmatpush2.msra.mxu0 0.0
  %2964 = vmatprep.subr.mxu0 0.0
  %2965 = vmatpush2.msra.mxu0 0.0
  %2966 = vmatprep.subr.mxu0 0.0
  %2967 = vmatpush2.msra.mxu0 0.0
  %2968 = vmatprep.subr.mxu0 0.0
  %2969 = vmatpush2.msra.mxu0 0.0
  %2970 = vmatprep.subr.mxu0 0.0
  %2971 = vmatpush2.msra.mxu0 0.0
  %2972 = vmatprep.mubr.f32.mxu0 0.0
  %2973 = vmatmul.mubr.f32.gmra.mxu0 %v2903
  %v2974 = vpop.f32.mrf.mxu0
  %v2975 = vadd.f32 0.0, %v2974
  %v2976 = vpop.f32.mrf.mxu0
  %2977 = vmatprep.mubr.f32.mxu0 0.0
  %2978 = vmatmul.mubr.f32.gmra.mxu0 %v2906
  %v2979 = vpop.f32.mrf.mxu0
  %v2980 = vadd.f32 0.0, %v2979
  %v2981 = vpop.f32.mrf.mxu0
  %2982 = vdwg.mxu0
  %v2984 = vsel %vm31, %v2804, 0
  %v2987 = vsel %vm31, %v2805, 0
  %2989 = vmatprep.subr.mxu0 0.0
  %2990 = vmatpush1.msra.mxu0 0.0
  %2991 = vmatprep.subr.mxu0 0.0
  %2992 = vmatpush1.msra.mxu0 0.0
  %2993 = vmatprep.subr.mxu0 0.0
  %2994 = vmatpush1.msra.mxu0 0.0
  %2995 = vmatprep.subr.mxu0 0.0
  %2996 = vmatpush1.msra.mxu0 0.0
  %2997 = vmatprep.subr.mxu0 0.0
  %2998 = vmatpush1.msra.mxu0 0.0
  %2999 = vmatprep.subr.mxu0 0.0
  %3000 = vmatpush1.msra.mxu0 0.0
  %3001 = vmatprep.subr.mxu0 0.0
  %3002 = vmatpush1.msra.mxu0 0.0
  %3003 = vmatprep.subr.mxu0 0.0
  %3004 = vmatpush1.msra.mxu0 0.0
  %3005 = vmatprep.subr.mxu0 0.0
  %3006 = vmatpush1.msra.mxu0 0.0
  %3007 = vmatprep.subr.mxu0 0.0
  %3008 = vmatpush1.msra.mxu0 0.0
  %3009 = vmatprep.subr.mxu0 0.0
  %3010 = vmatpush1.msra.mxu0 0.0
  %3011 = vmatprep.subr.mxu0 0.0
  %3012 = vmatpush1.msra.mxu0 0.0
  %3013 = vmatprep.subr.mxu0 0.0
  %3014 = vmatpush1.msra.mxu0 %v2896
  %3015 = vmatprep.subr.mxu0 0.0
  %3016 = vmatpush1.msra.mxu0 %v2895
  %3017 = vmatprep.subr.mxu0 0.0
  %3018 = vmatpush1.msra.mxu0 %v2894
  %3019 = vmatprep.subr.mxu0 0.0
  %3020 = vmatpush1.msra.mxu0 %v2893
  %3021 = vmatprep.subr.mxu0 0.0
  %3022 = vmatpush2.msra.mxu0 0.0
  %3023 = vmatprep.subr.mxu0 0.0
  %3024 = vmatpush2.msra.mxu0 0.0
  %3025 = vmatprep.subr.mxu0 0.0
  %3026 = vmatpush2.msra.mxu0 0.0
  %3027 = vmatprep.subr.mxu0 0.0
  %3028 = vmatpush2.msra.mxu0 0.0
  %3029 = vmatprep.subr.mxu0 0.0
  %3030 = vmatpush2.msra.mxu0 0.0
  %3031 = vmatprep.subr.mxu0 0.0
  %3032 = vmatpush2.msra.mxu0 0.0
  %3033 = vmatprep.subr.mxu0 0.0
  %3034 = vmatpush2.msra.mxu0 0.0
  %3035 = vmatprep.subr.mxu0 0.0
  %3036 = vmatpush2.msra.mxu0 0.0
  %3037 = vmatprep.subr.mxu0 0.0
  %3038 = vmatpush2.msra.mxu0 0.0
  %3039 = vmatprep.subr.mxu0 0.0
  %3040 = vmatpush2.msra.mxu0 0.0
  %3041 = vmatprep.subr.mxu0 0.0
  %3042 = vmatpush2.msra.mxu0 0.0
  %3043 = vmatprep.subr.mxu0 0.0
  %3044 = vmatpush2.msra.mxu0 0.0
  %3045 = vmatprep.subr.mxu0 0.0
  %3046 = vmatpush2.msra.mxu0 0.0
  %3047 = vmatprep.subr.mxu0 0.0
  %3048 = vmatpush2.msra.mxu0 0.0
  %3049 = vmatprep.subr.mxu0 0.0
  %3050 = vmatpush2.msra.mxu0 0.0
  %3051 = vmatprep.subr.mxu0 0.0
  %3052 = vmatpush2.msra.mxu0 0.0
  %3053 = vmatprep.mubr.f32.mxu0 0.0
  %3054 = vmatmul.mubr.f32.gmra.mxu0 %v2984
  %v3055 = vpop.f32.mrf.mxu0
  %v3056 = vadd.f32 %v2975, %v3055
  %v3057 = vpop.f32.mrf.mxu0
  %3058 = vmatprep.mubr.f32.mxu0 0.0
  %3059 = vmatmul.mubr.f32.gmra.mxu0 %v2987
  %v3060 = vpop.f32.mrf.mxu0
  %v3061 = vadd.f32 %v2980, %v3060
  %v3062 = vpop.f32.mrf.mxu0
  %3063 = vdwg.mxu0
  %v3064 = vlaneseq
  %v3065 = vshrl.u32 %v3064, 7
  %v3066 = vsub.s32 5, %v3065
  %v3067 = vrot.slane %v21, %v3066
  %v3068 = vadd.f32 %v3056, %v3067
  %v3069 = vadd.f32 %v3061, %v3067
  %v3070 = vadd.f32 %v2674, %v3068
  %v3071 = vadd.f32 %v2675, %v3069
  %v3072 = vld [vmem:[%s3] sm:$0xff]
  %v3073 = vld [vmem:[%s3 + $0x8] sm:$0x3]
  %v3074 = vld [vmem:[%s4] sm:$0xff]
  %v3075 = vld [vmem:[%s4 + $0x8] sm:$0xff]
  %v3076 = vld [vmem:[%s4 + $0x10] sm:$0xff]
  %s3077 = scalar_lea.vmem %s1, 768
  %v3078 = vld [vmem:[%s3077] sm:$0xff]
  %v3079 = vld [vmem:[%s3077 + $0x8] sm:$0xff]
  %v3080 = vld [vmem:[%s3077 + $0x10] sm:$0xff]
  %v3081 = vld [vmem:[%s3077 + $0x18] sm:$0xff]
  %s3082 = scalar_lea.vmem %s1, 800
  %v3083 = vld [vmem:[%s3082] sm:$0xff]
  %v3084 = vld [vmem:[%s3082 + $0x8] sm:$0xff]
  %v3085 = vld [vmem:[%s3082 + $0x10] sm:$0xff]
  %v3086 = vld [vmem:[%s3082 + $0x18] sm:$0xff]
  %s3087 = scalar_lea.vmem %s1, 832
  %v3088 = vld [vmem:[%s3087] sm:$0xff]
  %v3089 = vld [vmem:[%s3087 + $0x8] sm:$0xff]
  %v3090 = vld [vmem:[%s3087 + $0x10] sm:$0xff]
  %v3091 = vld [vmem:[%s3087 + $0x18] sm:$0xff]
  %v3092 = vlaneseq
  %v3093 = vshrl.u32 %v3092, 7
  %v3094 = vsub.s32 6, %v3093
  %v3095 = vrot.slane %v21, %v3094
  %v3096 = vlaneseq
  %v3097 = vshrl.u32 %v3096, 7
  %v3098 = vsub.s32 7, %v3097
  %v3099 = vrot.slane %v21, %v3098
  %v3100 = vlaneseq
  %v3101 = vshrl.u32 %v3100, 7
  %v3102 = vsub.s32 0, %v3101
  %v3103 = vrot.slane %v22, %v3102
  %v3105 = vsel %vm31, %v3070, 0
  %v3108 = vsel %vm31, %v3071, 0
  %3110 = vmatprep.subr.mxu0 0.0
  %3111 = vmatpush1.msra.mxu0 0.0
  %3112 = vmatprep.subr.mxu0 0.0
  %3113 = vmatpush1.msra.mxu0 0.0
  %3114 = vmatprep.subr.mxu0 0.0
  %3115 = vmatpush1.msra.mxu0 0.0
  %3116 = vmatprep.subr.mxu0 0.0
  %3117 = vmatpush1.msra.mxu0 0.0
  %3118 = vmatprep.subr.mxu0 0.0
  %3119 = vmatpush1.msra.mxu0 0.0
  %3120 = vmatprep.subr.mxu0 0.0
  %3121 = vmatpush1.msra.mxu0 0.0
  %3122 = vmatprep.subr.mxu0 0.0
  %3123 = vmatpush1.msra.mxu0 0.0
  %3124 = vmatprep.subr.mxu0 0.0
  %3125 = vmatpush1.msra.mxu0 0.0
  %3126 = vmatprep.subr.mxu0 0.0
  %3127 = vmatpush1.msra.mxu0 0.0
  %3128 = vmatprep.subr.mxu0 0.0
  %3129 = vmatpush1.msra.mxu0 0.0
  %3130 = vmatprep.subr.mxu0 0.0
  %3131 = vmatpush1.msra.mxu0 0.0
  %3132 = vmatprep.subr.mxu0 0.0
  %3133 = vmatpush1.msra.mxu0 0.0
  %3134 = vmatprep.subr.mxu0 0.0
  %3135 = vmatpush1.msra.mxu0 %v3081
  %3136 = vmatprep.subr.mxu0 0.0
  %3137 = vmatpush1.msra.mxu0 %v3080
  %3138 = vmatprep.subr.mxu0 0.0
  %3139 = vmatpush1.msra.mxu0 %v3079
  %3140 = vmatprep.subr.mxu0 0.0
  %3141 = vmatpush1.msra.mxu0 %v3078
  %3142 = vmatprep.subr.mxu0 0.0
  %3143 = vmatpush2.msra.mxu0 0.0
  %3144 = vmatprep.subr.mxu0 0.0
  %3145 = vmatpush2.msra.mxu0 0.0
  %3146 = vmatprep.subr.mxu0 0.0
  %3147 = vmatpush2.msra.mxu0 0.0
  %3148 = vmatprep.subr.mxu0 0.0
  %3149 = vmatpush2.msra.mxu0 0.0
  %3150 = vmatprep.subr.mxu0 0.0
  %3151 = vmatpush2.msra.mxu0 0.0
  %3152 = vmatprep.subr.mxu0 0.0
  %3153 = vmatpush2.msra.mxu0 0.0
  %3154 = vmatprep.subr.mxu0 0.0
  %3155 = vmatpush2.msra.mxu0 0.0
  %3156 = vmatprep.subr.mxu0 0.0
  %3157 = vmatpush2.msra.mxu0 0.0
  %3158 = vmatprep.subr.mxu0 0.0
  %3159 = vmatpush2.msra.mxu0 0.0
  %3160 = vmatprep.subr.mxu0 0.0
  %3161 = vmatpush2.msra.mxu0 0.0
  %3162 = vmatprep.subr.mxu0 0.0
  %3163 = vmatpush2.msra.mxu0 0.0
  %3164 = vmatprep.subr.mxu0 0.0
  %3165 = vmatpush2.msra.mxu0 0.0
  %3166 = vmatprep.subr.mxu0 0.0
  %3167 = vmatpush2.msra.mxu0 0.0
  %3168 = vmatprep.subr.mxu0 0.0
  %3169 = vmatpush2.msra.mxu0 0.0
  %3170 = vmatprep.subr.mxu0 0.0
  %3171 = vmatpush2.msra.mxu0 0.0
  %3172 = vmatprep.subr.mxu0 0.0
  %3173 = vmatpush2.msra.mxu0 0.0
  %3174 = vmatprep.mubr.f32.mxu0 0.0
  %3175 = vmatmul.mubr.f32.gmra.mxu0 %v3105
  %v3176 = vpop.f32.mrf.mxu0
  %v3177 = vadd.f32 %v3095, %v3176
  %v3178 = vpop.f32.mrf.mxu0
  %3179 = vmatprep.mubr.f32.mxu0 0.0
  %3180 = vmatmul.mubr.f32.gmra.mxu0 %v3108
  %v3181 = vpop.f32.mrf.mxu0
  %v3182 = vadd.f32 %v3095, %v3181
  %v3183 = vpop.f32.mrf.mxu0
  %3184 = vdwg.mxu0
  %v3185 = vmax.f32 %v3177, 0.0
  %v3186 = vmax.f32 %v3182, 0.0
  %v3188 = vsel %vm494, %v3072, 0
  %3190 = vmatprep.subr.mxu0 0.0
  %3191 = vmatpush1.msra.mxu0 0.0
  %3192 = vmatprep.subr.mxu0 0.0
  %3193 = vmatpush1.msra.mxu0 0.0
  %3194 = vmatprep.subr.mxu0 0.0
  %3195 = vmatpush1.msra.mxu0 0.0
  %3196 = vmatprep.subr.mxu0 0.0
  %3197 = vmatpush1.msra.mxu0 0.0
  %3198 = vmatprep.subr.mxu0 0.0
  %3199 = vmatpush1.msra.mxu0 0.0
  %3200 = vmatprep.subr.mxu0 0.0
  %3201 = vmatpush1.msra.mxu0 0.0
  %3202 = vmatprep.subr.mxu0 0.0
  %3203 = vmatpush1.msra.mxu0 0.0
  %3204 = vmatprep.subr.mxu0 0.0
  %3205 = vmatpush1.msra.mxu0 0.0
  %3206 = vmatprep.subr.mxu0 0.0
  %3207 = vmatpush1.msra.mxu0 0.0
  %3208 = vmatprep.subr.mxu0 0.0
  %3209 = vmatpush1.msra.mxu0 0.0
  %3210 = vmatprep.subr.mxu0 0.0
  %3211 = vmatpush1.msra.mxu0 0.0
  %3212 = vmatprep.subr.mxu0 0.0
  %3213 = vmatpush1.msra.mxu0 0.0
  %3214 = vmatprep.subr.mxu0 0.0
  %3215 = vmatpush1.msra.mxu0 0.0
  %3216 = vmatprep.subr.mxu0 0.0
  %3217 = vmatpush1.msra.mxu0 0.0
  %3218 = vmatprep.subr.mxu0 0.0
  %3219 = vmatpush1.msra.mxu0 %v3186
  %3220 = vmatprep.subr.mxu0 0.0
  %3221 = vmatpush1.msra.mxu0 %v3185
  %3222 = vmatprep.subr.mxu0 0.0
  %3223 = vmatpush2.msra.mxu0 0.0
  %3224 = vmatprep.subr.mxu0 0.0
  %3225 = vmatpush2.msra.mxu0 0.0
  %3226 = vmatprep.subr.mxu0 0.0
  %3227 = vmatpush2.msra.mxu0 0.0
  %3228 = vmatprep.subr.mxu0 0.0
  %3229 = vmatpush2.msra.mxu0 0.0
  %3230 = vmatprep.subr.mxu0 0.0
  %3231 = vmatpush2.msra.mxu0 0.0
  %3232 = vmatprep.subr.mxu0 0.0
  %3233 = vmatpush2.msra.mxu0 0.0
  %3234 = vmatprep.subr.mxu0 0.0
  %3235 = vmatpush2.msra.mxu0 0.0
  %3236 = vmatprep.subr.mxu0 0.0
  %3237 = vmatpush2.msra.mxu0 0.0
  %3238 = vmatprep.subr.mxu0 0.0
  %3239 = vmatpush2.msra.mxu0 0.0
  %3240 = vmatprep.subr.mxu0 0.0
  %3241 = vmatpush2.msra.mxu0 0.0
  %3242 = vmatprep.subr.mxu0 0.0
  %3243 = vmatpush2.msra.mxu0 0.0
  %3244 = vmatprep.subr.mxu0 0.0
  %3245 = vmatpush2.msra.mxu0 0.0
  %3246 = vmatprep.subr.mxu0 0.0
  %3247 = vmatpush2.msra.mxu0 0.0
  %3248 = vmatprep.subr.mxu0 0.0
  %3249 = vmatpush2.msra.mxu0 0.0
  %3250 = vmatprep.subr.mxu0 0.0
  %3251 = vmatpush2.msra.mxu0 0.0
  %3252 = vmatprep.subr.mxu0 0.0
  %3253 = vmatpush2.msra.mxu0 0.0
  %3254 = vmatprep.mubr.f32.mxu0 0.0
  %3255 = vmatmul.mubr.f32.gmra.mxu0 %v3188
  %v3256 = vpop.f32.mrf.mxu0
  %v3257 = vadd.f32 0.0, %v3256
  %v3258 = vpop.f32.mrf.mxu0
  %3259 = vdwg.mxu0
  %3261 = vset.pattern.permute.xlu0 0
  %3262 = vperm.xlu0 %3261, %v3074
  %v3263 = vpop.permute.xlu0 %3262
  %v3265 = vmul.f32 %v3257, %v3263
  %v3267 = vsel %vm31, %v3265, 0
  %3269 = vmatprep.subr.mxu0 0.0
  %3270 = vmatpush1.msra.mxu0 0.0
  %3271 = vmatprep.subr.mxu0 0.0
  %3272 = vmatpush1.msra.mxu0 0.0
  %3273 = vmatprep.subr.mxu0 0.0
  %3274 = vmatpush1.msra.mxu0 0.0
  %3275 = vmatprep.subr.mxu0 0.0
  %3276 = vmatpush1.msra.mxu0 0.0
  %3277 = vmatprep.subr.mxu0 0.0
  %3278 = vmatpush1.msra.mxu0 0.0
  %3279 = vmatprep.subr.mxu0 0.0
  %3280 = vmatpush1.msra.mxu0 0.0
  %3281 = vmatprep.subr.mxu0 0.0
  %3282 = vmatpush1.msra.mxu0 0.0
  %3283 = vmatprep.subr.mxu0 0.0
  %3284 = vmatpush1.msra.mxu0 0.0
  %3285 = vmatprep.subr.mxu0 0.0
  %3286 = vmatpush1.msra.mxu0 0.0
  %3287 = vmatprep.subr.mxu0 0.0
  %3288 = vmatpush1.msra.mxu0 0.0
  %3289 = vmatprep.subr.mxu0 0.0
  %3290 = vmatpush1.msra.mxu0 0.0
  %3291 = vmatprep.subr.mxu0 0.0
  %3292 = vmatpush1.msra.mxu0 0.0
  %3293 = vmatprep.subr.mxu0 0.0
  %3294 = vmatpush1.msra.mxu0 %v3086
  %3295 = vmatprep.subr.mxu0 0.0
  %3296 = vmatpush1.msra.mxu0 %v3085
  %3297 = vmatprep.subr.mxu0 0.0
  %3298 = vmatpush1.msra.mxu0 %v3084
  %3299 = vmatprep.subr.mxu0 0.0
  %3300 = vmatpush1.msra.mxu0 %v3083
  %3301 = vmatprep.subr.mxu0 0.0
  %3302 = vmatpush2.msra.mxu0 0.0
  %3303 = vmatprep.subr.mxu0 0.0
  %3304 = vmatpush2.msra.mxu0 0.0
  %3305 = vmatprep.subr.mxu0 0.0
  %3306 = vmatpush2.msra.mxu0 0.0
  %3307 = vmatprep.subr.mxu0 0.0
  %3308 = vmatpush2.msra.mxu0 0.0
  %3309 = vmatprep.subr.mxu0 0.0
  %3310 = vmatpush2.msra.mxu0 0.0
  %3311 = vmatprep.subr.mxu0 0.0
  %3312 = vmatpush2.msra.mxu0 0.0
  %3313 = vmatprep.subr.mxu0 0.0
  %3314 = vmatpush2.msra.mxu0 0.0
  %3315 = vmatprep.subr.mxu0 0.0
  %3316 = vmatpush2.msra.mxu0 0.0
  %3317 = vmatprep.subr.mxu0 0.0
  %3318 = vmatpush2.msra.mxu0 0.0
  %3319 = vmatprep.subr.mxu0 0.0
  %3320 = vmatpush2.msra.mxu0 0.0
  %3321 = vmatprep.subr.mxu0 0.0
  %3322 = vmatpush2.msra.mxu0 0.0
  %3323 = vmatprep.subr.mxu0 0.0
  %3324 = vmatpush2.msra.mxu0 0.0
  %3325 = vmatprep.subr.mxu0 0.0
  %3326 = vmatpush2.msra.mxu0 0.0
  %3327 = vmatprep.subr.mxu0 0.0
  %3328 = vmatpush2.msra.mxu0 0.0
  %3329 = vmatprep.subr.mxu0 0.0
  %3330 = vmatpush2.msra.mxu0 0.0
  %3331 = vmatprep.subr.mxu0 0.0
  %3332 = vmatpush2.msra.mxu0 0.0
  %3333 = vmatprep.mubr.f32.mxu0 0.0
  %3334 = vmatmul.mubr.f32.gmra.mxu0 %v3267
  %v3335 = vpop.f32.mrf.mxu0
  %v3336 = vadd.f32 %v3099, %v3335
  %v3337 = vpop.f32.mrf.mxu0
  %3338 = vdwg.mxu0
  %v3339 = vmax.f32 %v3336, 0.0
  %3340 = vxpose.xlu0.b32.start [1/16] %v3072, 128
  %3341 = vxpose.xlu0.b32.cont [2/16] 0.0, 128
  %3342 = vxpose.xlu0.b32.cont [3/16] 0.0, 128
  %3343 = vxpose.xlu0.b32.cont [4/16] 0.0, 128
  %3344 = vxpose.xlu0.b32.cont [5/16] 0.0, 128
  %3345 = vxpose.xlu0.b32.cont [6/16] 0.0, 128
  %3346 = vxpose.xlu0.b32.cont [7/16] 0.0, 128
  %3347 = vxpose.xlu0.b32.cont [8/16] 0.0, 128
  %3348 = vxpose.xlu0.b32.cont [9/16] 0.0, 128
  %3349 = vxpose.xlu0.b32.cont [10/16] 0.0, 128
  %3350 = vxpose.xlu0.b32.cont [11/16] 0.0, 128
  %3351 = vxpose.xlu0.b32.cont [12/16] 0.0, 128
  %3352 = vxpose.xlu0.b32.cont [13/16] 0.0, 128
  %3353 = vxpose.xlu0.b32.cont [14/16] 0.0, 128
  %3354 = vxpose.xlu0.b32.cont [15/16] 0.0, 128
  %3355 = vxpose.xlu0.b32.end [16/16] 0.0, 128
  %v3356 = vpop.trf.xlu0
  %v3357 = vpop.trf.xlu0
  %v3358 = vpop.trf.xlu0
  %v3359 = vpop.trf.xlu0
  %v3360 = vpop.trf.xlu0
  %v3361 = vpop.trf.xlu0
  %v3362 = vpop.trf.xlu0
  %v3363 = vpop.trf.xlu0
  %v3364 = vpop.trf.xlu0
  %v3365 = vpop.trf.xlu0
  %v3366 = vpop.trf.xlu0
  %v3367 = vpop.trf.xlu0
  %v3368 = vpop.trf.xlu0
  %v3369 = vpop.trf.xlu0
  %v3370 = vpop.trf.xlu0
  %v3371 = vpop.trf.xlu0
  %vm3372 = vcmask 64512
  %v3374 = vsel %vm3372, %v3356, 0
  %v3377 = vsel %vm3372, %v3357, 0
  %3379 = vmatprep.subr.mxu0 0.0
  %3380 = vmatpush1.msra.mxu0 0.0
  %3381 = vmatprep.subr.mxu0 0.0
  %3382 = vmatpush1.msra.mxu0 0.0
  %3383 = vmatprep.subr.mxu0 0.0
  %3384 = vmatpush1.msra.mxu0 0.0
  %3385 = vmatprep.subr.mxu0 0.0
  %3386 = vmatpush1.msra.mxu0 0.0
  %3387 = vmatprep.subr.mxu0 0.0
  %3388 = vmatpush1.msra.mxu0 0.0
  %3389 = vmatprep.subr.mxu0 0.0
  %3390 = vmatpush1.msra.mxu0 0.0
  %3391 = vmatprep.subr.mxu0 0.0
  %3392 = vmatpush1.msra.mxu0 0.0
  %3393 = vmatprep.subr.mxu0 0.0
  %3394 = vmatpush1.msra.mxu0 0.0
  %3395 = vmatprep.subr.mxu0 0.0
  %3396 = vmatpush1.msra.mxu0 0.0
  %3397 = vmatprep.subr.mxu0 0.0
  %3398 = vmatpush1.msra.mxu0 0.0
  %3399 = vmatprep.subr.mxu0 0.0
  %3400 = vmatpush1.msra.mxu0 0.0
  %3401 = vmatprep.subr.mxu0 0.0
  %3402 = vmatpush1.msra.mxu0 0.0
  %3403 = vmatprep.subr.mxu0 0.0
  %3404 = vmatpush1.msra.mxu0 0.0
  %3405 = vmatprep.subr.mxu0 0.0
  %3406 = vmatpush1.msra.mxu0 0.0
  %3407 = vmatprep.subr.mxu0 0.0
  %3408 = vmatpush1.msra.mxu0 0.0
  %3409 = vmatprep.subr.mxu0 0.0
  %3410 = vmatpush1.msra.mxu0 %v3339
  %3411 = vmatprep.subr.mxu0 0.0
  %3412 = vmatpush2.msra.mxu0 0.0
  %3413 = vmatprep.subr.mxu0 0.0
  %3414 = vmatpush2.msra.mxu0 0.0
  %3415 = vmatprep.subr.mxu0 0.0
  %3416 = vmatpush2.msra.mxu0 0.0
  %3417 = vmatprep.subr.mxu0 0.0
  %3418 = vmatpush2.msra.mxu0 0.0
  %3419 = vmatprep.subr.mxu0 0.0
  %3420 = vmatpush2.msra.mxu0 0.0
  %3421 = vmatprep.subr.mxu0 0.0
  %3422 = vmatpush2.msra.mxu0 0.0
  %3423 = vmatprep.subr.mxu0 0.0
  %3424 = vmatpush2.msra.mxu0 0.0
  %3425 = vmatprep.subr.mxu0 0.0
  %3426 = vmatpush2.msra.mxu0 0.0
  %3427 = vmatprep.subr.mxu0 0.0
  %3428 = vmatpush2.msra.mxu0 0.0
  %3429 = vmatprep.subr.mxu0 0.0
  %3430 = vmatpush2.msra.mxu0 0.0
  %3431 = vmatprep.subr.mxu0 0.0
  %3432 = vmatpush2.msra.mxu0 0.0
  %3433 = vmatprep.subr.mxu0 0.0
  %3434 = vmatpush2.msra.mxu0 0.0
  %3435 = vmatprep.subr.mxu0 0.0
  %3436 = vmatpush2.msra.mxu0 0.0
  %3437 = vmatprep.subr.mxu0 0.0
  %3438 = vmatpush2.msra.mxu0 0.0
  %3439 = vmatprep.subr.mxu0 0.0
  %3440 = vmatpush2.msra.mxu0 0.0
  %3441 = vmatprep.subr.mxu0 0.0
  %3442 = vmatpush2.msra.mxu0 0.0
  %3443 = vmatprep.mubr.f32.mxu0 0.0
  %3444 = vmatmul.mubr.f32.gmra.mxu0 %v3374
  %v3445 = vpop.f32.mrf.mxu0
  %v3446 = vadd.f32 0.0, %v3445
  %v3447 = vpop.f32.mrf.mxu0
  %3448 = vmatprep.mubr.f32.mxu0 0.0
  %3449 = vmatmul.mubr.f32.gmra.mxu0 %v3377
  %v3450 = vpop.f32.mrf.mxu0
  %v3451 = vadd.f32 0.0, %v3450
  %v3452 = vpop.f32.mrf.mxu0
  %3453 = vdwg.mxu0
  %3455 = vset.pattern.permute.xlu0 0
  %3456 = vperm.xlu0 %3455, %v3075
  %v3457 = vpop.permute.xlu0 %3456
  %3460 = vset.pattern.permute.xlu0 0
  %3461 = vperm.xlu0 %3460, %v3076
  %v3462 = vpop.permute.xlu0 %3461
  %v3464 = vmul.f32 %v3446, %v3457
  %v3465 = vmul.f32 %v3451, %v3462
  %v3466 = vadd.f32 %v3464, %v3070
  %v3467 = vadd.f32 %v3465, %v3071
  %v3469 = vsel %vm31, %v3466, 0
  %v3472 = vsel %vm31, %v3467, 0
  %3474 = vmatprep.subr.mxu0 0.0
  %3475 = vmatpush1.msra.mxu0 0.0
  %3476 = vmatprep.subr.mxu0 0.0
  %3477 = vmatpush1.msra.mxu0 0.0
  %3478 = vmatprep.subr.mxu0 0.0
  %3479 = vmatpush1.msra.mxu0 0.0
  %3480 = vmatprep.subr.mxu0 0.0
  %3481 = vmatpush1.msra.mxu0 0.0
  %3482 = vmatprep.subr.mxu0 0.0
  %3483 = vmatpush1.msra.mxu0 0.0
  %3484 = vmatprep.subr.mxu0 0.0
  %3485 = vmatpush1.msra.mxu0 0.0
  %3486 = vmatprep.subr.mxu0 0.0
  %3487 = vmatpush1.msra.mxu0 0.0
  %3488 = vmatprep.subr.mxu0 0.0
  %3489 = vmatpush1.msra.mxu0 0.0
  %3490 = vmatprep.subr.mxu0 0.0
  %3491 = vmatpush1.msra.mxu0 0.0
  %3492 = vmatprep.subr.mxu0 0.0
  %3493 = vmatpush1.msra.mxu0 0.0
  %3494 = vmatprep.subr.mxu0 0.0
  %3495 = vmatpush1.msra.mxu0 0.0
  %3496 = vmatprep.subr.mxu0 0.0
  %3497 = vmatpush1.msra.mxu0 0.0
  %3498 = vmatprep.subr.mxu0 0.0
  %3499 = vmatpush1.msra.mxu0 %v3091
  %3500 = vmatprep.subr.mxu0 0.0
  %3501 = vmatpush1.msra.mxu0 %v3090
  %3502 = vmatprep.subr.mxu0 0.0
  %3503 = vmatpush1.msra.mxu0 %v3089
  %3504 = vmatprep.subr.mxu0 0.0
  %3505 = vmatpush1.msra.mxu0 %v3088
  %3506 = vmatprep.subr.mxu0 0.0
  %3507 = vmatpush2.msra.mxu0 0.0
  %3508 = vmatprep.subr.mxu0 0.0
  %3509 = vmatpush2.msra.mxu0 0.0
  %3510 = vmatprep.subr.mxu0 0.0
  %3511 = vmatpush2.msra.mxu0 0.0
  %3512 = vmatprep.subr.mxu0 0.0
  %3513 = vmatpush2.msra.mxu0 0.0
  %3514 = vmatprep.subr.mxu0 0.0
  %3515 = vmatpush2.msra.mxu0 0.0
  %3516 = vmatprep.subr.mxu0 0.0
  %3517 = vmatpush2.msra.mxu0 0.0
  %3518 = vmatprep.subr.mxu0 0.0
  %3519 = vmatpush2.msra.mxu0 0.0
  %3520 = vmatprep.subr.mxu0 0.0
  %3521 = vmatpush2.msra.mxu0 0.0
  %3522 = vmatprep.subr.mxu0 0.0
  %3523 = vmatpush2.msra.mxu0 0.0
  %3524 = vmatprep.subr.mxu0 0.0
  %3525 = vmatpush2.msra.mxu0 0.0
  %3526 = vmatprep.subr.mxu0 0.0
  %3527 = vmatpush2.msra.mxu0 0.0
  %3528 = vmatprep.subr.mxu0 0.0
  %3529 = vmatpush2.msra.mxu0 0.0
  %3530 = vmatprep.subr.mxu0 0.0
  %3531 = vmatpush2.msra.mxu0 0.0
  %3532 = vmatprep.subr.mxu0 0.0
  %3533 = vmatpush2.msra.mxu0 0.0
  %3534 = vmatprep.subr.mxu0 0.0
  %3535 = vmatpush2.msra.mxu0 0.0
  %3536 = vmatprep.subr.mxu0 0.0
  %3537 = vmatpush2.msra.mxu0 0.0
  %3538 = vmatprep.mubr.f32.mxu0 0.0
  %3539 = vmatmul.mubr.f32.gmra.mxu0 %v3469
  %v3540 = vpop.f32.mrf.mxu0
  %v3541 = vadd.f32 %v3103, %v3540
  %v3542 = vpop.f32.mrf.mxu0
  %3543 = vmatprep.mubr.f32.mxu0 0.0
  %3544 = vmatmul.mubr.f32.gmra.mxu0 %v3472
  %v3545 = vpop.f32.mrf.mxu0
  %v3546 = vadd.f32 %v3103, %v3545
  %v3547 = vpop.f32.mrf.mxu0
  %3548 = vdwg.mxu0
  %v3549 = vmax.f32 %v3541, 0.0
  %v3550 = vmax.f32 %v3546, 0.0
  %v3552 = vsel %vm31, %v3549, 0
  %v3555 = vsel %vm31, %v3550, 0
  %3557 = vmatprep.subr.mxu0 0.0
  %3558 = vmatpush1.msra.mxu0 0.0
  %3559 = vmatprep.subr.mxu0 0.0
  %3560 = vmatpush1.msra.mxu0 0.0
  %3561 = vmatprep.subr.mxu0 0.0
  %3562 = vmatpush1.msra.mxu0 0.0
  %3563 = vmatprep.subr.mxu0 0.0
  %3564 = vmatpush1.msra.mxu0 0.0
  %3565 = vmatprep.subr.mxu0 0.0
  %3566 = vmatpush1.msra.mxu0 0.0
  %3567 = vmatprep.subr.mxu0 0.0
  %3568 = vmatpush1.msra.mxu0 0.0
  %3569 = vmatprep.subr.mxu0 0.0
  %3570 = vmatpush1.msra.mxu0 0.0
  %3571 = vmatprep.subr.mxu0 0.0
  %3572 = vmatpush1.msra.mxu0 0.0
  %3573 = vmatprep.subr.mxu0 0.0
  %3574 = vmatpush1.msra.mxu0 0.0
  %3575 = vmatprep.subr.mxu0 0.0
  %3576 = vmatpush1.msra.mxu0 0.0
  %3577 = vmatprep.subr.mxu0 0.0
  %3578 = vmatpush1.msra.mxu0 0.0
  %3579 = vmatprep.subr.mxu0 0.0
  %3580 = vmatpush1.msra.mxu0 0.0
  %3581 = vmatprep.subr.mxu0 0.0
  %3582 = vmatpush1.msra.mxu0 %v3081
  %3583 = vmatprep.subr.mxu0 0.0
  %3584 = vmatpush1.msra.mxu0 %v3080
  %3585 = vmatprep.subr.mxu0 0.0
  %3586 = vmatpush1.msra.mxu0 %v3079
  %3587 = vmatprep.subr.mxu0 0.0
  %3588 = vmatpush1.msra.mxu0 %v3078
  %3589 = vmatprep.subr.mxu0 0.0
  %3590 = vmatpush2.msra.mxu0 0.0
  %3591 = vmatprep.subr.mxu0 0.0
  %3592 = vmatpush2.msra.mxu0 0.0
  %3593 = vmatprep.subr.mxu0 0.0
  %3594 = vmatpush2.msra.mxu0 0.0
  %3595 = vmatprep.subr.mxu0 0.0
  %3596 = vmatpush2.msra.mxu0 0.0
  %3597 = vmatprep.subr.mxu0 0.0
  %3598 = vmatpush2.msra.mxu0 0.0
  %3599 = vmatprep.subr.mxu0 0.0
  %3600 = vmatpush2.msra.mxu0 0.0
  %3601 = vmatprep.subr.mxu0 0.0
  %3602 = vmatpush2.msra.mxu0 0.0
  %3603 = vmatprep.subr.mxu0 0.0
  %3604 = vmatpush2.msra.mxu0 0.0
  %3605 = vmatprep.subr.mxu0 0.0
  %3606 = vmatpush2.msra.mxu0 0.0
  %3607 = vmatprep.subr.mxu0 0.0
  %3608 = vmatpush2.msra.mxu0 0.0
  %3609 = vmatprep.subr.mxu0 0.0
  %3610 = vmatpush2.msra.mxu0 0.0
  %3611 = vmatprep.subr.mxu0 0.0
  %3612 = vmatpush2.msra.mxu0 0.0
  %3613 = vmatprep.subr.mxu0 0.0
  %3614 = vmatpush2.msra.mxu0 0.0
  %3615 = vmatprep.subr.mxu0 0.0
  %3616 = vmatpush2.msra.mxu0 0.0
  %3617 = vmatprep.subr.mxu0 0.0
  %3618 = vmatpush2.msra.mxu0 0.0
  %3619 = vmatprep.subr.mxu0 0.0
  %3620 = vmatpush2.msra.mxu0 0.0
  %3621 = vmatprep.mubr.f32.mxu0 0.0
  %3622 = vmatmul.mubr.f32.gmra.mxu0 %v3552
  %v3623 = vpop.f32.mrf.mxu0
  %v3624 = vadd.f32 %v3095, %v3623
  %v3625 = vpop.f32.mrf.mxu0
  %3626 = vmatprep.mubr.f32.mxu0 0.0
  %3627 = vmatmul.mubr.f32.gmra.mxu0 %v3555
  %v3628 = vpop.f32.mrf.mxu0
  %v3629 = vadd.f32 %v3095, %v3628
  %v3630 = vpop.f32.mrf.mxu0
  %3631 = vdwg.mxu0
  %v3632 = vmax.f32 %v3624, 0.0
  %v3633 = vmax.f32 %v3629, 0.0
  %3634 = vmatprep.subr.mxu0 0.0
  %3635 = vmatpush1.msra.mxu0 0.0
  %3636 = vmatprep.subr.mxu0 0.0
  %3637 = vmatpush1.msra.mxu0 0.0
  %3638 = vmatprep.subr.mxu0 0.0
  %3639 = vmatpush1.msra.mxu0 0.0
  %3640 = vmatprep.subr.mxu0 0.0
  %3641 = vmatpush1.msra.mxu0 0.0
  %3642 = vmatprep.subr.mxu0 0.0
  %3643 = vmatpush1.msra.mxu0 0.0
  %3644 = vmatprep.subr.mxu0 0.0
  %3645 = vmatpush1.msra.mxu0 0.0
  %3646 = vmatprep.subr.mxu0 0.0
  %3647 = vmatpush1.msra.mxu0 0.0
  %3648 = vmatprep.subr.mxu0 0.0
  %3649 = vmatpush1.msra.mxu0 0.0
  %3650 = vmatprep.subr.mxu0 0.0
  %3651 = vmatpush1.msra.mxu0 0.0
  %3652 = vmatprep.subr.mxu0 0.0
  %3653 = vmatpush1.msra.mxu0 0.0
  %3654 = vmatprep.subr.mxu0 0.0
  %3655 = vmatpush1.msra.mxu0 0.0
  %3656 = vmatprep.subr.mxu0 0.0
  %3657 = vmatpush1.msra.mxu0 0.0
  %3658 = vmatprep.subr.mxu0 0.0
  %3659 = vmatpush1.msra.mxu0 0.0
  %3660 = vmatprep.subr.mxu0 0.0
  %3661 = vmatpush1.msra.mxu0 0.0
  %3662 = vmatprep.subr.mxu0 0.0
  %3663 = vmatpush1.msra.mxu0 %v3633
  %3664 = vmatprep.subr.mxu0 0.0
  %3665 = vmatpush1.msra.mxu0 %v3632
  %3666 = vmatprep.subr.mxu0 0.0
  %3667 = vmatpush2.msra.mxu0 0.0
  %3668 = vmatprep.subr.mxu0 0.0
  %3669 = vmatpush2.msra.mxu0 0.0
  %3670 = vmatprep.subr.mxu0 0.0
  %3671 = vmatpush2.msra.mxu0 0.0
  %3672 = vmatprep.subr.mxu0 0.0
  %3673 = vmatpush2.msra.mxu0 0.0
  %3674 = vmatprep.subr.mxu0 0.0
  %3675 = vmatpush2.msra.mxu0 0.0
  %3676 = vmatprep.subr.mxu0 0.0
  %3677 = vmatpush2.msra.mxu0 0.0
  %3678 = vmatprep.subr.mxu0 0.0
  %3679 = vmatpush2.msra.mxu0 0.0
  %3680 = vmatprep.subr.mxu0 0.0
  %3681 = vmatpush2.msra.mxu0 0.0
  %3682 = vmatprep.subr.mxu0 0.0
  %3683 = vmatpush2.msra.mxu0 0.0
  %3684 = vmatprep.subr.mxu0 0.0
  %3685 = vmatpush2.msra.mxu0 0.0
  %3686 = vmatprep.subr.mxu0 0.0
  %3687 = vmatpush2.msra.mxu0 0.0
  %3688 = vmatprep.subr.mxu0 0.0
  %3689 = vmatpush2.msra.mxu0 0.0
  %3690 = vmatprep.subr.mxu0 0.0
  %3691 = vmatpush2.msra.mxu0 0.0
  %3692 = vmatprep.subr.mxu0 0.0
  %3693 = vmatpush2.msra.mxu0 0.0
  %3694 = vmatprep.subr.mxu0 0.0
  %3695 = vmatpush2.msra.mxu0 0.0
  %3696 = vmatprep.subr.mxu0 0.0
  %3697 = vmatpush2.msra.mxu0 0.0
  %3698 = vmatprep.mubr.f32.mxu0 0.0
  %3699 = vmatmul.mubr.f32.gmra.mxu0 %v3188
  %v3700 = vpop.f32.mrf.mxu0
  %v3701 = vadd.f32 0.0, %v3700
  %v3702 = vpop.f32.mrf.mxu0
  %3703 = vdwg.mxu0
  %v3704 = vmul.f32 %v3701, %v3263
  %v3706 = vsel %vm31, %v3704, 0
  %3708 = vmatprep.subr.mxu0 0.0
  %3709 = vmatpush1.msra.mxu0 0.0
  %3710 = vmatprep.subr.mxu0 0.0
  %3711 = vmatpush1.msra.mxu0 0.0
  %3712 = vmatprep.subr.mxu0 0.0
  %3713 = vmatpush1.msra.mxu0 0.0
  %3714 = vmatprep.subr.mxu0 0.0
  %3715 = vmatpush1.msra.mxu0 0.0
  %3716 = vmatprep.subr.mxu0 0.0
  %3717 = vmatpush1.msra.mxu0 0.0
  %3718 = vmatprep.subr.mxu0 0.0
  %3719 = vmatpush1.msra.mxu0 0.0
  %3720 = vmatprep.subr.mxu0 0.0
  %3721 = vmatpush1.msra.mxu0 0.0
  %3722 = vmatprep.subr.mxu0 0.0
  %3723 = vmatpush1.msra.mxu0 0.0
  %3724 = vmatprep.subr.mxu0 0.0
  %3725 = vmatpush1.msra.mxu0 0.0
  %3726 = vmatprep.subr.mxu0 0.0
  %3727 = vmatpush1.msra.mxu0 0.0
  %3728 = vmatprep.subr.mxu0 0.0
  %3729 = vmatpush1.msra.mxu0 0.0
  %3730 = vmatprep.subr.mxu0 0.0
  %3731 = vmatpush1.msra.mxu0 0.0
  %3732 = vmatprep.subr.mxu0 0.0
  %3733 = vmatpush1.msra.mxu0 %v3086
  %3734 = vmatprep.subr.mxu0 0.0
  %3735 = vmatpush1.msra.mxu0 %v3085
  %3736 = vmatprep.subr.mxu0 0.0
  %3737 = vmatpush1.msra.mxu0 %v3084
  %3738 = vmatprep.subr.mxu0 0.0
  %3739 = vmatpush1.msra.mxu0 %v3083
  %3740 = vmatprep.subr.mxu0 0.0
  %3741 = vmatpush2.msra.mxu0 0.0
  %3742 = vmatprep.subr.mxu0 0.0
  %3743 = vmatpush2.msra.mxu0 0.0
  %3744 = vmatprep.subr.mxu0 0.0
  %3745 = vmatpush2.msra.mxu0 0.0
  %3746 = vmatprep.subr.mxu0 0.0
  %3747 = vmatpush2.msra.mxu0 0.0
  %3748 = vmatprep.subr.mxu0 0.0
  %3749 = vmatpush2.msra.mxu0 0.0
  %3750 = vmatprep.subr.mxu0 0.0
  %3751 = vmatpush2.msra.mxu0 0.0
  %3752 = vmatprep.subr.mxu0 0.0
  %3753 = vmatpush2.msra.mxu0 0.0
  %3754 = vmatprep.subr.mxu0 0.0
  %3755 = vmatpush2.msra.mxu0 0.0
  %3756 = vmatprep.subr.mxu0 0.0
  %3757 = vmatpush2.msra.mxu0 0.0
  %3758 = vmatprep.subr.mxu0 0.0
  %3759 = vmatpush2.msra.mxu0 0.0
  %3760 = vmatprep.subr.mxu0 0.0
  %3761 = vmatpush2.msra.mxu0 0.0
  %3762 = vmatprep.subr.mxu0 0.0
  %3763 = vmatpush2.msra.mxu0 0.0
  %3764 = vmatprep.subr.mxu0 0.0
  %3765 = vmatpush2.msra.mxu0 0.0
  %3766 = vmatprep.subr.mxu0 0.0
  %3767 = vmatpush2.msra.mxu0 0.0
  %3768 = vmatprep.subr.mxu0 0.0
  %3769 = vmatpush2.msra.mxu0 0.0
  %3770 = vmatprep.subr.mxu0 0.0
  %3771 = vmatpush2.msra.mxu0 0.0
  %3772 = vmatprep.mubr.f32.mxu0 0.0
  %3773 = vmatmul.mubr.f32.gmra.mxu0 %v3706
  %v3774 = vpop.f32.mrf.mxu0
  %v3775 = vadd.f32 %v3099, %v3774
  %v3776 = vpop.f32.mrf.mxu0
  %3777 = vdwg.mxu0
  %v3778 = vmax.f32 %v3775, 0.0
  %3779 = vmatprep.subr.mxu0 0.0
  %3780 = vmatpush1.msra.mxu0 0.0
  %3781 = vmatprep.subr.mxu0 0.0
  %3782 = vmatpush1.msra.mxu0 0.0
  %3783 = vmatprep.subr.mxu0 0.0
  %3784 = vmatpush1.msra.mxu0 0.0
  %3785 = vmatprep.subr.mxu0 0.0
  %3786 = vmatpush1.msra.mxu0 0.0
  %3787 = vmatprep.subr.mxu0 0.0
  %3788 = vmatpush1.msra.mxu0 0.0
  %3789 = vmatprep.subr.mxu0 0.0
  %3790 = vmatpush1.msra.mxu0 0.0
  %3791 = vmatprep.subr.mxu0 0.0
  %3792 = vmatpush1.msra.mxu0 0.0
  %3793 = vmatprep.subr.mxu0 0.0
  %3794 = vmatpush1.msra.mxu0 0.0
  %3795 = vmatprep.subr.mxu0 0.0
  %3796 = vmatpush1.msra.mxu0 0.0
  %3797 = vmatprep.subr.mxu0 0.0
  %3798 = vmatpush1.msra.mxu0 0.0
  %3799 = vmatprep.subr.mxu0 0.0
  %3800 = vmatpush1.msra.mxu0 0.0
  %3801 = vmatprep.subr.mxu0 0.0
  %3802 = vmatpush1.msra.mxu0 0.0
  %3803 = vmatprep.subr.mxu0 0.0
  %3804 = vmatpush1.msra.mxu0 0.0
  %3805 = vmatprep.subr.mxu0 0.0
  %3806 = vmatpush1.msra.mxu0 0.0
  %3807 = vmatprep.subr.mxu0 0.0
  %3808 = vmatpush1.msra.mxu0 0.0
  %3809 = vmatprep.subr.mxu0 0.0
  %3810 = vmatpush1.msra.mxu0 %v3778
  %3811 = vmatprep.subr.mxu0 0.0
  %3812 = vmatpush2.msra.mxu0 0.0
  %3813 = vmatprep.subr.mxu0 0.0
  %3814 = vmatpush2.msra.mxu0 0.0
  %3815 = vmatprep.subr.mxu0 0.0
  %3816 = vmatpush2.msra.mxu0 0.0
  %3817 = vmatprep.subr.mxu0 0.0
  %3818 = vmatpush2.msra.mxu0 0.0
  %3819 = vmatprep.subr.mxu0 0.0
  %3820 = vmatpush2.msra.mxu0 0.0
  %3821 = vmatprep.subr.mxu0 0.0
  %3822 = vmatpush2.msra.mxu0 0.0
  %3823 = vmatprep.subr.mxu0 0.0
  %3824 = vmatpush2.msra.mxu0 0.0
  %3825 = vmatprep.subr.mxu0 0.0
  %3826 = vmatpush2.msra.mxu0 0.0
  %3827 = vmatprep.subr.mxu0 0.0
  %3828 = vmatpush2.msra.mxu0 0.0
  %3829 = vmatprep.subr.mxu0 0.0
  %3830 = vmatpush2.msra.mxu0 0.0
  %3831 = vmatprep.subr.mxu0 0.0
  %3832 = vmatpush2.msra.mxu0 0.0
  %3833 = vmatprep.subr.mxu0 0.0
  %3834 = vmatpush2.msra.mxu0 0.0
  %3835 = vmatprep.subr.mxu0 0.0
  %3836 = vmatpush2.msra.mxu0 0.0
  %3837 = vmatprep.subr.mxu0 0.0
  %3838 = vmatpush2.msra.mxu0 0.0
  %3839 = vmatprep.subr.mxu0 0.0
  %3840 = vmatpush2.msra.mxu0 0.0
  %3841 = vmatprep.subr.mxu0 0.0
  %3842 = vmatpush2.msra.mxu0 0.0
  %3843 = vmatprep.mubr.f32.mxu0 0.0
  %3844 = vmatmul.mubr.f32.gmra.mxu0 %v3374
  %v3845 = vpop.f32.mrf.mxu0
  %v3846 = vadd.f32 0.0, %v3845
  %v3847 = vpop.f32.mrf.mxu0
  %3848 = vmatprep.mubr.f32.mxu0 0.0
  %3849 = vmatmul.mubr.f32.gmra.mxu0 %v3377
  %v3850 = vpop.f32.mrf.mxu0
  %v3851 = vadd.f32 0.0, %v3850
  %v3852 = vpop.f32.mrf.mxu0
  %3853 = vdwg.mxu0
  %v3854 = vmul.f32 %v3846, %v3457
  %v3855 = vmul.f32 %v3851, %v3462
  %v3856 = vadd.f32 %v3854, %v3070
  %v3857 = vadd.f32 %v3855, %v3071
  %v3859 = vsel %vm31, %v3856, 0
  %v3862 = vsel %vm31, %v3857, 0
  %3864 = vmatprep.subr.mxu0 0.0
  %3865 = vmatpush1.msra.mxu0 0.0
  %3866 = vmatprep.subr.mxu0 0.0
  %3867 = vmatpush1.msra.mxu0 0.0
  %3868 = vmatprep.subr.mxu0 0.0
  %3869 = vmatpush1.msra.mxu0 0.0
  %3870 = vmatprep.subr.mxu0 0.0
  %3871 = vmatpush1.msra.mxu0 0.0
  %3872 = vmatprep.subr.mxu0 0.0
  %3873 = vmatpush1.msra.mxu0 0.0
  %3874 = vmatprep.subr.mxu0 0.0
  %3875 = vmatpush1.msra.mxu0 0.0
  %3876 = vmatprep.subr.mxu0 0.0
  %3877 = vmatpush1.msra.mxu0 0.0
  %3878 = vmatprep.subr.mxu0 0.0
  %3879 = vmatpush1.msra.mxu0 0.0
  %3880 = vmatprep.subr.mxu0 0.0
  %3881 = vmatpush1.msra.mxu0 0.0
  %3882 = vmatprep.subr.mxu0 0.0
  %3883 = vmatpush1.msra.mxu0 0.0
  %3884 = vmatprep.subr.mxu0 0.0
  %3885 = vmatpush1.msra.mxu0 0.0
  %3886 = vmatprep.subr.mxu0 0.0
  %3887 = vmatpush1.msra.mxu0 0.0
  %3888 = vmatprep.subr.mxu0 0.0
  %3889 = vmatpush1.msra.mxu0 %v3091
  %3890 = vmatprep.subr.mxu0 0.0
  %3891 = vmatpush1.msra.mxu0 %v3090
  %3892 = vmatprep.subr.mxu0 0.0
  %3893 = vmatpush1.msra.mxu0 %v3089
  %3894 = vmatprep.subr.mxu0 0.0
  %3895 = vmatpush1.msra.mxu0 %v3088
  %3896 = vmatprep.subr.mxu0 0.0
  %3897 = vmatpush2.msra.mxu0 0.0
  %3898 = vmatprep.subr.mxu0 0.0
  %3899 = vmatpush2.msra.mxu0 0.0
  %3900 = vmatprep.subr.mxu0 0.0
  %3901 = vmatpush2.msra.mxu0 0.0
  %3902 = vmatprep.subr.mxu0 0.0
  %3903 = vmatpush2.msra.mxu0 0.0
  %3904 = vmatprep.subr.mxu0 0.0
  %3905 = vmatpush2.msra.mxu0 0.0
  %3906 = vmatprep.subr.mxu0 0.0
  %3907 = vmatpush2.msra.mxu0 0.0
  %3908 = vmatprep.subr.mxu0 0.0
  %3909 = vmatpush2.msra.mxu0 0.0
  %3910 = vmatprep.subr.mxu0 0.0
  %3911 = vmatpush2.msra.mxu0 0.0
  %3912 = vmatprep.subr.mxu0 0.0
  %3913 = vmatpush2.msra.mxu0 0.0
  %3914 = vmatprep.subr.mxu0 0.0
  %3915 = vmatpush2.msra.mxu0 0.0
  %3916 = vmatprep.subr.mxu0 0.0
  %3917 = vmatpush2.msra.mxu0 0.0
  %3918 = vmatprep.subr.mxu0 0.0
  %3919 = vmatpush2.msra.mxu0 0.0
  %3920 = vmatprep.subr.mxu0 0.0
  %3921 = vmatpush2.msra.mxu0 0.0
  %3922 = vmatprep.subr.mxu0 0.0
  %3923 = vmatpush2.msra.mxu0 0.0
  %3924 = vmatprep.subr.mxu0 0.0
  %3925 = vmatpush2.msra.mxu0 0.0
  %3926 = vmatprep.subr.mxu0 0.0
  %3927 = vmatpush2.msra.mxu0 0.0
  %3928 = vmatprep.mubr.f32.mxu0 0.0
  %3929 = vmatmul.mubr.f32.gmra.mxu0 %v3859
  %v3930 = vpop.f32.mrf.mxu0
  %v3931 = vadd.f32 %v3103, %v3930
  %v3932 = vpop.f32.mrf.mxu0
  %3933 = vmatprep.mubr.f32.mxu0 0.0
  %3934 = vmatmul.mubr.f32.gmra.mxu0 %v3862
  %v3935 = vpop.f32.mrf.mxu0
  %v3936 = vadd.f32 %v3103, %v3935
  %v3937 = vpop.f32.mrf.mxu0
  %3938 = vdwg.mxu0
  %v3939 = vmax.f32 %v3931, 0.0
  %v3940 = vmax.f32 %v3936, 0.0
  %v3942 = vsel %vm494, %v3073, 0
  %3944 = vmatprep.subr.mxu0 0.0
  %3945 = vmatpush1.msra.mxu0 0.0
  %3946 = vmatprep.subr.mxu0 0.0
  %3947 = vmatpush1.msra.mxu0 0.0
  %3948 = vmatprep.subr.mxu0 0.0
  %3949 = vmatpush1.msra.mxu0 0.0
  %3950 = vmatprep.subr.mxu0 0.0
  %3951 = vmatpush1.msra.mxu0 0.0
  %3952 = vmatprep.subr.mxu0 0.0
  %3953 = vmatpush1.msra.mxu0 0.0
  %3954 = vmatprep.subr.mxu0 0.0
  %3955 = vmatpush1.msra.mxu0 0.0
  %3956 = vmatprep.subr.mxu0 0.0
  %3957 = vmatpush1.msra.mxu0 0.0
  %3958 = vmatprep.subr.mxu0 0.0
  %3959 = vmatpush1.msra.mxu0 0.0
  %3960 = vmatprep.subr.mxu0 0.0
  %3961 = vmatpush1.msra.mxu0 0.0
  %3962 = vmatprep.subr.mxu0 0.0
  %3963 = vmatpush1.msra.mxu0 0.0
  %3964 = vmatprep.subr.mxu0 0.0
  %3965 = vmatpush1.msra.mxu0 0.0
  %3966 = vmatprep.subr.mxu0 0.0
  %3967 = vmatpush1.msra.mxu0 0.0
  %3968 = vmatprep.subr.mxu0 0.0
  %3969 = vmatpush1.msra.mxu0 0.0
  %3970 = vmatprep.subr.mxu0 0.0
  %3971 = vmatpush1.msra.mxu0 0.0
  %3972 = vmatprep.subr.mxu0 0.0
  %3973 = vmatpush1.msra.mxu0 %v3940
  %3974 = vmatprep.subr.mxu0 0.0
  %3975 = vmatpush1.msra.mxu0 %v3939
  %3976 = vmatprep.subr.mxu0 0.0
  %3977 = vmatpush2.msra.mxu0 0.0
  %3978 = vmatprep.subr.mxu0 0.0
  %3979 = vmatpush2.msra.mxu0 0.0
  %3980 = vmatprep.subr.mxu0 0.0
  %3981 = vmatpush2.msra.mxu0 0.0
  %3982 = vmatprep.subr.mxu0 0.0
  %3983 = vmatpush2.msra.mxu0 0.0
  %3984 = vmatprep.subr.mxu0 0.0
  %3985 = vmatpush2.msra.mxu0 0.0
  %3986 = vmatprep.subr.mxu0 0.0
  %3987 = vmatpush2.msra.mxu0 0.0
  %3988 = vmatprep.subr.mxu0 0.0
  %3989 = vmatpush2.msra.mxu0 0.0
  %3990 = vmatprep.subr.mxu0 0.0
  %3991 = vmatpush2.msra.mxu0 0.0
  %3992 = vmatprep.subr.mxu0 0.0
  %3993 = vmatpush2.msra.mxu0 0.0
  %3994 = vmatprep.subr.mxu0 0.0
  %3995 = vmatpush2.msra.mxu0 0.0
  %3996 = vmatprep.subr.mxu0 0.0
  %3997 = vmatpush2.msra.mxu0 0.0
  %3998 = vmatprep.subr.mxu0 0.0
  %3999 = vmatpush2.msra.mxu0 0.0
  %4000 = vmatprep.subr.mxu0 0.0
  %4001 = vmatpush2.msra.mxu0 0.0
  %4002 = vmatprep.subr.mxu0 0.0
  %4003 = vmatpush2.msra.mxu0 0.0
  %4004 = vmatprep.subr.mxu0 0.0
  %4005 = vmatpush2.msra.mxu0 0.0
  %4006 = vmatprep.subr.mxu0 0.0
  %4007 = vmatpush2.msra.mxu0 0.0
  %4008 = vmatprep.mubr.f32.mxu0 0.0
  %4009 = vmatmul.mubr.f32.gmra.mxu0 %v3942
  %v4010 = vpop.f32.mrf.mxu0
  %v4011 = vadd.f32 0.0, %v4010
  %v4012 = vpop.f32.mrf.mxu0
  %4013 = vdwg.mxu0
  %s4014 = scalar_lea.vmem %s1, 864
  %v4015 = vld [vmem:[%s4014] sm:$0xff]
  %v4016 = vld [vmem:[%s4014 + $0x8] sm:$0xff]
  %v4017 = vld [vmem:[%s4014 + $0x10] sm:$0xff]
  %v4018 = vld [vmem:[%s4014 + $0x18] sm:$0xff]
  %v4019 = vlaneseq
  %v4020 = vshrl.u32 %v4019, 7
  %v4021 = vsub.s32 1, %v4020
  %v4022 = vrot.slane %v22, %v4021
  %v4024 = vsel %vm31, %v4011, 0
  %4026 = vmatprep.subr.mxu0 0.0
  %4027 = vmatpush1.msra.mxu0 0.0
  %4028 = vmatprep.subr.mxu0 0.0
  %4029 = vmatpush1.msra.mxu0 0.0
  %4030 = vmatprep.subr.mxu0 0.0
  %4031 = vmatpush1.msra.mxu0 0.0
  %4032 = vmatprep.subr.mxu0 0.0
  %4033 = vmatpush1.msra.mxu0 0.0
  %4034 = vmatprep.subr.mxu0 0.0
  %4035 = vmatpush1.msra.mxu0 0.0
  %4036 = vmatprep.subr.mxu0 0.0
  %4037 = vmatpush1.msra.mxu0 0.0
  %4038 = vmatprep.subr.mxu0 0.0
  %4039 = vmatpush1.msra.mxu0 0.0
  %4040 = vmatprep.subr.mxu0 0.0
  %4041 = vmatpush1.msra.mxu0 0.0
  %4042 = vmatprep.subr.mxu0 0.0
  %4043 = vmatpush1.msra.mxu0 0.0
  %4044 = vmatprep.subr.mxu0 0.0
  %4045 = vmatpush1.msra.mxu0 0.0
  %4046 = vmatprep.subr.mxu0 0.0
  %4047 = vmatpush1.msra.mxu0 0.0
  %4048 = vmatprep.subr.mxu0 0.0
  %4049 = vmatpush1.msra.mxu0 0.0
  %4050 = vmatprep.subr.mxu0 0.0
  %4051 = vmatpush1.msra.mxu0 %v4018
  %4052 = vmatprep.subr.mxu0 0.0
  %4053 = vmatpush1.msra.mxu0 %v4017
  %4054 = vmatprep.subr.mxu0 0.0
  %4055 = vmatpush1.msra.mxu0 %v4016
  %4056 = vmatprep.subr.mxu0 0.0
  %4057 = vmatpush1.msra.mxu0 %v4015
  %4058 = vmatprep.subr.mxu0 0.0
  %4059 = vmatpush2.msra.mxu0 0.0
  %4060 = vmatprep.subr.mxu0 0.0
  %4061 = vmatpush2.msra.mxu0 0.0
  %4062 = vmatprep.subr.mxu0 0.0
  %4063 = vmatpush2.msra.mxu0 0.0
  %4064 = vmatprep.subr.mxu0 0.0
  %4065 = vmatpush2.msra.mxu0 0.0
  %4066 = vmatprep.subr.mxu0 0.0
  %4067 = vmatpush2.msra.mxu0 0.0
  %4068 = vmatprep.subr.mxu0 0.0
  %4069 = vmatpush2.msra.mxu0 0.0
  %4070 = vmatprep.subr.mxu0 0.0
  %4071 = vmatpush2.msra.mxu0 0.0
  %4072 = vmatprep.subr.mxu0 0.0
  %4073 = vmatpush2.msra.mxu0 0.0
  %4074 = vmatprep.subr.mxu0 0.0
  %4075 = vmatpush2.msra.mxu0 0.0
  %4076 = vmatprep.subr.mxu0 0.0
  %4077 = vmatpush2.msra.mxu0 0.0
  %4078 = vmatprep.subr.mxu0 0.0
  %4079 = vmatpush2.msra.mxu0 0.0
  %4080 = vmatprep.subr.mxu0 0.0
  %4081 = vmatpush2.msra.mxu0 0.0
  %4082 = vmatprep.subr.mxu0 0.0
  %4083 = vmatpush2.msra.mxu0 0.0
  %4084 = vmatprep.subr.mxu0 0.0
  %4085 = vmatpush2.msra.mxu0 0.0
  %4086 = vmatprep.subr.mxu0 0.0
  %4087 = vmatpush2.msra.mxu0 0.0
  %4088 = vmatprep.subr.mxu0 0.0
  %4089 = vmatpush2.msra.mxu0 0.0
  %4090 = vmatprep.mubr.f32.mxu0 0.0
  %4091 = vmatmul.mubr.f32.gmra.mxu0 %v4024
  %v4092 = vpop.f32.mrf.mxu0
  %v4093 = vadd.f32 %v4022, %v4092
  %v4094 = vpop.f32.mrf.mxu0
  %4095 = vdwg.mxu0
  %v4096 = vmax.f32 %v4093, 0.0
  %s4097 = scalar_lea.vmem %s1, 896
  %v4098 = vld [vmem:[%s4097] sm:$0xff]
  %v4099 = vld [vmem:[%s4097 + $0x8] sm:$0xff]
  %v4100 = vld [vmem:[%s4097 + $0x10] sm:$0xff]
  %v4101 = vld [vmem:[%s4097 + $0x18] sm:$0xff]
  %v4102 = vlaneseq
  %v4103 = vshrl.u32 %v4102, 7
  %v4104 = vsub.s32 2, %v4103
  %v4105 = vrot.slane %v22, %v4104
  %v4107 = vsel %vm31, %v4096, 0
  %4109 = vmatprep.subr.mxu0 0.0
  %4110 = vmatpush1.msra.mxu0 0.0
  %4111 = vmatprep.subr.mxu0 0.0
  %4112 = vmatpush1.msra.mxu0 0.0
  %4113 = vmatprep.subr.mxu0 0.0
  %4114 = vmatpush1.msra.mxu0 0.0
  %4115 = vmatprep.subr.mxu0 0.0
  %4116 = vmatpush1.msra.mxu0 0.0
  %4117 = vmatprep.subr.mxu0 0.0
  %4118 = vmatpush1.msra.mxu0 0.0
  %4119 = vmatprep.subr.mxu0 0.0
  %4120 = vmatpush1.msra.mxu0 0.0
  %4121 = vmatprep.subr.mxu0 0.0
  %4122 = vmatpush1.msra.mxu0 0.0
  %4123 = vmatprep.subr.mxu0 0.0
  %4124 = vmatpush1.msra.mxu0 0.0
  %4125 = vmatprep.subr.mxu0 0.0
  %4126 = vmatpush1.msra.mxu0 0.0
  %4127 = vmatprep.subr.mxu0 0.0
  %4128 = vmatpush1.msra.mxu0 0.0
  %4129 = vmatprep.subr.mxu0 0.0
  %4130 = vmatpush1.msra.mxu0 0.0
  %4131 = vmatprep.subr.mxu0 0.0
  %4132 = vmatpush1.msra.mxu0 0.0
  %4133 = vmatprep.subr.mxu0 0.0
  %4134 = vmatpush1.msra.mxu0 %v4101
  %4135 = vmatprep.subr.mxu0 0.0
  %4136 = vmatpush1.msra.mxu0 %v4100
  %4137 = vmatprep.subr.mxu0 0.0
  %4138 = vmatpush1.msra.mxu0 %v4099
  %4139 = vmatprep.subr.mxu0 0.0
  %4140 = vmatpush1.msra.mxu0 %v4098
  %4141 = vmatprep.subr.mxu0 0.0
  %4142 = vmatpush2.msra.mxu0 0.0
  %4143 = vmatprep.subr.mxu0 0.0
  %4144 = vmatpush2.msra.mxu0 0.0
  %4145 = vmatprep.subr.mxu0 0.0
  %4146 = vmatpush2.msra.mxu0 0.0
  %4147 = vmatprep.subr.mxu0 0.0
  %4148 = vmatpush2.msra.mxu0 0.0
  %4149 = vmatprep.subr.mxu0 0.0
  %4150 = vmatpush2.msra.mxu0 0.0
  %4151 = vmatprep.subr.mxu0 0.0
  %4152 = vmatpush2.msra.mxu0 0.0
  %4153 = vmatprep.subr.mxu0 0.0
  %4154 = vmatpush2.msra.mxu0 0.0
  %4155 = vmatprep.subr.mxu0 0.0
  %4156 = vmatpush2.msra.mxu0 0.0
  %4157 = vmatprep.subr.mxu0 0.0
  %4158 = vmatpush2.msra.mxu0 0.0
  %4159 = vmatprep.subr.mxu0 0.0
  %4160 = vmatpush2.msra.mxu0 0.0
  %4161 = vmatprep.subr.mxu0 0.0
  %4162 = vmatpush2.msra.mxu0 0.0
  %4163 = vmatprep.subr.mxu0 0.0
  %4164 = vmatpush2.msra.mxu0 0.0
  %4165 = vmatprep.subr.mxu0 0.0
  %4166 = vmatpush2.msra.mxu0 0.0
  %4167 = vmatprep.subr.mxu0 0.0
  %4168 = vmatpush2.msra.mxu0 0.0
  %4169 = vmatprep.subr.mxu0 0.0
  %4170 = vmatpush2.msra.mxu0 0.0
  %4171 = vmatprep.subr.mxu0 0.0
  %4172 = vmatpush2.msra.mxu0 0.0
  %4173 = vmatprep.mubr.f32.mxu0 0.0
  %4174 = vmatmul.mubr.f32.gmra.mxu0 %v4107
  %v4175 = vpop.f32.mrf.mxu0
  %v4176 = vadd.f32 %v4105, %v4175
  %v4177 = vpop.f32.mrf.mxu0
  %4178 = vdwg.mxu0
  %vm4179 = vcmask 1024
  %4180 = vst.msk [vmem:[%s5] sm:$0x3] %vm4179, %v4176
  // Predicated region
  $region22: #{forward.1} parent=0 // pred_check
    _
  $region23: #{forward.1} parent=0 // pred_check_branch
    %4182 = sbr.rel (0) target = $region25
  $region24: #{forward.1} parent=0 // pred_region
    _
  $region25: #{forward.1} parent=0 // pred_fallthru
    _
  // Predicated region
  $region26: #{forward.1} parent=0 // pred_check
    _
  $region27: #{forward.1} parent=0 // pred_check_branch
    %4184 = sbr.rel (0) target = $region29
  $region28: #{forward.1} parent=0 // pred_region
    _
  $region29: #{forward.1} parent=0 // pred_fallthru
    _

</llo_original>
